<compile_context>
chip_gen: v6e
topology: v6e:2x2x1
jax: 0.10.0
libtpu: 0.0.40
codegen_flags: <defaults>
</compile_context>

<pallas_src>
import numpy as np

import jax
import jax.numpy as jnp
from jax import lax
from jax.experimental import pallas as pl
from jax.experimental.pallas import tpu as pltpu

_BB = 8  # images per grid step (sublane-aligned; keeps register pressure low)


# ---------------------------------------------------------------------------
# Fused kernel: one grid step == _BB images, five MXU dots, no scratch.
# ---------------------------------------------------------------------------
def _fused_autoencoder_kernel(
    p1_ref,    # (1, 4*BB, 225) bf16  conv1 im2col, rows = pool-member-major
    w1_ref,    # (225, 400)     bf16  conv1 effective weights
    b1_ref,    # (1, 400)       f32
    w2_ref,    # (400, 72)      bf16  conv2 effective weights
    b2_ref,    # (1, 32)        f32
    wd1_ref,   # (32, 400)      bf16  deconv1 effective weights
    bd1_ref,   # (1, 400)       f32
    wd2_ref,   # (400, 1800)    bf16  deconv2 effective weights (channel-major cols)
    bd2_ref,   # (1, 1800)      f32
    wf_ref,    # (4, 8)         f32   SMEM: deconv3 per-phase weights
    b3_ref,    # (1, 1)         f32   SMEM
    out_ref,   # (1, BB, 900)   f32   tanh output, lane = 225*phase + 15*iy + ix
):
    f32 = jnp.float32
    bf16 = jnp.bfloat16
    bb = out_ref.shape[1]

    # --- Conv2d(1,16,3,s3,p1) + ReLU + MaxPool2d(2,s2): one dot + 3 maxes ----
    c1 = jnp.dot(p1_ref[0], w1_ref[...], preferred_element_type=f32)  # (4*bb, 400)
    m = jnp.maximum(jnp.maximum(c1[0 * bb:1 * bb], c1[1 * bb:2 * bb]),
                    jnp.maximum(c1[2 * bb:3 * bb], c1[3 * bb:4 * bb]))
    a2 = jnp.maximum(m + b1_ref[...], 0.0)        # (bb, 400), lane = 16*pix + ci

    # --- Conv2d(16,8,3,s2,p1) + ReLU + MaxPool2d(2,s1): one dot + lane maxes --
    c2 = jnp.dot(a2.astype(bf16), w2_ref[...], preferred_element_type=f32)  # (bb,72)
    # c2 lane = 24*oy + 8*ox + co (3x3 output).  Pool 2x2 stride 1 -> 2x2.
    a = jnp.maximum(c2[:, 0:48], c2[:, 24:72])    # max over pool rows
    bmx = jnp.maximum(a[:, 0:40], a[:, 8:48])     # max over pool cols
    h = jnp.concatenate([bmx[:, 0:16], bmx[:, 24:40]], axis=1)  # (bb, 32)
    h = jnp.maximum(h + b2_ref[...], 0.0)         # lane = 16*iy + 8*ix + ci

    # --- ConvTranspose2d(8,16,3,s2) + ReLU: one dot ---------------------------
    o1 = jnp.dot(h.astype(bf16), wd1_ref[...], preferred_element_type=f32)
    o1 = jnp.maximum(o1 + bd1_ref[...], 0.0)      # (bb, 400), lane = 16*pix + co

    # --- ConvTranspose2d(16,8,5,s3,p1) + ReLU: one dot (channel-major lanes) --
    a5 = jnp.dot(o1.astype(bf16), wd2_ref[...], preferred_element_type=f32)
    a5 = jnp.maximum(a5 + bd2_ref[...], 0.0)      # (bb, 1800), lane = 225c+15y+x

    # --- ConvTranspose2d(8,1,2,s2,p1) + Tanh, phase-decomposed ----------------
    # out[2a+dy, 2b+dx] = tanh(b3 + sum_c a5[a+dy, b+dx, c] * wf[2dy+dx, c])
    b3 = b3_ref[0, 0]
    ch = [a5[:, 225 * c:225 * (c + 1)] for c in range(8)]       # 8 x (bb, 225)
    outs = []
    for phi in range(4):
        z = ch[0] * wf_ref[phi, 0]
        for c in range(1, 8):
            z = z + ch[c] * wf_ref[phi, c]
        outs.append(jnp.tanh(z + b3))
    out_ref[0] = jnp.concatenate(outs, axis=1)    # (bb, 900) lane-dense store


# ---------------------------------------------------------------------------
# Wrapper-side weight repacking into matmul-ready "effective" matrices.
# ---------------------------------------------------------------------------
def _build_matmul_params(params):
    f32, bf16 = jnp.float32, jnp.bfloat16

    # Conv1: block-diagonal over the 25 pooled-output pixels.
    w1t = jnp.transpose(params["enc_conv1_w"][:, 0], (1, 2, 0)).reshape(9, 16)
    w1eff = jnp.einsum("mn,tc->mtnc", jnp.eye(25, dtype=f32), w1t)
    w1eff = w1eff.reshape(225, 400).astype(bf16)
    b1row = jnp.tile(params["enc_conv1_b"], 25).reshape(1, 400).astype(f32)

    # Conv2(16,8,3,s2,p1) on 5x5: scatter the 3x3 taps into a (400, 72) matrix.
    s2 = np.zeros((3, 3, 25, 9), np.float32)
    for oy in range(3):
        for ox in range(3):
            for ki in range(3):
                for kj in range(3):
                    py, px = 2 * oy + ki - 1, 2 * ox + kj - 1
                    if 0 <= py < 5 and 0 <= px < 5:
                        s2[ki, kj, 5 * py + px, 3 * oy + ox] = 1.0
    w2r = jnp.transpose(params["enc_conv2_w"], (2, 3, 1, 0))      # (ki,kj,ci,co)
    w2eff = jnp.einsum("xypq,xyic->piqc", jnp.asarray(s2), w2r)
    w2eff = w2eff.reshape(400, 72).astype(bf16)
    b2row = jnp.tile(params["enc_conv2_b"], 4).reshape(1, 32).astype(f32)

    # ConvT(8,16,3,s2) on 2x2 -> 5x5: oy = 2*iy + ky.
    d1 = np.zeros((2, 3, 5), np.float32)
    for i in range(2):
        for k in range(3):
            d1[i, k, 2 * i + k] = 1.0
    wd1eff = jnp.einsum("iko,jlp,cdkl->ijcopd", jnp.asarray(d1), jnp.asarray(d1),
                        params["dec_conv1_w"])
    wd1eff = wd1eff.reshape(32, 400).astype(bf16)
    bd1row = jnp.tile(params["dec_conv1_b"], 25).reshape(1, 400).astype(f32)

    # ConvT(16,8,5,s3,p1) on 5x5 -> 15x15: oy = 3*iy + ky - 1. Channel-major cols.
    d2 = np.zeros((5, 5, 15), np.float32)
    for i in range(5):
        for k in range(5):
            o = 3 * i + k - 1
            if 0 <= o < 15:
                d2[i, k, o] = 1.0
    wd2eff = jnp.einsum("iko,jlp,cdkl->ijcdop", jnp.asarray(d2), jnp.asarray(d2),
                        params["dec_conv2_w"])
    wd2eff = wd2eff.reshape(400, 1800).astype(bf16)
    bd2row = jnp.repeat(params["dec_conv2_b"], 225).reshape(1, 1800).astype(f32)

    # ConvT(8,1,2,s2,p1): per-phase weights wf[2dy+dx, c] = w[c,0,1-dy,1-dx].
    wf = jnp.transpose(params["dec_conv3_w"][:, 0, ::-1, ::-1], (1, 2, 0))
    wf = wf.reshape(4, 8).astype(f32)
    b3 = params["dec_conv3_b"].reshape(1, 1).astype(f32)

    return (w1eff, b1row, w2eff, b2row, wd1eff, bd1row, wd2eff, bd2row, wf, b3)


# ---------------------------------------------------------------------------
# Forward pass wrapper: input layout prep + one pallas_call + phase interleave.
# ---------------------------------------------------------------------------
def dc_autoencoder_forward(x_nchw, params):
    x = x_nchw.astype(jnp.float32)
    B = x.shape[0]
    bb = _BB
    nb = -(-B // bb)
    bpad = nb * bb
    if bpad != B:
        x = jnp.pad(x, ((0, bpad - B), (0, 0), (0, 0), (0, 0)))

    # Conv1 im2col grouped by 2x2 pool window (pure XLA layout prep on raw input):
    # row = u*bb + b_local (u = 2dy+dx), col = 9*(5py+px) + (3ki+kj).
    xpad = jnp.pad(x[:, 0], ((0, 0), (1, 1), (1, 1)))                 # (bpad,30,30)
    p1 = xpad.reshape(bpad, 5, 2, 3, 5, 2, 3)
    p1 = p1.transpose(0, 2, 5, 1, 4, 3, 6).reshape(bpad, 4, 225)
    p1 = p1.reshape(nb, bb, 4, 225).transpose(0, 2, 1, 3)
    p1 = p1.reshape(nb, 4 * bb, 225).astype(jnp.bfloat16)

    (w1eff, b1row, w2eff, b2row, wd1eff, bd1row,
     wd2eff, bd2row, wf, b3) = _build_matmul_params(params)

    out = pl.pallas_call(
        _fused_autoencoder_kernel,
        out_shape=jax.ShapeDtypeStruct((nb, bb, 900), jnp.float32),
        grid=(nb,),
        in_specs=[
            pl.BlockSpec((1, 4 * bb, 225), lambda i: (i, 0, 0)),
            pl.BlockSpec((225, 400), lambda i: (0, 0)),
            pl.BlockSpec((1, 400), lambda i: (0, 0)),
            pl.BlockSpec((400, 72), lambda i: (0, 0)),
            pl.BlockSpec((1, 32), lambda i: (0, 0)),
            pl.BlockSpec((32, 400), lambda i: (0, 0)),
            pl.BlockSpec((1, 400), lambda i: (0, 0)),
            pl.BlockSpec((400, 1800), lambda i: (0, 0)),
            pl.BlockSpec((1, 1800), lambda i: (0, 0)),
            pl.BlockSpec(memory_space=pltpu.MemorySpace.SMEM),   # wf (4, 8)
            pl.BlockSpec(memory_space=pltpu.MemorySpace.SMEM),   # b3 (1, 1)
        ],
        out_specs=pl.BlockSpec((1, bb, 900), lambda i: (i, 0, 0)),
        compiler_params=pltpu.CompilerParams(
            dimension_semantics=("parallel",)),
    )(p1, w1eff, b1row, w2eff, b2row, wd1eff, bd1row, wd2eff, bd2row, wf, b3)

    # Re-interleave the 2x2 output phases into 28x28 (pure XLA layout work).
    z = out.reshape(nb * bb, 4, 15, 15)[:B]
    phases = [z[:, 2 * dy + dx, dy:dy + 14, dx:dx + 14]
              for dy in (0, 1) for dx in (0, 1)]
    y = jnp.stack(phases, axis=-1)                                    # (B,14,14,4)
    y = y.reshape(B, 14, 14, 2, 2).transpose(0, 1, 3, 2, 4).reshape(B, 1, 28, 28)
    return y


# ---------------------------------------------------------------------------
# Pure-JAX reference (PyTorch semantics) for correctness checking.
# ---------------------------------------------------------------------------
def _reference_forward(x, params):
    dn = ("NCHW", "OIHW", "NCHW")
    x = x.astype(jnp.float32)

    def conv(v, w, b, stride, pad):
        y = lax.conv_general_dilated(v, w, (stride, stride),
                                     ((pad, pad), (pad, pad)),
                                     dimension_numbers=dn)
        return y + b.reshape(1, -1, 1, 1)

    def convT(v, w, b, stride, pad):
        k = w.shape[2]
        wk = jnp.flip(w, (2, 3)).transpose(1, 0, 2, 3)
        y = lax.conv_general_dilated(v, wk, (1, 1),
                                     ((k - 1 - pad, k - 1 - pad),) * 2,
                                     lhs_dilation=(stride, stride),
                                     dimension_numbers=dn)
        return y + b.reshape(1, -1, 1, 1)

    def maxpool(v, k, s):
        return lax.reduce_window(v, -jnp.inf, lax.max,
                                 (1, 1, k, k), (1, 1, s, s), "VALID")

    y = jax.nn.relu(conv(x, params["enc_conv1_w"], params["enc_conv1_b"], 3, 1))
    y = maxpool(y, 2, 2)
    y = jax.nn.relu(conv(y, params["enc_conv2_w"], params["enc_conv2_b"], 2, 1))
    y = maxpool(y, 2, 1)
    y = jax.nn.relu(convT(y, params["dec_conv1_w"], params["dec_conv1_b"], 2, 0))
    y = jax.nn.relu(convT(y, params["dec_conv2_w"], params["dec_conv2_b"], 3, 1))
    y = jnp.tanh(convT(y, params["dec_conv3_w"], params["dec_conv3_b"], 2, 1))
    return y


# ---------------------------------------------------------------------------
# Parameters (PyTorch-style layouts and uniform init).
# ---------------------------------------------------------------------------
def init_params(key):
    def uinit(k, shape, fan_in):
        bound = 1.0 / float(fan_in) ** 0.5
        return jax.random.uniform(k, shape, jnp.float32, -bound, bound)

    ks = jax.random.split(key, 10)
    return {
        "enc_conv1_w": uinit(ks[0], (16, 1, 3, 3), 1 * 9),
        "enc_conv1_b": uinit(ks[1], (16,), 1 * 9),
        "enc_conv2_w": uinit(ks[2], (8, 16, 3, 3), 16 * 9),
        "enc_conv2_b": uinit(ks[3], (8,), 16 * 9),
        "dec_conv1_w": uinit(ks[4], (8, 16, 3, 3), 16 * 9),
        "dec_conv1_b": uinit(ks[5], (16,), 16 * 9),
        "dec_conv2_w": uinit(ks[6], (16, 8, 5, 5), 8 * 25),
        "dec_conv2_b": uinit(ks[7], (8,), 8 * 25),
        "dec_conv3_w": uinit(ks[8], (8, 1, 2, 2), 1 * 4),
        "dec_conv3_b": uinit(ks[9], (1,), 1 * 4),
    }


if __name__ == "__main__":
    key = jax.random.PRNGKey(0)
    k_param, k_x = jax.random.split(key)
    params = init_params(k_param)
    # MNIST-sized input implied by the module geometry; 16 images -> 2 grid blocks.
    x = jax.random.normal(k_x, (16, 1, 28, 28), dtype=jnp.float32)

    fwd = jax.jit(dc_autoencoder_forward)
    out = jax.block_until_ready(fwd(x, params))

    assert out.shape == (16, 1, 28, 28), out.shape
    assert out.dtype == jnp.float32
    assert bool(jnp.all(jnp.isfinite(out)))

    ref = _reference_forward(x, params)
    err = float(jnp.max(jnp.abs(out - ref)))
    assert err < 5e-2, f"max abs error vs reference: {err}"
    print("KERNEL_OK")
</pallas_src>

<mosaic_0001>
module attributes {stable_mosaic.version = 11 : i64} {
  func.func @_fused_autoencoder_kernel(%arg0: i32, %arg1: memref<1x32x225xbf16, #tpu.memory_space<vmem>>, %arg2: memref<225x400xbf16, #tpu.memory_space<vmem>>, %arg3: memref<1x400xf32, #tpu.memory_space<vmem>>, %arg4: memref<400x72xbf16, #tpu.memory_space<vmem>>, %arg5: memref<1x32xf32, #tpu.memory_space<vmem>>, %arg6: memref<32x400xbf16, #tpu.memory_space<vmem>>, %arg7: memref<1x400xf32, #tpu.memory_space<vmem>>, %arg8: memref<400x1800xbf16, #tpu.memory_space<vmem>>, %arg9: memref<1x1800xf32, #tpu.memory_space<vmem>>, %arg10: memref<4x8xf32, #tpu.memory_space<smem>>, %arg11: memref<1x1xf32, #tpu.memory_space<smem>>, %arg12: memref<1x8x900xf32, #tpu.memory_space<vmem>>) attributes {dimension_semantics = [#tpu.dimension_semantics<parallel>], iteration_bounds = array<i64: 2>, scalar_prefetch = 0 : i64, scratch_operands = 0 : i64, tpu.core_type = #tpu.core_type<tc>, window_params = [{transform_indices = @transform_0, window_bounds = array<i64: 1, 32, 225>}, {pipeline_mode = #tpu.pipeline_mode<synchronous>, transform_indices = @transform_1, window_bounds = array<i64: 225, 400>}, {pipeline_mode = #tpu.pipeline_mode<synchronous>, transform_indices = @transform_2, window_bounds = array<i64: 1, 400>}, {pipeline_mode = #tpu.pipeline_mode<synchronous>, transform_indices = @transform_3, window_bounds = array<i64: 400, 72>}, {pipeline_mode = #tpu.pipeline_mode<synchronous>, transform_indices = @transform_4, window_bounds = array<i64: 1, 32>}, {pipeline_mode = #tpu.pipeline_mode<synchronous>, transform_indices = @transform_5, window_bounds = array<i64: 32, 400>}, {pipeline_mode = #tpu.pipeline_mode<synchronous>, transform_indices = @transform_6, window_bounds = array<i64: 1, 400>}, {pipeline_mode = #tpu.pipeline_mode<synchronous>, transform_indices = @transform_7, window_bounds = array<i64: 400, 1800>}, {pipeline_mode = #tpu.pipeline_mode<synchronous>, transform_indices = @transform_8, window_bounds = array<i64: 1, 1800>}, {transform_indices = @transform_9, window_bounds = array<i64: 4, 8>}, {transform_indices = @transform_10, window_bounds = array<i64: 1, 1>}, {transform_indices = @transform_11, window_bounds = array<i64: 1, 8, 900>}]} {
    %c0 = arith.constant 0 : index
    %c0_0 = arith.constant 0 : index
    %c0_1 = arith.constant 0 : index
    %0 = vector.load %arg1[%c0, %c0_0, %c0_1] : memref<1x32x225xbf16, #tpu.memory_space<vmem>>, vector<1x32x225xbf16>
    %1 = vector.shape_cast %0 : vector<1x32x225xbf16> to vector<32x225xbf16>
    %c0_2 = arith.constant 0 : index
    %c0_3 = arith.constant 0 : index
    %2 = vector.load %arg2[%c0_2, %c0_3] : memref<225x400xbf16, #tpu.memory_space<vmem>>, vector<225x400xbf16>
    %cst = arith.constant dense<0.000000e+00> : vector<32x400xf32>
    %3 = tpu.matmul %1, %2, %cst {dimension_numbers = #tpu.dot_dimension_numbers<[1], [0], [0], [1], [0, 0, 1, 1], [], []>} : vector<32x225xbf16>, vector<225x400xbf16>, vector<32x400xf32> -> vector<32x400xf32>
    %4 = vector.extract_strided_slice %3 {offsets = [0, 0], sizes = [8, 400], strides = [1, 1]} : vector<32x400xf32> to vector<8x400xf32>
    %5 = vector.extract_strided_slice %3 {offsets = [8, 0], sizes = [8, 400], strides = [1, 1]} : vector<32x400xf32> to vector<8x400xf32>
    %6 = arith.maximumf %4, %5 : vector<8x400xf32>
    %7 = vector.extract_strided_slice %3 {offsets = [16, 0], sizes = [8, 400], strides = [1, 1]} : vector<32x400xf32> to vector<8x400xf32>
    %8 = vector.extract_strided_slice %3 {offsets = [24, 0], sizes = [8, 400], strides = [1, 1]} : vector<32x400xf32> to vector<8x400xf32>
    %9 = arith.maximumf %7, %8 : vector<8x400xf32>
    %10 = arith.maximumf %6, %9 : vector<8x400xf32>
    %c0_4 = arith.constant 0 : index
    %c0_5 = arith.constant 0 : index
    %11 = vector.load %arg3[%c0_4, %c0_5] : memref<1x400xf32, #tpu.memory_space<vmem>>, vector<1x400xf32>
    %12 = vector.broadcast %11 : vector<1x400xf32> to vector<8x400xf32>
    %13 = arith.addf %10, %12 : vector<8x400xf32>
    %cst_6 = arith.constant 0.000000e+00 : f32
    %14 = vector.broadcast %cst_6 : f32 to vector<8x400xf32>
    %15 = arith.maximumf %13, %14 : vector<8x400xf32>
    %16 = arith.truncf %15 : vector<8x400xf32> to vector<8x400xbf16>
    %c0_7 = arith.constant 0 : index
    %c0_8 = arith.constant 0 : index
    %17 = vector.load %arg4[%c0_7, %c0_8] : memref<400x72xbf16, #tpu.memory_space<vmem>>, vector<400x72xbf16>
    %cst_9 = arith.constant dense<0.000000e+00> : vector<8x72xf32>
    %18 = tpu.matmul %16, %17, %cst_9 {dimension_numbers = #tpu.dot_dimension_numbers<[1], [0], [0], [1], [0, 0, 1, 1], [], []>} : vector<8x400xbf16>, vector<400x72xbf16>, vector<8x72xf32> -> vector<8x72xf32>
    %19 = vector.extract_strided_slice %18 {offsets = [0, 0], sizes = [8, 48], strides = [1, 1]} : vector<8x72xf32> to vector<8x48xf32>
    %20 = vector.extract_strided_slice %18 {offsets = [0, 24], sizes = [8, 48], strides = [1, 1]} : vector<8x72xf32> to vector<8x48xf32>
    %21 = arith.maximumf %19, %20 : vector<8x48xf32>
    %22 = vector.extract_strided_slice %21 {offsets = [0, 0], sizes = [8, 40], strides = [1, 1]} : vector<8x48xf32> to vector<8x40xf32>
    %23 = vector.extract_strided_slice %21 {offsets = [0, 8], sizes = [8, 40], strides = [1, 1]} : vector<8x48xf32> to vector<8x40xf32>
    %24 = arith.maximumf %22, %23 : vector<8x40xf32>
    %25 = vector.extract_strided_slice %24 {offsets = [0, 0], sizes = [8, 16], strides = [1, 1]} : vector<8x40xf32> to vector<8x16xf32>
    %26 = vector.extract_strided_slice %24 {offsets = [0, 24], sizes = [8, 16], strides = [1, 1]} : vector<8x40xf32> to vector<8x16xf32>
    %27 = tpu.concatenate %25, %26 in 1 : vector<8x16xf32>, vector<8x16xf32> -> vector<8x32xf32>
    %c0_10 = arith.constant 0 : index
    %c0_11 = arith.constant 0 : index
    %28 = vector.load %arg5[%c0_10, %c0_11] : memref<1x32xf32, #tpu.memory_space<vmem>>, vector<1x32xf32>
    %29 = vector.broadcast %28 : vector<1x32xf32> to vector<8x32xf32>
    %30 = arith.addf %27, %29 : vector<8x32xf32>
    %cst_12 = arith.constant 0.000000e+00 : f32
    %31 = vector.broadcast %cst_12 : f32 to vector<8x32xf32>
    %32 = arith.maximumf %30, %31 : vector<8x32xf32>
    %33 = arith.truncf %32 : vector<8x32xf32> to vector<8x32xbf16>
    %c0_13 = arith.constant 0 : index
    %c0_14 = arith.constant 0 : index
    %34 = vector.load %arg6[%c0_13, %c0_14] : memref<32x400xbf16, #tpu.memory_space<vmem>>, vector<32x400xbf16>
    %cst_15 = arith.constant dense<0.000000e+00> : vector<8x400xf32>
    %35 = tpu.matmul %33, %34, %cst_15 {dimension_numbers = #tpu.dot_dimension_numbers<[1], [0], [0], [1], [0, 0, 1, 1], [], []>} : vector<8x32xbf16>, vector<32x400xbf16>, vector<8x400xf32> -> vector<8x400xf32>
    %c0_16 = arith.constant 0 : index
    %c0_17 = arith.constant 0 : index
    %36 = vector.load %arg7[%c0_16, %c0_17] : memref<1x400xf32, #tpu.memory_space<vmem>>, vector<1x400xf32>
    %37 = vector.broadcast %36 : vector<1x400xf32> to vector<8x400xf32>
    %38 = arith.addf %35, %37 : vector<8x400xf32>
    %cst_18 = arith.constant 0.000000e+00 : f32
    %39 = vector.broadcast %cst_18 : f32 to vector<8x400xf32>
    %40 = arith.maximumf %38, %39 : vector<8x400xf32>
    %41 = arith.truncf %40 : vector<8x400xf32> to vector<8x400xbf16>
    %c0_19 = arith.constant 0 : index
    %c0_20 = arith.constant 0 : index
    %42 = vector.load %arg8[%c0_19, %c0_20] : memref<400x1800xbf16, #tpu.memory_space<vmem>>, vector<400x1800xbf16>
    %cst_21 = arith.constant dense<0.000000e+00> : vector<8x1800xf32>
    %43 = tpu.matmul %41, %42, %cst_21 {dimension_numbers = #tpu.dot_dimension_numbers<[1], [0], [0], [1], [0, 0, 1, 1], [], []>} : vector<8x400xbf16>, vector<400x1800xbf16>, vector<8x1800xf32> -> vector<8x1800xf32>
    %c0_22 = arith.constant 0 : index
    %c0_23 = arith.constant 0 : index
    %44 = vector.load %arg9[%c0_22, %c0_23] : memref<1x1800xf32, #tpu.memory_space<vmem>>, vector<1x1800xf32>
    %45 = vector.broadcast %44 : vector<1x1800xf32> to vector<8x1800xf32>
    %46 = arith.addf %43, %45 : vector<8x1800xf32>
    %cst_24 = arith.constant 0.000000e+00 : f32
    %47 = vector.broadcast %cst_24 : f32 to vector<8x1800xf32>
    %48 = arith.maximumf %46, %47 : vector<8x1800xf32>
    %c0_25 = arith.constant 0 : index
    %c0_26 = arith.constant 0 : index
    %49 = memref.load %arg11[%c0_25, %c0_26] : memref<1x1xf32, #tpu.memory_space<smem>>
    %50 = vector.extract_strided_slice %48 {offsets = [0, 0], sizes = [8, 225], strides = [1, 1]} : vector<8x1800xf32> to vector<8x225xf32>
    %51 = vector.extract_strided_slice %48 {offsets = [0, 225], sizes = [8, 225], strides = [1, 1]} : vector<8x1800xf32> to vector<8x225xf32>
    %52 = vector.extract_strided_slice %48 {offsets = [0, 450], sizes = [8, 225], strides = [1, 1]} : vector<8x1800xf32> to vector<8x225xf32>
    %53 = vector.extract_strided_slice %48 {offsets = [0, 675], sizes = [8, 225], strides = [1, 1]} : vector<8x1800xf32> to vector<8x225xf32>
    %54 = vector.extract_strided_slice %48 {offsets = [0, 900], sizes = [8, 225], strides = [1, 1]} : vector<8x1800xf32> to vector<8x225xf32>
    %55 = vector.extract_strided_slice %48 {offsets = [0, 1125], sizes = [8, 225], strides = [1, 1]} : vector<8x1800xf32> to vector<8x225xf32>
    %56 = vector.extract_strided_slice %48 {offsets = [0, 1350], sizes = [8, 225], strides = [1, 1]} : vector<8x1800xf32> to vector<8x225xf32>
    %57 = vector.extract_strided_slice %48 {offsets = [0, 1575], sizes = [8, 225], strides = [1, 1]} : vector<8x1800xf32> to vector<8x225xf32>
    %c0_27 = arith.constant 0 : index
    %c0_28 = arith.constant 0 : index
    %58 = memref.load %arg10[%c0_27, %c0_28] : memref<4x8xf32, #tpu.memory_space<smem>>
    %59 = vector.broadcast %58 : f32 to vector<8x225xf32>
    %60 = arith.mulf %50, %59 : vector<8x225xf32>
    %c0_29 = arith.constant 0 : index
    %c1 = arith.constant 1 : index
    %61 = memref.load %arg10[%c0_29, %c1] : memref<4x8xf32, #tpu.memory_space<smem>>
    %62 = vector.broadcast %61 : f32 to vector<8x225xf32>
    %63 = arith.mulf %51, %62 : vector<8x225xf32>
    %64 = arith.addf %60, %63 : vector<8x225xf32>
    %c0_30 = arith.constant 0 : index
    %c2 = arith.constant 2 : index
    %65 = memref.load %arg10[%c0_30, %c2] : memref<4x8xf32, #tpu.memory_space<smem>>
    %66 = vector.broadcast %65 : f32 to vector<8x225xf32>
    %67 = arith.mulf %52, %66 : vector<8x225xf32>
    %68 = arith.addf %64, %67 : vector<8x225xf32>
    %c0_31 = arith.constant 0 : index
    %c3 = arith.constant 3 : index
    %69 = memref.load %arg10[%c0_31, %c3] : memref<4x8xf32, #tpu.memory_space<smem>>
    %70 = vector.broadcast %69 : f32 to vector<8x225xf32>
    %71 = arith.mulf %53, %70 : vector<8x225xf32>
    %72 = arith.addf %68, %71 : vector<8x225xf32>
    %c0_32 = arith.constant 0 : index
    %c4 = arith.constant 4 : index
    %73 = memref.load %arg10[%c0_32, %c4] : memref<4x8xf32, #tpu.memory_space<smem>>
    %74 = vector.broadcast %73 : f32 to vector<8x225xf32>
    %75 = arith.mulf %54, %74 : vector<8x225xf32>
    %76 = arith.addf %72, %75 : vector<8x225xf32>
    %c0_33 = arith.constant 0 : index
    %c5 = arith.constant 5 : index
    %77 = memref.load %arg10[%c0_33, %c5] : memref<4x8xf32, #tpu.memory_space<smem>>
    %78 = vector.broadcast %77 : f32 to vector<8x225xf32>
    %79 = arith.mulf %55, %78 : vector<8x225xf32>
    %80 = arith.addf %76, %79 : vector<8x225xf32>
    %c0_34 = arith.constant 0 : index
    %c6 = arith.constant 6 : index
    %81 = memref.load %arg10[%c0_34, %c6] : memref<4x8xf32, #tpu.memory_space<smem>>
    %82 = vector.broadcast %81 : f32 to vector<8x225xf32>
    %83 = arith.mulf %56, %82 : vector<8x225xf32>
    %84 = arith.addf %80, %83 : vector<8x225xf32>
    %c0_35 = arith.constant 0 : index
    %c7 = arith.constant 7 : index
    %85 = memref.load %arg10[%c0_35, %c7] : memref<4x8xf32, #tpu.memory_space<smem>>
    %86 = vector.broadcast %85 : f32 to vector<8x225xf32>
    %87 = arith.mulf %57, %86 : vector<8x225xf32>
    %88 = arith.addf %84, %87 : vector<8x225xf32>
    %89 = vector.broadcast %49 : f32 to vector<8x225xf32>
    %90 = arith.addf %88, %89 : vector<8x225xf32>
    %91 = math.tanh %90 : vector<8x225xf32>
    %c1_36 = arith.constant 1 : index
    %c0_37 = arith.constant 0 : index
    %92 = memref.load %arg10[%c1_36, %c0_37] : memref<4x8xf32, #tpu.memory_space<smem>>
    %93 = vector.broadcast %92 : f32 to vector<8x225xf32>
    %94 = arith.mulf %50, %93 : vector<8x225xf32>
    %c1_38 = arith.constant 1 : index
    %c1_39 = arith.constant 1 : index
    %95 = memref.load %arg10[%c1_38, %c1_39] : memref<4x8xf32, #tpu.memory_space<smem>>
    %96 = vector.broadcast %95 : f32 to vector<8x225xf32>
    %97 = arith.mulf %51, %96 : vector<8x225xf32>
    %98 = arith.addf %94, %97 : vector<8x225xf32>
    %c1_40 = arith.constant 1 : index
    %c2_41 = arith.constant 2 : index
    %99 = memref.load %arg10[%c1_40, %c2_41] : memref<4x8xf32, #tpu.memory_space<smem>>
    %100 = vector.broadcast %99 : f32 to vector<8x225xf32>
    %101 = arith.mulf %52, %100 : vector<8x225xf32>
    %102 = arith.addf %98, %101 : vector<8x225xf32>
    %c1_42 = arith.constant 1 : index
    %c3_43 = arith.constant 3 : index
    %103 = memref.load %arg10[%c1_42, %c3_43] : memref<4x8xf32, #tpu.memory_space<smem>>
    %104 = vector.broadcast %103 : f32 to vector<8x225xf32>
    %105 = arith.mulf %53, %104 : vector<8x225xf32>
    %106 = arith.addf %102, %105 : vector<8x225xf32>
    %c1_44 = arith.constant 1 : index
    %c4_45 = arith.constant 4 : index
    %107 = memref.load %arg10[%c1_44, %c4_45] : memref<4x8xf32, #tpu.memory_space<smem>>
    %108 = vector.broadcast %107 : f32 to vector<8x225xf32>
    %109 = arith.mulf %54, %108 : vector<8x225xf32>
    %110 = arith.addf %106, %109 : vector<8x225xf32>
    %c1_46 = arith.constant 1 : index
    %c5_47 = arith.constant 5 : index
    %111 = memref.load %arg10[%c1_46, %c5_47] : memref<4x8xf32, #tpu.memory_space<smem>>
    %112 = vector.broadcast %111 : f32 to vector<8x225xf32>
    %113 = arith.mulf %55, %112 : vector<8x225xf32>
    %114 = arith.addf %110, %113 : vector<8x225xf32>
    %c1_48 = arith.constant 1 : index
    %c6_49 = arith.constant 6 : index
    %115 = memref.load %arg10[%c1_48, %c6_49] : memref<4x8xf32, #tpu.memory_space<smem>>
    %116 = vector.broadcast %115 : f32 to vector<8x225xf32>
    %117 = arith.mulf %56, %116 : vector<8x225xf32>
    %118 = arith.addf %114, %117 : vector<8x225xf32>
    %c1_50 = arith.constant 1 : index
    %c7_51 = arith.constant 7 : index
    %119 = memref.load %arg10[%c1_50, %c7_51] : memref<4x8xf32, #tpu.memory_space<smem>>
    %120 = vector.broadcast %119 : f32 to vector<8x225xf32>
    %121 = arith.mulf %57, %120 : vector<8x225xf32>
    %122 = arith.addf %118, %121 : vector<8x225xf32>
    %123 = vector.broadcast %49 : f32 to vector<8x225xf32>
    %124 = arith.addf %122, %123 : vector<8x225xf32>
    %125 = math.tanh %124 : vector<8x225xf32>
    %c2_52 = arith.constant 2 : index
    %c0_53 = arith.constant 0 : index
    %126 = memref.load %arg10[%c2_52, %c0_53] : memref<4x8xf32, #tpu.memory_space<smem>>
    %127 = vector.broadcast %126 : f32 to vector<8x225xf32>
    %128 = arith.mulf %50, %127 : vector<8x225xf32>
    %c2_54 = arith.constant 2 : index
    %c1_55 = arith.constant 1 : index
    %129 = memref.load %arg10[%c2_54, %c1_55] : memref<4x8xf32, #tpu.memory_space<smem>>
    %130 = vector.broadcast %129 : f32 to vector<8x225xf32>
    %131 = arith.mulf %51, %130 : vector<8x225xf32>
    %132 = arith.addf %128, %131 : vector<8x225xf32>
    %c2_56 = arith.constant 2 : index
    %c2_57 = arith.constant 2 : index
    %133 = memref.load %arg10[%c2_56, %c2_57] : memref<4x8xf32, #tpu.memory_space<smem>>
    %134 = vector.broadcast %133 : f32 to vector<8x225xf32>
    %135 = arith.mulf %52, %134 : vector<8x225xf32>
    %136 = arith.addf %132, %135 : vector<8x225xf32>
    %c2_58 = arith.constant 2 : index
    %c3_59 = arith.constant 3 : index
    %137 = memref.load %arg10[%c2_58, %c3_59] : memref<4x8xf32, #tpu.memory_space<smem>>
    %138 = vector.broadcast %137 : f32 to vector<8x225xf32>
    %139 = arith.mulf %53, %138 : vector<8x225xf32>
    %140 = arith.addf %136, %139 : vector<8x225xf32>
    %c2_60 = arith.constant 2 : index
    %c4_61 = arith.constant 4 : index
    %141 = memref.load %arg10[%c2_60, %c4_61] : memref<4x8xf32, #tpu.memory_space<smem>>
    %142 = vector.broadcast %141 : f32 to vector<8x225xf32>
    %143 = arith.mulf %54, %142 : vector<8x225xf32>
    %144 = arith.addf %140, %143 : vector<8x225xf32>
    %c2_62 = arith.constant 2 : index
    %c5_63 = arith.constant 5 : index
    %145 = memref.load %arg10[%c2_62, %c5_63] : memref<4x8xf32, #tpu.memory_space<smem>>
    %146 = vector.broadcast %145 : f32 to vector<8x225xf32>
    %147 = arith.mulf %55, %146 : vector<8x225xf32>
    %148 = arith.addf %144, %147 : vector<8x225xf32>
    %c2_64 = arith.constant 2 : index
    %c6_65 = arith.constant 6 : index
    %149 = memref.load %arg10[%c2_64, %c6_65] : memref<4x8xf32, #tpu.memory_space<smem>>
    %150 = vector.broadcast %149 : f32 to vector<8x225xf32>
    %151 = arith.mulf %56, %150 : vector<8x225xf32>
    %152 = arith.addf %148, %151 : vector<8x225xf32>
    %c2_66 = arith.constant 2 : index
    %c7_67 = arith.constant 7 : index
    %153 = memref.load %arg10[%c2_66, %c7_67] : memref<4x8xf32, #tpu.memory_space<smem>>
    %154 = vector.broadcast %153 : f32 to vector<8x225xf32>
    %155 = arith.mulf %57, %154 : vector<8x225xf32>
    %156 = arith.addf %152, %155 : vector<8x225xf32>
    %157 = vector.broadcast %49 : f32 to vector<8x225xf32>
    %158 = arith.addf %156, %157 : vector<8x225xf32>
    %159 = math.tanh %158 : vector<8x225xf32>
    %c3_68 = arith.constant 3 : index
    %c0_69 = arith.constant 0 : index
    %160 = memref.load %arg10[%c3_68, %c0_69] : memref<4x8xf32, #tpu.memory_space<smem>>
    %161 = vector.broadcast %160 : f32 to vector<8x225xf32>
    %162 = arith.mulf %50, %161 : vector<8x225xf32>
    %c3_70 = arith.constant 3 : index
    %c1_71 = arith.constant 1 : index
    %163 = memref.load %arg10[%c3_70, %c1_71] : memref<4x8xf32, #tpu.memory_space<smem>>
    %164 = vector.broadcast %163 : f32 to vector<8x225xf32>
    %165 = arith.mulf %51, %164 : vector<8x225xf32>
    %166 = arith.addf %162, %165 : vector<8x225xf32>
    %c3_72 = arith.constant 3 : index
    %c2_73 = arith.constant 2 : index
    %167 = memref.load %arg10[%c3_72, %c2_73] : memref<4x8xf32, #tpu.memory_space<smem>>
    %168 = vector.broadcast %167 : f32 to vector<8x225xf32>
    %169 = arith.mulf %52, %168 : vector<8x225xf32>
    %170 = arith.addf %166, %169 : vector<8x225xf32>
    %c3_74 = arith.constant 3 : index
    %c3_75 = arith.constant 3 : index
    %171 = memref.load %arg10[%c3_74, %c3_75] : memref<4x8xf32, #tpu.memory_space<smem>>
    %172 = vector.broadcast %171 : f32 to vector<8x225xf32>
    %173 = arith.mulf %53, %172 : vector<8x225xf32>
    %174 = arith.addf %170, %173 : vector<8x225xf32>
    %c3_76 = arith.constant 3 : index
    %c4_77 = arith.constant 4 : index
    %175 = memref.load %arg10[%c3_76, %c4_77] : memref<4x8xf32, #tpu.memory_space<smem>>
    %176 = vector.broadcast %175 : f32 to vector<8x225xf32>
    %177 = arith.mulf %54, %176 : vector<8x225xf32>
    %178 = arith.addf %174, %177 : vector<8x225xf32>
    %c3_78 = arith.constant 3 : index
    %c5_79 = arith.constant 5 : index
    %179 = memref.load %arg10[%c3_78, %c5_79] : memref<4x8xf32, #tpu.memory_space<smem>>
    %180 = vector.broadcast %179 : f32 to vector<8x225xf32>
    %181 = arith.mulf %55, %180 : vector<8x225xf32>
    %182 = arith.addf %178, %181 : vector<8x225xf32>
    %c3_80 = arith.constant 3 : index
    %c6_81 = arith.constant 6 : index
    %183 = memref.load %arg10[%c3_80, %c6_81] : memref<4x8xf32, #tpu.memory_space<smem>>
    %184 = vector.broadcast %183 : f32 to vector<8x225xf32>
    %185 = arith.mulf %56, %184 : vector<8x225xf32>
    %186 = arith.addf %182, %185 : vector<8x225xf32>
    %c3_82 = arith.constant 3 : index
    %c7_83 = arith.constant 7 : index
    %187 = memref.load %arg10[%c3_82, %c7_83] : memref<4x8xf32, #tpu.memory_space<smem>>
    %188 = vector.broadcast %187 : f32 to vector<8x225xf32>
    %189 = arith.mulf %57, %188 : vector<8x225xf32>
    %190 = arith.addf %186, %189 : vector<8x225xf32>
    %191 = vector.broadcast %49 : f32 to vector<8x225xf32>
    %192 = arith.addf %190, %191 : vector<8x225xf32>
    %193 = math.tanh %192 : vector<8x225xf32>
    %194 = tpu.concatenate %91, %125, %159, %193 in 1 : vector<8x225xf32>, vector<8x225xf32>, vector<8x225xf32>, vector<8x225xf32> -> vector<8x900xf32>
    %c0_84 = arith.constant 0 : index
    %c0_85 = arith.constant 0 : index
    %c0_86 = arith.constant 0 : index
    %195 = vector.load %arg12[%c0_84, %c0_85, %c0_86] : memref<1x8x900xf32, #tpu.memory_space<vmem>>, vector<1x8x900xf32>
    %196 = vector.shape_cast %195 : vector<1x8x900xf32> to vector<8x900xf32>
    %197 = vector.shape_cast %194 : vector<8x900xf32> to vector<1x8x900xf32>
    tpu.vector_store %arg12[%c0_84, %c0_85, %c0_86], %197 {strides = array<i32>} : memref<1x8x900xf32, #tpu.memory_space<vmem>>, vector<1x8x900xf32>,
    return
  }
  func.func @transform_0(%arg0: i32) -> (i32, i32, i32) {
    %c0_i32 = arith.constant 0 : i32
    %c0_i32_0 = arith.constant 0 : i32
    %c0_i32_1 = arith.constant 0 : i32
    return %arg0, %c0_i32, %c0_i32_0 : i32, i32, i32
  }
  func.func @transform_1(%arg0: i32) -> (i32, i32) {
    %c0_i32 = arith.constant 0 : i32
    %c0_i32_0 = arith.constant 0 : i32
    %c0_i32_1 = arith.constant 0 : i32
    return %c0_i32, %c0_i32_0 : i32, i32
  }
  func.func @transform_2(%arg0: i32) -> (i32, i32) {
    %c0_i32 = arith.constant 0 : i32
    %c0_i32_0 = arith.constant 0 : i32
    %c0_i32_1 = arith.constant 0 : i32
    return %c0_i32, %c0_i32_0 : i32, i32
  }
  func.func @transform_3(%arg0: i32) -> (i32, i32) {
    %c0_i32 = arith.constant 0 : i32
    %c0_i32_0 = arith.constant 0 : i32
    %c0_i32_1 = arith.constant 0 : i32
    return %c0_i32, %c0_i32_0 : i32, i32
  }
  func.func @transform_4(%arg0: i32) -> (i32, i32) {
    %c0_i32 = arith.constant 0 : i32
    %c0_i32_0 = arith.constant 0 : i32
    %c0_i32_1 = arith.constant 0 : i32
    return %c0_i32, %c0_i32_0 : i32, i32
  }
  func.func @transform_5(%arg0: i32) -> (i32, i32) {
    %c0_i32 = arith.constant 0 : i32
    %c0_i32_0 = arith.constant 0 : i32
    %c0_i32_1 = arith.constant 0 : i32
    return %c0_i32, %c0_i32_0 : i32, i32
  }
  func.func @transform_6(%arg0: i32) -> (i32, i32) {
    %c0_i32 = arith.constant 0 : i32
    %c0_i32_0 = arith.constant 0 : i32
    %c0_i32_1 = arith.constant 0 : i32
    return %c0_i32, %c0_i32_0 : i32, i32
  }
  func.func @transform_7(%arg0: i32) -> (i32, i32) {
    %c0_i32 = arith.constant 0 : i32
    %c0_i32_0 = arith.constant 0 : i32
    %c0_i32_1 = arith.constant 0 : i32
    return %c0_i32, %c0_i32_0 : i32, i32
  }
  func.func @transform_8(%arg0: i32) -> (i32, i32) {
    %c0_i32 = arith.constant 0 : i32
    %c0_i32_0 = arith.constant 0 : i32
    %c0_i32_1 = arith.constant 0 : i32
    return %c0_i32, %c0_i32_0 : i32, i32
  }
  func.func @transform_9(%arg0: i32) -> (i32, i32) {
    %c0_i32 = arith.constant 0 : i32
    %c0_i32_0 = arith.constant 0 : i32
    %c0_i32_1 = arith.constant 0 : i32
    return %c0_i32, %c0_i32_0 : i32, i32
  }
  func.func @transform_10(%arg0: i32) -> (i32, i32) {
    %c0_i32 = arith.constant 0 : i32
    %c0_i32_0 = arith.constant 0 : i32
    %c0_i32_1 = arith.constant 0 : i32
    return %c0_i32, %c0_i32_0 : i32, i32
  }
  func.func @transform_11(%arg0: i32) -> (i32, i32, i32) {
    %c0_i32 = arith.constant 0 : i32
    %c0_i32_0 = arith.constant 0 : i32
    %c0_i32_1 = arith.constant 0 : i32
    return %arg0, %c0_i32, %c0_i32_0 : i32, i32, i32
  }
}

</mosaic_0001>

<llo_original>
// kernel: tile.18
$region0: #{tile.18}
  #allocation0 [shape = 's32[1]{0}', space=sflag, size = 0x4, scoped, tag = 'scoped memory for tile.18']
  %s0 = inlined_call_operand.vmem [shape: f32[16], index: 0, kind: input, shape index: {}]
  %s1 = inlined_call_operand.vmem [shape: f32[25,16], index: 1, kind: output, shape index: {}]
  // Predicated region
  $region2: #{tile.18} parent=0 // pred_check
    _
  $region3: #{tile.18} parent=0 // pred_check_branch
    %3 = sbr.rel (0) target = $region5
  $region4: #{tile.18} parent=0 // pred_region
    _
  $region5: #{tile.18} parent=0 // pred_fallthru
    _
  %v4 = vld [vmem:[%s0] ss:$0 sm:$0xff]
  %5 = vst [vmem:[%s1] sm:$0xff] %v4
  %s6 = scalar_lea.vmem %s1, 8
  %7 = vst [vmem:[%s6] sm:$0xff] %v4
  %s8 = scalar_lea.vmem %s1, 16
  %9 = vst [vmem:[%s8] sm:$0xff] %v4
  %s10 = scalar_lea.vmem %s1, 24
  %11 = vst [vmem:[%s10] sm:$0xff] %v4

// kernel: tile.19
$region0: #{tile.19}
  %s0 = inlined_call_operand.vmem [shape: f32[25,16], index: 0, kind: input, shape index: {}]
  %s1 = inlined_call_operand.vmem [shape: f32[1,400], index: 1, kind: output, shape index: {}]
  $region1: #{tile.19} parent=0
    #allocation0 [shape = 'u8[16384]{0}', space=vmem, size = 0x4000, scoped, tag = 'scoped mem for output reshape']
    %v2 = vld [vmem:[%s0] ss:$8 sm:$0xf]
    %vm3 = vcmask 130048
    %4 = vst.msk [vmem:[#allocation0] ss:$8 sm:$0xf] %vm3, %v2
    %s5 = scalar_lea.vmem %s0, 7
    %v6 = vld [vmem:[%s5] ss:$8 sm:$0x7]
    %7 = vrot.lane.b32.xlu0 %v6, 112
    %v8 = vpop.permute.xlu0 %7
    %vm9 = vcmask 1048448
    %10 = vst.msk [vmem:[#allocation0] ss:$8 sm:$0x7] %vm9, %v8
    %s11 = scalar_lea.vmem %s0, 6
    %v12 = vld [vmem:[%s11] ss:$8 sm:$0x7]
    %13 = vrot.lane.b32.xlu0 %v12, 96
    %v14 = vpop.permute.xlu0 %13
    %vm15 = vcmask 917248
    %16 = vst.msk [vmem:[#allocation0] ss:$8 sm:$0x7] %vm15, %v14
    %s17 = scalar_lea.vmem %s0, 5
    %v18 = vld [vmem:[%s17] ss:$8 sm:$0x7]
    %19 = vrot.lane.b32.xlu0 %v18, 80
    %v20 = vpop.permute.xlu0 %19
    %vm21 = vcmask 786048
    %22 = vst.msk [vmem:[#allocation0] ss:$8 sm:$0x7] %vm21, %v20
    %s23 = scalar_lea.vmem %s0, 4
    %v24 = vld [vmem:[%s23] ss:$8 sm:$0x7]
    %25 = vrot.lane.b32.xlu0 %v24, 64
    %v26 = vpop.permute.xlu0 %25
    %vm27 = vcmask 654848
    %28 = vst.msk [vmem:[#allocation0] ss:$8 sm:$0x7] %vm27, %v26
    %s29 = scalar_lea.vmem %s0, 3
    %v30 = vld [vmem:[%s29] ss:$8 sm:$0x7]
    %31 = vrot.lane.b32.xlu0 %v30, 48
    %v32 = vpop.permute.xlu0 %31
    %vm33 = vcmask 523648
    %34 = vst.msk [vmem:[#allocation0] ss:$8 sm:$0x7] %vm33, %v32
    %s35 = scalar_lea.vmem %s0, 2
    %v36 = vld [vmem:[%s35] ss:$8 sm:$0x7]
    %37 = vrot.lane.b32.xlu0 %v36, 32
    %v38 = vpop.permute.xlu0 %37
    %vm39 = vcmask 392448
    %40 = vst.msk [vmem:[#allocation0] ss:$8 sm:$0x7] %vm39, %v38
    %s41 = scalar_lea.vmem %s0, 1
    %v42 = vld [vmem:[%s41] ss:$8 sm:$0x7]
    %43 = vrot.lane.b32.xlu0 %v42, 16
    %v44 = vpop.permute.xlu0 %43
    %vm45 = vcmask 261248
    %46 = vst.msk [vmem:[#allocation0] ss:$8 sm:$0x7] %vm45, %v44
    %s48 = sshll.u32 1, 1
    %s49 = ssub.s32 %s48, 1
    %v51 = vld [vmem:[#allocation0] sm:%s49]
    %s52 = sshll.u32 1, 1
    %s53 = ssub.s32 %s52, 1
    %54 = vst [vmem:[%s1] sm:%s53] %v51
    %s55 = scalar_lea.vmem [#allocation0], 8
    %v56 = vld [vmem:[%s55] sm:%s49]
    %s57 = sshll.u32 1, 1
    %s58 = ssub.s32 %s57, 1
    %s59 = scalar_lea.vmem %s1, 1
    %60 = vst [vmem:[%s59] sm:%s58] %v56
    %s61 = scalar_lea.vmem [#allocation0], 16
    %v62 = vld [vmem:[%s61] sm:%s49]
    %s63 = sshll.u32 1, 1
    %s64 = ssub.s32 %s63, 1
    %s65 = smul.addr 1, 2
    %s66 = scalar_lea.vmem %s1, %s65
    %67 = vst [vmem:[%s66] sm:%s64] %v62
    %s68 = scalar_lea.vmem [#allocation0], 24
    %v69 = vld [vmem:[%s68] sm:%s49]
    %s70 = sshll.u32 1, 1
    %s71 = ssub.s32 %s70, 1
    %s72 = smul.addr 1, 3
    %s73 = scalar_lea.vmem %s1, %s72
    %74 = vst [vmem:[%s73] sm:%s71] %v69

// kernel: tile.23
$region0: #{tile.23}
  #allocation0 [shape = 's32[1]{0}', space=sflag, size = 0x4, scoped, tag = 'scoped memory for tile.23']
  %s0 = inlined_call_operand.vmem [shape: f32[8], index: 0, kind: input, shape index: {}]
  %s1 = inlined_call_operand.vmem [shape: f32[4,8], index: 1, kind: output, shape index: {}]
  // Predicated region
  $region2: #{tile.23} parent=0 // pred_check
    _
  $region3: #{tile.23} parent=0 // pred_check_branch
    %3 = sbr.rel (0) target = $region5
  $region4: #{tile.23} parent=0 // pred_region
    _
  $region5: #{tile.23} parent=0 // pred_fallthru
    _
  %v4 = vld [vmem:[%s0] ss:$0 sm:$0xff]
  %5 = vst [vmem:[%s1] sm:$0xf] %v4

// kernel: tile.24
$region0: #{tile.24}
  %s0 = inlined_call_operand.vmem [shape: f32[4,8], index: 0, kind: input, shape index: {}]
  %s1 = inlined_call_operand.vmem [shape: f32[1,32], index: 1, kind: output, shape index: {}]
  $region1: #{tile.24} parent=0
    #allocation0 [shape = 'u8[4096]{0}', space=vmem, size = 0x1000, scoped, tag = 'scoped mem for output reshape']
    #allocation1 [shape = 'u8[4096]{0}', space=vmem, size = 0x1000, scoped, tag = 'scoped mem for input reshape']
    %s3 = sshll.u32 1, 4
    %s4 = ssub.s32 %s3, 1
    %v5 = vld [vmem:[%s0] sm:%s4]
    %6 = vst [vmem:[#allocation1] sm:%s4] %v5
    %v7 = vld [vmem:[#allocation1] sm:$0x1]
    %vm8 = vcmask 64512
    %9 = vst.msk [vmem:[#allocation0] sm:$0x1] %vm8, %v7
    %s10 = scalar_lea.vmem [#allocation1], 3
    %v11 = vld [vmem:[%s10] sm:$0x1]
    %12 = vrot.lane.b32.xlu0 %v11, 24
    %v13 = vpop.permute.xlu0 %12
    %vm14 = vcmask 261312
    %15 = vst.msk [vmem:[#allocation0] sm:$0x1] %vm14, %v13
    %s16 = scalar_lea.vmem [#allocation1], 2
    %v17 = vld [vmem:[%s16] sm:$0x1]
    %18 = vrot.lane.b32.xlu0 %v17, 16
    %v19 = vpop.permute.xlu0 %18
    %vm20 = vcmask 195712
    %21 = vst.msk [vmem:[#allocation0] sm:$0x1] %vm20, %v19
    %s22 = scalar_lea.vmem [#allocation1], 1
    %v23 = vld [vmem:[%s22] sm:$0x1]
    %24 = vrot.lane.b32.xlu0 %v23, 8
    %v25 = vpop.permute.xlu0 %24
    %vm26 = vcmask 130112
    %27 = vst.msk [vmem:[#allocation0] sm:$0x1] %vm26, %v25
    %s29 = sshll.u32 1, 1
    %s30 = ssub.s32 %s29, 1
    %v32 = vld [vmem:[#allocation0] sm:%s30]
    %s33 = sshll.u32 1, 1
    %s34 = ssub.s32 %s33, 1
    %35 = vst [vmem:[%s1] sm:%s34] %v32

// kernel: dc_autoencoder_forward.1
$region0: #{dc_autoencoder_forward.1}
  #allocation0 [shape = 'u32[]', space=smem, size = 0x4, offset = 0x4, fixed_abs, tag = 'smem constant byte address 0x4 - core index']
  #allocation1 [shape = 'u32[144,128]{1,0:T(1,128)}', space=vmem, size = 0x12000, scoped, tag = 'internal scratch']
  #allocation2 [shape = 'f32[1,1]{1,0:T(1,128)S(6)}', space=smem, size = 0x200, scoped, tag = 'scoped memory for dc_autoencoder_forward.1']
  %s0 = inlined_call_operand.vmem [shape: bf16[2,32,225], index: 0, kind: input, shape index: {}]
  %s1 = inlined_call_operand.vmem [shape: bf16[225,400], index: 1, kind: input, shape index: {}]
  %s2 = inlined_call_operand.vmem [shape: f32[1,400], index: 2, kind: input, shape index: {}]
  %s3 = inlined_call_operand.vmem [shape: bf16[400,72], index: 3, kind: input, shape index: {}]
  %s4 = inlined_call_operand.vmem [shape: f32[1,32], index: 4, kind: input, shape index: {}]
  %s5 = inlined_call_operand.vmem [shape: bf16[32,400], index: 5, kind: input, shape index: {}]
  %s6 = inlined_call_operand.vmem [shape: f32[1,400], index: 6, kind: input, shape index: {}]
  %s7 = inlined_call_operand.vmem [shape: bf16[400,1800], index: 7, kind: input, shape index: {}]
  %s8 = inlined_call_operand.vmem [shape: f32[1,1800], index: 8, kind: input, shape index: {}]
  %s9 = inlined_call_operand.vmem [shape: f32[4,8], index: 9, kind: input, shape index: {}]
  %s10 = inlined_call_operand.<no memory space> [shape: f32[1,1], index: 10, kind: input, shape index: {}]
  %s11 = inlined_call_operand.vmem [shape: f32[2,8,900], index: 11, kind: output, shape index: {}]
  %s12 = sld [smem:[#allocation0]]
  $region81: #{dc_autoencoder_forward.1} parent=0
    _
  %s14 = ssub.s32 1, %s12
  %s15 = scalar_select 0, %s14, %s12
  %16 = sst [smem:[#allocation2]] %s10
  $region1: #{dc_autoencoder_forward.1} parent=0
    #allocation3 [shape = 'u8[2048]{0}', space=smem, size = 0x800, scoped, tag = 'input window, operand 9, single buffered']
    #allocation4 [shape = 's32[2]{0}', space=sflag, size = 0x8, scoped, tag = 'scoped memory for dc_autoencoder_forward.1']
    %17 = vsyncpa [#allocation4], 0
    loop: start=0, step=1, limit=4
    $region2: #{dc_autoencoder_forward.1} parent=1 // loop_pre_header
      _
    $region3: #{dc_autoencoder_forward.1} parent=1 // loop_header
      %s19 = sphi 0, %s23
      %p20 = scmp.ge.s32.totalorder %s19, 4
      %s29 = sphi 0, %s31
      %s32 = sphi 0, %s29
      %s33 = sphi 0, %s32
      %s49 = sphi 0, %s33
      %s53 = sphi 0, %s53
      %s55 = sphi 0, %s53
      %s56 = sphi 0, %s55
      %s70 = sphi 0, %s56
      %s74 = sphi 0, %s74
      %s76 = sphi 0, %s74
      %s77 = sphi 0, %s76
      %s91 = sphi 0, %s77
      %s95 = sphi 0, %s95
      %s97 = sphi 0, %s95
      %s98 = sphi 0, %s97
      %s112 = sphi 0, %s98
      %s116 = sphi 0, %s116
      %s118 = sphi 0, %s116
      %s119 = sphi 0, %s118
      %s133 = sphi 0, %s119
      %s137 = sphi 0, %s137
      %s139 = sphi 0, %s137
      %s140 = sphi 0, %s139
      %s154 = sphi 0, %s140
      %s158 = sphi 0, %s158
      %s160 = sphi 0, %s158
      %s161 = sphi 0, %s160
      %s175 = sphi 0, %s161
      %s179 = sphi 0, %s179
      %s181 = sphi 0, %s179
      %s182 = sphi 0, %s181
      %s196 = sphi 0, %s182
      %s200 = sphi 0, %s200
      %s202 = sphi 0, %s200
      %s203 = sphi 0, %s202
      %s217 = sphi 0, %s203
      %s221 = sphi 0, %s221
      %s223 = sphi 0, %s221
      %s224 = sphi 0, %s223
      %s238 = sphi 0, %s224
      %s242 = sphi 0, %s242
      %s244 = sphi 0, %s242
      %s245 = sphi 0, %s244
      %s259 = sphi 0, %s245
      %s265 = sphi 0, %s267
      %s268 = sphi 0, %s265
      %s269 = sphi 0, %s268
      %s285 = sphi 0, %s269
    $region4: #{dc_autoencoder_forward.1} parent=1 // loop_header_branch
      %22 = sbr.rel (%p20) target = $region8
    $region5: #{dc_autoencoder_forward.1} parent=1 // loop_body
      %s24 = ssub.s32 %s19, 1
      %s25 = ssub.s32 %s19, 2
      %s26 = sadd.s32 %s19, 1
      %s27 = ssub.s32 %s19, %s26
      %p28 = scmp.eq.s32.totalorder %s27, 0
      %s30 = sadd.s32 %s29, 1
      %s31 = scalar_select %p28, %s29, %s30
      %p34 = pneg %p28
      %p35 = scmp.eq.s32.totalorder %s19, 1
      %p36 = por %p34, %p35
      %p37 = scmp.ne.s32.totalorder %s29, %s32
      %p38 = scmp.eq.s32.totalorder %s19, 0
      %p39 = por %p37, %p38
      %p40 = scmp.ne.s32.totalorder %s29, %s32
      %p41 = scmp.eq.s32.totalorder %s24, 1
      %p42 = por %p40, %p41
      %p43 = scmp.ne.s32.totalorder %s32, %s33
      %p44 = scmp.eq.s32.totalorder %s24, 0
      %p45 = por %p43, %p44
      %p46 = scmp.ne.s32.totalorder %s32, %s33
      %p47 = scmp.eq.s32.totalorder %s25, 1
      %p48 = por %p46, %p47
      %p50 = scmp.ne.s32.totalorder %s33, %s49
      %p51 = scmp.eq.s32.totalorder %s25, 0
      %p52 = por %p50, %p51
      %s54 = sadd.s32 %s53, 1
      %p57 = scmp.eq.s32.totalorder %s19, 1
      %p58 = scmp.ne.s32.totalorder %s53, %s55
      %p59 = scmp.eq.s32.totalorder %s19, 0
      %p60 = por %p58, %p59
      %p61 = scmp.ne.s32.totalorder %s53, %s55
      %p62 = scmp.eq.s32.totalorder %s24, 1
      %p63 = por %p61, %p62
      %p64 = scmp.ne.s32.totalorder %s55, %s56
      %p65 = scmp.eq.s32.totalorder %s24, 0
      %p66 = por %p64, %p65
      %p67 = scmp.ne.s32.totalorder %s55, %s56
      %p68 = scmp.eq.s32.totalorder %s25, 1
      %p69 = por %p67, %p68
      %p71 = scmp.ne.s32.totalorder %s56, %s70
      %p72 = scmp.eq.s32.totalorder %s25, 0
      %p73 = por %p71, %p72
      %s75 = sadd.s32 %s74, 1
      %p78 = scmp.eq.s32.totalorder %s19, 1
      %p79 = scmp.ne.s32.totalorder %s74, %s76
      %p80 = scmp.eq.s32.totalorder %s19, 0
      %p81 = por %p79, %p80
      %p82 = scmp.ne.s32.totalorder %s74, %s76
      %p83 = scmp.eq.s32.totalorder %s24, 1
      %p84 = por %p82, %p83
      %p85 = scmp.ne.s32.totalorder %s76, %s77
      %p86 = scmp.eq.s32.totalorder %s24, 0
      %p87 = por %p85, %p86
      %p88 = scmp.ne.s32.totalorder %s76, %s77
      %p89 = scmp.eq.s32.totalorder %s25, 1
      %p90 = por %p88, %p89
      %p92 = scmp.ne.s32.totalorder %s77, %s91
      %p93 = scmp.eq.s32.totalorder %s25, 0
      %p94 = por %p92, %p93
      %s96 = sadd.s32 %s95, 1
      %p99 = scmp.eq.s32.totalorder %s19, 1
      %p100 = scmp.ne.s32.totalorder %s95, %s97
      %p101 = scmp.eq.s32.totalorder %s19, 0
      %p102 = por %p100, %p101
      %p103 = scmp.ne.s32.totalorder %s95, %s97
      %p104 = scmp.eq.s32.totalorder %s24, 1
      %p105 = por %p103, %p104
      %p106 = scmp.ne.s32.totalorder %s97, %s98
      %p107 = scmp.eq.s32.totalorder %s24, 0
      %p108 = por %p106, %p107
      %p109 = scmp.ne.s32.totalorder %s97, %s98
      %p110 = scmp.eq.s32.totalorder %s25, 1
      %p111 = por %p109, %p110
      %p113 = scmp.ne.s32.totalorder %s98, %s112
      %p114 = scmp.eq.s32.totalorder %s25, 0
      %p115 = por %p113, %p114
      %s117 = sadd.s32 %s116, 1
      %p120 = scmp.eq.s32.totalorder %s19, 1
      %p121 = scmp.ne.s32.totalorder %s116, %s118
      %p122 = scmp.eq.s32.totalorder %s19, 0
      %p123 = por %p121, %p122
      %p124 = scmp.ne.s32.totalorder %s116, %s118
      %p125 = scmp.eq.s32.totalorder %s24, 1
      %p126 = por %p124, %p125
      %p127 = scmp.ne.s32.totalorder %s118, %s119
      %p128 = scmp.eq.s32.totalorder %s24, 0
      %p129 = por %p127, %p128
      %p130 = scmp.ne.s32.totalorder %s118, %s119
      %p131 = scmp.eq.s32.totalorder %s25, 1
      %p132 = por %p130, %p131
      %p134 = scmp.ne.s32.totalorder %s119, %s133
      %p135 = scmp.eq.s32.totalorder %s25, 0
      %p136 = por %p134, %p135
      %s138 = sadd.s32 %s137, 1
      %p141 = scmp.eq.s32.totalorder %s19, 1
      %p142 = scmp.ne.s32.totalorder %s137, %s139
      %p143 = scmp.eq.s32.totalorder %s19, 0
      %p144 = por %p142, %p143
      %p145 = scmp.ne.s32.totalorder %s137, %s139
      %p146 = scmp.eq.s32.totalorder %s24, 1
      %p147 = por %p145, %p146
      %p148 = scmp.ne.s32.totalorder %s139, %s140
      %p149 = scmp.eq.s32.totalorder %s24, 0
      %p150 = por %p148, %p149
      %p151 = scmp.ne.s32.totalorder %s139, %s140
      %p152 = scmp.eq.s32.totalorder %s25, 1
      %p153 = por %p151, %p152
      %p155 = scmp.ne.s32.totalorder %s140, %s154
      %p156 = scmp.eq.s32.totalorder %s25, 0
      %p157 = por %p155, %p156
      %s159 = sadd.s32 %s158, 1
      %p162 = scmp.eq.s32.totalorder %s19, 1
      %p163 = scmp.ne.s32.totalorder %s158, %s160
      %p164 = scmp.eq.s32.totalorder %s19, 0
      %p165 = por %p163, %p164
      %p166 = scmp.ne.s32.totalorder %s158, %s160
      %p167 = scmp.eq.s32.totalorder %s24, 1
      %p168 = por %p166, %p167
      %p169 = scmp.ne.s32.totalorder %s160, %s161
      %p170 = scmp.eq.s32.totalorder %s24, 0
      %p171 = por %p169, %p170
      %p172 = scmp.ne.s32.totalorder %s160, %s161
      %p173 = scmp.eq.s32.totalorder %s25, 1
      %p174 = por %p172, %p173
      %p176 = scmp.ne.s32.totalorder %s161, %s175
      %p177 = scmp.eq.s32.totalorder %s25, 0
      %p178 = por %p176, %p177
      %s180 = sadd.s32 %s179, 1
      %p183 = scmp.eq.s32.totalorder %s19, 1
      %p184 = scmp.ne.s32.totalorder %s179, %s181
      %p185 = scmp.eq.s32.totalorder %s19, 0
      %p186 = por %p184, %p185
      %p187 = scmp.ne.s32.totalorder %s179, %s181
      %p188 = scmp.eq.s32.totalorder %s24, 1
      %p189 = por %p187, %p188
      %p190 = scmp.ne.s32.totalorder %s181, %s182
      %p191 = scmp.eq.s32.totalorder %s24, 0
      %p192 = por %p190, %p191
      %p193 = scmp.ne.s32.totalorder %s181, %s182
      %p194 = scmp.eq.s32.totalorder %s25, 1
      %p195 = por %p193, %p194
      %p197 = scmp.ne.s32.totalorder %s182, %s196
      %p198 = scmp.eq.s32.totalorder %s25, 0
      %p199 = por %p197, %p198
      %s201 = sadd.s32 %s200, 1
      %p204 = scmp.eq.s32.totalorder %s19, 1
      %p205 = scmp.ne.s32.totalorder %s200, %s202
      %p206 = scmp.eq.s32.totalorder %s19, 0
      %p207 = por %p205, %p206
      %p208 = scmp.ne.s32.totalorder %s200, %s202
      %p209 = scmp.eq.s32.totalorder %s24, 1
      %p210 = por %p208, %p209
      %p211 = scmp.ne.s32.totalorder %s202, %s203
      %p212 = scmp.eq.s32.totalorder %s24, 0
      %p213 = por %p211, %p212
      %p214 = scmp.ne.s32.totalorder %s202, %s203
      %p215 = scmp.eq.s32.totalorder %s25, 1
      %p216 = por %p214, %p215
      %p218 = scmp.ne.s32.totalorder %s203, %s217
      %p219 = scmp.eq.s32.totalorder %s25, 0
      %p220 = por %p218, %p219
      %s222 = sadd.s32 %s221, 1
      %p225 = scmp.eq.s32.totalorder %s19, 1
      %p226 = scmp.ne.s32.totalorder %s221, %s223
      %p227 = scmp.eq.s32.totalorder %s19, 0
      %p228 = por %p226, %p227
      %p229 = scmp.ne.s32.totalorder %s221, %s223
      %p230 = scmp.eq.s32.totalorder %s24, 1
      %p231 = por %p229, %p230
      %p232 = scmp.ne.s32.totalorder %s223, %s224
      %p233 = scmp.eq.s32.totalorder %s24, 0
      %p234 = por %p232, %p233
      %p235 = scmp.ne.s32.totalorder %s223, %s224
      %p236 = scmp.eq.s32.totalorder %s25, 1
      %p237 = por %p235, %p236
      %p239 = scmp.ne.s32.totalorder %s224, %s238
      %p240 = scmp.eq.s32.totalorder %s25, 0
      %p241 = por %p239, %p240
      %s243 = sadd.s32 %s242, 1
      %p246 = scmp.eq.s32.totalorder %s19, 1
      %p247 = scmp.ne.s32.totalorder %s242, %s244
      %p248 = scmp.eq.s32.totalorder %s19, 0
      %p249 = por %p247, %p248
      %p250 = scmp.ne.s32.totalorder %s242, %s244
      %p251 = scmp.eq.s32.totalorder %s24, 1
      %p252 = por %p250, %p251
      %p253 = scmp.ne.s32.totalorder %s244, %s245
      %p254 = scmp.eq.s32.totalorder %s24, 0
      %p255 = por %p253, %p254
      %p256 = scmp.ne.s32.totalorder %s244, %s245
      %p257 = scmp.eq.s32.totalorder %s25, 1
      %p258 = por %p256, %p257
      %p260 = scmp.ne.s32.totalorder %s245, %s259
      %p261 = scmp.eq.s32.totalorder %s25, 0
      %p262 = por %p260, %p261
      %s263 = ssub.s32 %s19, %s26
      %p264 = scmp.eq.s32.totalorder %s263, 0
      %s266 = sadd.s32 %s265, 1
      %s267 = scalar_select %p264, %s265, %s266
      %p270 = pneg %p264
      %p271 = scmp.eq.s32.totalorder %s19, 1
      %p272 = por %p270, %p271
      %p273 = scmp.ne.s32.totalorder %s265, %s268
      %p274 = scmp.eq.s32.totalorder %s19, 0
      %p275 = por %p273, %p274
      %p276 = scmp.ne.s32.totalorder %s265, %s268
      %p277 = scmp.eq.s32.totalorder %s24, 1
      %p278 = por %p276, %p277
      %p279 = scmp.ne.s32.totalorder %s268, %s269
      %p280 = scmp.eq.s32.totalorder %s24, 0
      %p281 = por %p279, %p280
      %p282 = scmp.ne.s32.totalorder %s268, %s269
      %p283 = scmp.eq.s32.totalorder %s25, 1
      %p284 = por %p282, %p283
      %p286 = scmp.ne.s32.totalorder %s269, %s285
      %p287 = scmp.eq.s32.totalorder %s25, 0
      %p288 = por %p286, %p287
      %p289 = scmp.le.s32.totalorder 1, %s19
      %p290 = scmp.lt.s32.totalorder %s19, 3
      %p291 = pnand %p289, %p290
      %p292 = pneg %p291
      // Predicated region
      $region9: #{dc_autoencoder_forward.1} parent=5 // pred_check
        _
      $region10: #{dc_autoencoder_forward.1} parent=5 // pred_check_branch
        %294 = sbr.rel (%p291) target = $region12
      $region11: #{dc_autoencoder_forward.1} parent=5 // pred_region
        %s295 = ssub.s32 %s19, 1
        // Predicated region
        $region13: #{dc_autoencoder_forward.1} parent=11 // pred_check
          %p296 = pneg %p66
        $region14: #{dc_autoencoder_forward.1} parent=11 // pred_check_branch
          %298 = sbr.rel (%p296) target = $region16
        $region15: #{dc_autoencoder_forward.1} parent=11 // pred_region
          _
        $region16: #{dc_autoencoder_forward.1} parent=11 // pred_fallthru
          _
        // Predicated region
        $region17: #{dc_autoencoder_forward.1} parent=11 // pred_check
          %p299 = pneg %p87
        $region18: #{dc_autoencoder_forward.1} parent=11 // pred_check_branch
          %301 = sbr.rel (%p299) target = $region20
        $region19: #{dc_autoencoder_forward.1} parent=11 // pred_region
          _
        $region20: #{dc_autoencoder_forward.1} parent=11 // pred_fallthru
          _
        // Predicated region
        $region21: #{dc_autoencoder_forward.1} parent=11 // pred_check
          %p302 = pneg %p108
        $region22: #{dc_autoencoder_forward.1} parent=11 // pred_check_branch
          %304 = sbr.rel (%p302) target = $region24
        $region23: #{dc_autoencoder_forward.1} parent=11 // pred_region
          _
        $region24: #{dc_autoencoder_forward.1} parent=11 // pred_fallthru
          _
        // Predicated region
        $region25: #{dc_autoencoder_forward.1} parent=11 // pred_check
          %p305 = pneg %p129
        $region26: #{dc_autoencoder_forward.1} parent=11 // pred_check_branch
          %307 = sbr.rel (%p305) target = $region28
        $region27: #{dc_autoencoder_forward.1} parent=11 // pred_region
          _
        $region28: #{dc_autoencoder_forward.1} parent=11 // pred_fallthru
          _
        // Predicated region
        $region29: #{dc_autoencoder_forward.1} parent=11 // pred_check
          %p308 = pneg %p150
        $region30: #{dc_autoencoder_forward.1} parent=11 // pred_check_branch
          %310 = sbr.rel (%p308) target = $region32
        $region31: #{dc_autoencoder_forward.1} parent=11 // pred_region
          _
        $region32: #{dc_autoencoder_forward.1} parent=11 // pred_fallthru
          _
        // Predicated region
        $region33: #{dc_autoencoder_forward.1} parent=11 // pred_check
          %p311 = pneg %p171
        $region34: #{dc_autoencoder_forward.1} parent=11 // pred_check_branch
          %313 = sbr.rel (%p311) target = $region36
        $region35: #{dc_autoencoder_forward.1} parent=11 // pred_region
          _
        $region36: #{dc_autoencoder_forward.1} parent=11 // pred_fallthru
          _
        // Predicated region
        $region37: #{dc_autoencoder_forward.1} parent=11 // pred_check
          %p314 = pneg %p192
        $region38: #{dc_autoencoder_forward.1} parent=11 // pred_check_branch
          %316 = sbr.rel (%p314) target = $region40
        $region39: #{dc_autoencoder_forward.1} parent=11 // pred_region
          _
        $region40: #{dc_autoencoder_forward.1} parent=11 // pred_fallthru
          _
        // Predicated region
        $region41: #{dc_autoencoder_forward.1} parent=11 // pred_check
          %p317 = pneg %p213
        $region42: #{dc_autoencoder_forward.1} parent=11 // pred_check_branch
          %319 = sbr.rel (%p317) target = $region44
        $region43: #{dc_autoencoder_forward.1} parent=11 // pred_region
          _
        $region44: #{dc_autoencoder_forward.1} parent=11 // pred_fallthru
          _
        // Predicated region
        $region45: #{dc_autoencoder_forward.1} parent=11 // pred_check
          %p320 = pneg %p234
        $region46: #{dc_autoencoder_forward.1} parent=11 // pred_check_branch
          %322 = sbr.rel (%p320) target = $region48
        $region47: #{dc_autoencoder_forward.1} parent=11 // pred_region
          %s324 = ssub.s32 64, 64
          %325 = vsyncadd [#allocation4], %s324
          %s327 = sshll.u32 %s9, 4
          %s328 = int_to_ptr.vmem [resolvable:$true] %s327
          %330 = dma.vmem_to_smem %s328, 64, [#allocation3], [#allocation4]
        $region48: #{dc_autoencoder_forward.1} parent=11 // pred_fallthru
          _
        // Predicated region
        $region49: #{dc_autoencoder_forward.1} parent=11 // pred_check
          %p331 = pneg %p255
        $region50: #{dc_autoencoder_forward.1} parent=11 // pred_check_branch
          %333 = sbr.rel (%p331) target = $region52
        $region51: #{dc_autoencoder_forward.1} parent=11 // pred_region
          _
        $region52: #{dc_autoencoder_forward.1} parent=11 // pred_fallthru
          _
      $region12: #{dc_autoencoder_forward.1} parent=5 // pred_fallthru
        _
      %p334 = scmp.lt.s32.totalorder %s19, 2
      // Predicated region
      $region53: #{dc_autoencoder_forward.1} parent=5 // pred_check
        %p335 = pneg %p334
      $region54: #{dc_autoencoder_forward.1} parent=5 // pred_check_branch
        %337 = sbr.rel (%p335) target = $region56
      $region55: #{dc_autoencoder_forward.1} parent=5 // pred_region
        // Predicated region
        $region57: #{dc_autoencoder_forward.1} parent=55 // pred_check
          %p338 = pneg %p39
        $region58: #{dc_autoencoder_forward.1} parent=55 // pred_check_branch
          %340 = sbr.rel (%p338) target = $region60
        $region59: #{dc_autoencoder_forward.1} parent=55 // pred_region
          %p341 = scmp.lt.s32.totalorder %s19, 1
          %s342 = scalar_select %p341, %s19, 1
          %s343 = smul.addr %s342, 8
          %s344 = smul.addr %s343, 4
          %s345 = scalar_lea.vmem %s0, %s344
        $region60: #{dc_autoencoder_forward.1} parent=55 // pred_fallthru
          _
      $region56: #{dc_autoencoder_forward.1} parent=5 // pred_fallthru
        _
      %p346 = scmp.le.s32.totalorder 1, %s19
      %p347 = scmp.lt.s32.totalorder %s19, 3
      %p348 = pnand %p346, %p347
      %p349 = pneg %p348
      // Predicated region
      $region61: #{dc_autoencoder_forward.1} parent=5 // pred_check
        _
      $region62: #{dc_autoencoder_forward.1} parent=5 // pred_check_branch
        %351 = sbr.rel (%p348) target = $region64
      $region63: #{dc_autoencoder_forward.1} parent=5 // pred_region
        %s352 = ssub.s32 %s19, 1
        // Predicated region
        $region65: #{dc_autoencoder_forward.1} parent=63 // pred_check
          %p353 = pneg %p234
        $region66: #{dc_autoencoder_forward.1} parent=63 // pred_check_branch
          %355 = sbr.rel (%p353) target = $region68
        $region67: #{dc_autoencoder_forward.1} parent=63 // pred_region
          %356 = dma.done [#allocation4], 64
        $region68: #{dc_autoencoder_forward.1} parent=63 // pred_fallthru
          _
        %357 = sfence
        %p358 = scmp.lt.s32.totalorder %s24, 1
        %s359 = scalar_select %p358, %s24, 1
        %s360 = smul.addr %s359, 8
        %s361 = smul.addr %s360, 4
        %s362 = scalar_lea.vmem %s0, %s361
        %p363 = pneg %p45
        %p364 = pneg %p42
        %p365 = pneg %p66
        %p366 = pneg %p63
        %p367 = pneg %p87
        %p368 = pneg %p84
        %p369 = pneg %p108
        %p370 = pneg %p105
        %p371 = pneg %p129
        %p372 = pneg %p126
        %p373 = pneg %p150
        %p374 = pneg %p147
        %p375 = pneg %p171
        %p376 = pneg %p168
        %p377 = pneg %p192
        %p378 = pneg %p189
        %p379 = pneg %p213
        %p380 = pneg %p210
        %p381 = pneg %p234
        %p382 = pneg %p231
        %p383 = pneg %p255
        %p384 = pneg %p252
        %p385 = pneg %p281
        %p386 = pneg %p278
        %p387 = scmp.lt.s32.totalorder %s24, 1
        %s388 = scalar_select %p387, %s24, 1
        %s389 = smul.addr %s388, 8
        %s390 = smul.addr %s389, 8
        %s391 = scalar_lea.vmem %s11, %s390
        %p392 = scmp.lt.s32.totalorder %s24, 1
        %s393 = scalar_select %p392, %s24, 1
        %s394 = smul.addr %s393, 8
        %s395 = smul.addr %s394, 4
        %s396 = scalar_lea.vmem %s0, %s395
        %p397 = scmp.lt.s32.totalorder %s24, 1
        %s398 = scalar_select %p397, %s24, 1
        %s399 = smul.addr %s398, 8
        %s400 = smul.addr %s399, 8
        %s401 = scalar_lea.vmem %s11, %s400
        %v403 = vld [vmem:[%s396] sm:$0xff]
        %v404 = vld [vmem:[%s396 + $0x8] sm:$0xff]
        %v405 = vld [vmem:[%s396 + $0x10] sm:$0xff]
        %v406 = vld [vmem:[%s396 + $0x18] sm:$0xff]
        %v407 = vld [vmem:[%s1] sm:$0xff]
        %v408 = vld [vmem:[%s1 + $0x8] sm:$0xff]
        %v409 = vld [vmem:[%s1 + $0x10] sm:$0xff]
        %v410 = vld [vmem:[%s1 + $0x18] sm:$0xff]
        %v411 = vld [vmem:[%s1 + $0x20] sm:$0xff]
        %v412 = vld [vmem:[%s1 + $0x28] sm:$0xff]
        %v413 = vld [vmem:[%s1 + $0x30] sm:$0xff]
        %v414 = vld [vmem:[%s1 + $0x38] sm:$0xff]
        %v415 = vld [vmem:[%s1 + $0x40] sm:$0xff]
        %v416 = vld [vmem:[%s1 + $0x48] sm:$0xff]
        %v417 = vld [vmem:[%s1 + $0x50] sm:$0xff]
        %v418 = vld [vmem:[%s1 + $0x58] sm:$0xff]
        %v419 = vld [vmem:[%s1 + $0x60] sm:$0xff]
        %v420 = vld [vmem:[%s1 + $0x68] sm:$0xff]
        %v421 = vld [vmem:[%s1 + $0x70] sm:$0xff]
        %v422 = vld [vmem:[%s1 + $0x78] sm:$0xff]
        %v423 = vld [vmem:[%s1 + $0x80] sm:$0xff]
        %v424 = vld [vmem:[%s1 + $0x88] sm:$0xff]
        %v425 = vld [vmem:[%s1 + $0x90] sm:$0xff]
        %v426 = vld [vmem:[%s1 + $0x98] sm:$0xff]
        %v427 = vld [vmem:[%s1 + $0xa0] sm:$0xff]
        %v428 = vld [vmem:[%s1 + $0xa8] sm:$0xff]
        %v429 = vld [vmem:[%s1 + $0xb0] sm:$0xff]
        %v430 = vld [vmem:[%s1 + $0xb8] sm:$0xff]
        %v431 = vld [vmem:[%s1 + $0xc0] sm:$0xff]
        %v432 = vld [vmem:[%s1 + $0xc8] sm:$0xff]
        %v433 = vld [vmem:[%s1 + $0xd0] sm:$0xff]
        %v434 = vld [vmem:[%s1 + $0xd8] sm:$0xff]
        %v435 = vld [vmem:[%s1 + $0xe0] sm:$0xff]
        %v436 = vld [vmem:[%s1 + $0xe8] sm:$0xff]
        %v437 = vld [vmem:[%s1 + $0xf0] sm:$0xff]
        %v438 = vld [vmem:[%s1 + $0xf8] sm:$0xff]
        %v439 = vld [vmem:[%s1 + $0x100] sm:$0xff]
        %v440 = vld [vmem:[%s1 + $0x108] sm:$0xff]
        %v441 = vld [vmem:[%s1 + $0x110] sm:$0xff]
        %v442 = vld [vmem:[%s1 + $0x118] sm:$0xff]
        %v443 = vld [vmem:[%s1 + $0x120] sm:$0xff]
        %v444 = vld [vmem:[%s1 + $0x128] sm:$0xff]
        %v445 = vld [vmem:[%s1 + $0x130] sm:$0xff]
        %v446 = vld [vmem:[%s1 + $0x138] sm:$0xff]
        %v447 = vld [vmem:[%s1 + $0x140] sm:$0xff]
        %v448 = vld [vmem:[%s1 + $0x148] sm:$0xff]
        %v449 = vld [vmem:[%s1 + $0x150] sm:$0xff]
        %v450 = vld [vmem:[%s1 + $0x158] sm:$0xff]
        %v451 = vld [vmem:[%s1 + $0x160] sm:$0xff]
        %v452 = vld [vmem:[%s1 + $0x168] sm:$0xff]
        %v453 = vld [vmem:[%s1 + $0x170] sm:$0xff]
        %v454 = vld [vmem:[%s1 + $0x178] sm:$0xff]
        %v455 = vld [vmem:[%s1 + $0x180] sm:$0xff]
        %v456 = vld [vmem:[%s1 + $0x188] sm:$0xff]
        %v457 = vld [vmem:[%s1 + $0x190] sm:$0xff]
        %v458 = vld [vmem:[%s1 + $0x198] sm:$0xff]
        %v459 = vld [vmem:[%s1 + $0x1a0] sm:$0xff]
        %v460 = vld [vmem:[%s1 + $0x1a8] sm:$0xff]
        %v461 = vld [vmem:[%s1 + $0x1b0] sm:$0xff]
        %v462 = vld [vmem:[%s1 + $0x1b8] sm:$0xff]
        %v463 = vld [vmem:[%s1 + $0x1c0] sm:$0x11]
        %v464 = vld [vmem:[%s1 + $0x1c8] sm:$0x11]
        %v469 = vunpack.c.l.b16 %v403
        %v470 = vunpack.c.h.b16 %v403
        %v471 = vunpack.c.l.b16 %v404
        %v472 = vunpack.c.h.b16 %v404
        %v473 = vunpack.c.l.b16 %v405
        %v474 = vunpack.c.h.b16 %v405
        %v475 = vunpack.c.l.b16 %v406
        %v476 = vunpack.c.h.b16 %v406
        %v477 = vpack.c.b16 %v471, %v469
        %v478 = vpack.c.b16 %v472, %v470
        %v479 = vpack.c.b16 %v475, %v473
        %v480 = vpack.c.b16 %v476, %v474
        %v541 = vunpack.c.l.b16 %v407
        %v542 = vunpack.c.h.b16 %v407
        %v543 = vunpack.c.l.b16 %v408
        %v544 = vunpack.c.h.b16 %v408
        %v545 = vunpack.c.l.b16 %v409
        %v546 = vunpack.c.h.b16 %v409
        %v547 = vunpack.c.l.b16 %v410
        %v548 = vunpack.c.h.b16 %v410
        %v549 = vunpack.c.l.b16 %v411
        %v550 = vunpack.c.h.b16 %v411
        %v551 = vunpack.c.l.b16 %v412
        %v552 = vunpack.c.h.b16 %v412
        %v553 = vunpack.c.l.b16 %v413
        %v554 = vunpack.c.h.b16 %v413
        %v555 = vunpack.c.l.b16 %v414
        %v556 = vunpack.c.h.b16 %v414
        %v557 = vunpack.c.l.b16 %v415
        %v558 = vunpack.c.h.b16 %v415
        %v559 = vunpack.c.l.b16 %v416
        %v560 = vunpack.c.h.b16 %v416
        %v561 = vunpack.c.l.b16 %v417
        %v562 = vunpack.c.h.b16 %v417
        %v563 = vunpack.c.l.b16 %v418
        %v564 = vunpack.c.h.b16 %v418
        %v565 = vunpack.c.l.b16 %v419
        %v566 = vunpack.c.h.b16 %v419
        %v567 = vunpack.c.l.b16 %v420
        %v568 = vunpack.c.h.b16 %v420
        %v569 = vunpack.c.l.b16 %v421
        %v570 = vunpack.c.h.b16 %v421
        %v571 = vunpack.c.l.b16 %v422
        %v572 = vunpack.c.h.b16 %v422
        %v573 = vunpack.c.l.b16 %v423
        %v574 = vunpack.c.h.b16 %v423
        %v575 = vunpack.c.l.b16 %v424
        %v576 = vunpack.c.h.b16 %v424
        %v577 = vunpack.c.l.b16 %v425
        %v578 = vunpack.c.h.b16 %v425
        %v579 = vunpack.c.l.b16 %v426
        %v580 = vunpack.c.h.b16 %v426
        %v581 = vunpack.c.l.b16 %v427
        %v582 = vunpack.c.h.b16 %v427
        %v583 = vunpack.c.l.b16 %v428
        %v584 = vunpack.c.h.b16 %v428
        %v585 = vunpack.c.l.b16 %v429
        %v586 = vunpack.c.h.b16 %v429
        %v587 = vunpack.c.l.b16 %v430
        %v588 = vunpack.c.h.b16 %v430
        %v589 = vunpack.c.l.b16 %v431
        %v590 = vunpack.c.h.b16 %v431
        %v591 = vunpack.c.l.b16 %v432
        %v592 = vunpack.c.h.b16 %v432
        %v593 = vunpack.c.l.b16 %v433
        %v594 = vunpack.c.h.b16 %v433
        %v595 = vunpack.c.l.b16 %v434
        %v596 = vunpack.c.h.b16 %v434
        %v597 = vunpack.c.l.b16 %v435
        %v598 = vunpack.c.h.b16 %v435
        %v599 = vunpack.c.l.b16 %v436
        %v600 = vunpack.c.h.b16 %v436
        %v601 = vunpack.c.l.b16 %v437
        %v602 = vunpack.c.h.b16 %v437
        %v603 = vunpack.c.l.b16 %v438
        %v604 = vunpack.c.h.b16 %v438
        %v605 = vunpack.c.l.b16 %v439
        %v606 = vunpack.c.h.b16 %v439
        %v607 = vunpack.c.l.b16 %v440
        %v608 = vunpack.c.h.b16 %v440
        %v609 = vunpack.c.l.b16 %v441
        %v610 = vunpack.c.h.b16 %v441
        %v611 = vunpack.c.l.b16 %v442
        %v612 = vunpack.c.h.b16 %v442
        %v613 = vunpack.c.l.b16 %v443
        %v614 = vunpack.c.h.b16 %v443
        %v615 = vunpack.c.l.b16 %v444
        %v616 = vunpack.c.h.b16 %v444
        %v617 = vunpack.c.l.b16 %v445
        %v618 = vunpack.c.h.b16 %v445
        %v619 = vunpack.c.l.b16 %v446
        %v620 = vunpack.c.h.b16 %v446
        %v621 = vunpack.c.l.b16 %v447
        %v622 = vunpack.c.h.b16 %v447
        %v623 = vunpack.c.l.b16 %v448
        %v624 = vunpack.c.h.b16 %v448
        %v625 = vunpack.c.l.b16 %v449
        %v626 = vunpack.c.h.b16 %v449
        %v627 = vunpack.c.l.b16 %v450
        %v628 = vunpack.c.h.b16 %v450
        %v629 = vunpack.c.l.b16 %v451
        %v630 = vunpack.c.h.b16 %v451
        %v631 = vunpack.c.l.b16 %v452
        %v632 = vunpack.c.h.b16 %v452
        %v633 = vunpack.c.l.b16 %v453
        %v634 = vunpack.c.h.b16 %v453
        %v635 = vunpack.c.l.b16 %v454
        %v636 = vunpack.c.h.b16 %v454
        %v637 = vunpack.c.l.b16 %v455
        %v638 = vunpack.c.h.b16 %v455
        %v639 = vunpack.c.l.b16 %v456
        %v640 = vunpack.c.h.b16 %v456
        %v641 = vunpack.c.l.b16 %v457
        %v642 = vunpack.c.h.b16 %v457
        %v643 = vunpack.c.l.b16 %v458
        %v644 = vunpack.c.h.b16 %v458
        %v645 = vunpack.c.l.b16 %v459
        %v646 = vunpack.c.h.b16 %v459
        %v647 = vunpack.c.l.b16 %v460
        %v648 = vunpack.c.h.b16 %v460
        %v649 = vunpack.c.l.b16 %v461
        %v650 = vunpack.c.h.b16 %v461
        %v651 = vunpack.c.l.b16 %v462
        %v652 = vunpack.c.h.b16 %v462
        %v653 = vunpack.c.l.b16 %v463
        %v654 = vunpack.c.h.b16 %v463
        %v655 = vunpack.c.l.b16 %v464
        %v656 = vunpack.c.h.b16 %v464
        %v657 = vpack.c.b16 %v545, %v541
        %v658 = vpack.c.b16 %v546, %v542
        %v659 = vpack.c.b16 %v547, %v543
        %v660 = vpack.c.b16 %v548, %v544
        %v661 = vpack.c.b16 %v553, %v549
        %v662 = vpack.c.b16 %v554, %v550
        %v663 = vpack.c.b16 %v555, %v551
        %v664 = vpack.c.b16 %v556, %v552
        %v665 = vpack.c.b16 %v561, %v557
        %v666 = vpack.c.b16 %v562, %v558
        %v667 = vpack.c.b16 %v563, %v559
        %v668 = vpack.c.b16 %v564, %v560
        %v669 = vpack.c.b16 %v569, %v565
        %v670 = vpack.c.b16 %v570, %v566
        %v671 = vpack.c.b16 %v571, %v567
        %v672 = vpack.c.b16 %v572, %v568
        %v673 = vpack.c.b16 %v577, %v573
        %v674 = vpack.c.b16 %v578, %v574
        %v675 = vpack.c.b16 %v579, %v575
        %v676 = vpack.c.b16 %v580, %v576
        %v677 = vpack.c.b16 %v585, %v581
        %v678 = vpack.c.b16 %v586, %v582
        %v679 = vpack.c.b16 %v587, %v583
        %v680 = vpack.c.b16 %v588, %v584
        %v681 = vpack.c.b16 %v593, %v589
        %v682 = vpack.c.b16 %v594, %v590
        %v683 = vpack.c.b16 %v595, %v591
        %v684 = vpack.c.b16 %v596, %v592
        %v685 = vpack.c.b16 %v601, %v597
        %v686 = vpack.c.b16 %v602, %v598
        %v687 = vpack.c.b16 %v603, %v599
        %v688 = vpack.c.b16 %v604, %v600
        %v689 = vpack.c.b16 %v609, %v605
        %v690 = vpack.c.b16 %v610, %v606
        %v691 = vpack.c.b16 %v611, %v607
        %v692 = vpack.c.b16 %v612, %v608
        %v693 = vpack.c.b16 %v617, %v613
        %v694 = vpack.c.b16 %v618, %v614
        %v695 = vpack.c.b16 %v619, %v615
        %v696 = vpack.c.b16 %v620, %v616
        %v697 = vpack.c.b16 %v625, %v621
        %v698 = vpack.c.b16 %v626, %v622
        %v699 = vpack.c.b16 %v627, %v623
        %v700 = vpack.c.b16 %v628, %v624
        %v701 = vpack.c.b16 %v633, %v629
        %v702 = vpack.c.b16 %v634, %v630
        %v703 = vpack.c.b16 %v635, %v631
        %v704 = vpack.c.b16 %v636, %v632
        %v705 = vpack.c.b16 %v641, %v637
        %v706 = vpack.c.b16 %v642, %v638
        %v707 = vpack.c.b16 %v643, %v639
        %v708 = vpack.c.b16 %v644, %v640
        %v709 = vpack.c.b16 %v649, %v645
        %v710 = vpack.c.b16 %v650, %v646
        %v711 = vpack.c.b16 %v651, %v647
        %v712 = vpack.c.b16 %v652, %v648
        %v713 = vpack.c.b16 %v653, %v653
        %v714 = vpack.c.b16 %v654, %v654
        %v715 = vpack.c.b16 %v655, %v655
        %v716 = vpack.c.b16 %v656, %v656
        %vm773 = vcmask 793600
        %v775 = vsel %vm773, %v478, 0
        %v778 = vsel %vm773, %v480, 0
        %vm780 = vcmask 1040384
        %v781 = vsel 0, 4294967295, 65535
        %v782 = vsel %vm780, %v781, 0
        %v784 = vand.u32 %v713, %v782
        %v787 = vand.u32 %v714, %v782
        %v790 = vand.u32 %v715, %v782
        %v793 = vand.u32 %v716, %v782
        %795 = vmatprep.subr.bf16.mxu0 %v686
        %796 = vmatpush1.bf16.msra.mxu0 %v685
        %797 = vmatprep.subr.bf16.mxu0 %v682
        %798 = vmatpush1.bf16.msra.mxu0 %v681
        %799 = vmatprep.subr.bf16.mxu0 %v678
        %800 = vmatpush1.bf16.msra.mxu0 %v677
        %801 = vmatprep.subr.bf16.mxu0 %v674
        %802 = vmatpush1.bf16.msra.mxu0 %v673
        %803 = vmatprep.subr.bf16.mxu0 %v670
        %804 = vmatpush1.bf16.msra.mxu0 %v669
        %805 = vmatprep.subr.bf16.mxu0 %v666
        %806 = vmatpush1.bf16.msra.mxu0 %v665
        %807 = vmatprep.subr.bf16.mxu0 %v662
        %808 = vmatpush1.bf16.msra.mxu0 %v661
        %809 = vmatprep.subr.bf16.mxu0 %v658
        %810 = vmatpush1.bf16.msra.mxu0 %v657
        %811 = vmatprep.subr.bf16.mxu0 0
        %812 = vmatpush2.bf16.msra.mxu0 0
        %813 = vmatprep.subr.bf16.mxu0 %v787
        %814 = vmatpush2.bf16.msra.mxu0 %v784
        %815 = vmatprep.subr.bf16.mxu0 %v710
        %816 = vmatpush2.bf16.msra.mxu0 %v709
        %817 = vmatprep.subr.bf16.mxu0 %v706
        %818 = vmatpush2.bf16.msra.mxu0 %v705
        %819 = vmatprep.subr.bf16.mxu0 %v702
        %820 = vmatpush2.bf16.msra.mxu0 %v701
        %821 = vmatprep.subr.bf16.mxu0 %v698
        %822 = vmatpush2.bf16.msra.mxu0 %v697
        %823 = vmatprep.subr.bf16.mxu0 %v694
        %824 = vmatpush2.bf16.msra.mxu0 %v693
        %825 = vmatprep.subr.bf16.mxu0 %v690
        %826 = vmatpush2.bf16.msra.mxu0 %v689
        %827 = vmatprep.mubr.bf16.mxu0 %v775
        %828 = vmatmul.mubr.bf16.gmra.mxu0 %v477
        %v829 = vpop.f32.mrf.mxu0
        %v830 = vadd.f32 0.0, %v829
        %v831 = vpop.f32.mrf.mxu0
        %v832 = vadd.f32 0.0, %v831
        %v833 = vpop.f32.mrf.mxu0
        %v834 = vadd.f32 0.0, %v833
        %v835 = vpop.f32.mrf.mxu0
        %v836 = vadd.f32 0.0, %v835
        %837 = vmatprep.mubr.bf16.mxu0 %v778
        %838 = vmatmul.mubr.bf16.gmra.mxu0 %v479
        %v839 = vpop.f32.mrf.mxu0
        %v840 = vadd.f32 0.0, %v839
        %v841 = vpop.f32.mrf.mxu0
        %v842 = vadd.f32 0.0, %v841
        %v843 = vpop.f32.mrf.mxu0
        %v844 = vadd.f32 0.0, %v843
        %v845 = vpop.f32.mrf.mxu0
        %v846 = vadd.f32 0.0, %v845
        %847 = vdwg.mxu0
        %848 = vmatprep.subr.bf16.mxu0 %v688
        %849 = vmatpush1.bf16.msra.mxu0 %v687
        %850 = vmatprep.subr.bf16.mxu0 %v684
        %851 = vmatpush1.bf16.msra.mxu0 %v683
        %852 = vmatprep.subr.bf16.mxu0 %v680
        %853 = vmatpush1.bf16.msra.mxu0 %v679
        %854 = vmatprep.subr.bf16.mxu0 %v676
        %855 = vmatpush1.bf16.msra.mxu0 %v675
        %856 = vmatprep.subr.bf16.mxu0 %v672
        %857 = vmatpush1.bf16.msra.mxu0 %v671
        %858 = vmatprep.subr.bf16.mxu0 %v668
        %859 = vmatpush1.bf16.msra.mxu0 %v667
        %860 = vmatprep.subr.bf16.mxu0 %v664
        %861 = vmatpush1.bf16.msra.mxu0 %v663
        %862 = vmatprep.subr.bf16.mxu0 %v660
        %863 = vmatpush1.bf16.msra.mxu0 %v659
        %864 = vmatprep.subr.bf16.mxu0 0
        %865 = vmatpush2.bf16.msra.mxu0 0
        %866 = vmatprep.subr.bf16.mxu0 %v793
        %867 = vmatpush2.bf16.msra.mxu0 %v790
        %868 = vmatprep.subr.bf16.mxu0 %v712
        %869 = vmatpush2.bf16.msra.mxu0 %v711
        %870 = vmatprep.subr.bf16.mxu0 %v708
        %871 = vmatpush2.bf16.msra.mxu0 %v707
        %872 = vmatprep.subr.bf16.mxu0 %v704
        %873 = vmatpush2.bf16.msra.mxu0 %v703
        %874 = vmatprep.subr.bf16.mxu0 %v700
        %875 = vmatpush2.bf16.msra.mxu0 %v699
        %876 = vmatprep.subr.bf16.mxu0 %v696
        %877 = vmatpush2.bf16.msra.mxu0 %v695
        %878 = vmatprep.subr.bf16.mxu0 %v692
        %879 = vmatpush2.bf16.msra.mxu0 %v691
        %880 = vmatprep.mubr.bf16.mxu0 %v775
        %881 = vmatmul.mubr.bf16.gmra.mxu0 %v477
        %v882 = vpop.f32.mrf.mxu0
        %v883 = vadd.f32 0.0, %v882
        %v884 = vpop.f32.mrf.mxu0
        %v885 = vadd.f32 0.0, %v884
        %v886 = vpop.f32.mrf.mxu0
        %v887 = vadd.f32 0.0, %v886
        %v888 = vpop.f32.mrf.mxu0
        %v889 = vadd.f32 0.0, %v888
        %890 = vmatprep.mubr.bf16.mxu0 %v778
        %891 = vmatmul.mubr.bf16.gmra.mxu0 %v479
        %v892 = vpop.f32.mrf.mxu0
        %v893 = vadd.f32 0.0, %v892
        %v894 = vpop.f32.mrf.mxu0
        %v895 = vadd.f32 0.0, %v894
        %v896 = vpop.f32.mrf.mxu0
        %v897 = vadd.f32 0.0, %v896
        %v898 = vpop.f32.mrf.mxu0
        %v899 = vadd.f32 0.0, %v898
        %900 = vdwg.mxu0
        %v901 = vmax.f32 %v830, %v834
        %v902 = vmax.f32 %v832, %v836
        %v903 = vmax.f32 %v883, %v887
        %v904 = vmax.f32 %v885, %v889
        %v905 = vmax.f32 %v840, %v844
        %v906 = vmax.f32 %v842, %v846
        %v907 = vmax.f32 %v893, %v897
        %v908 = vmax.f32 %v895, %v899
        %v909 = vmax.f32 %v901, %v905
        %v910 = vmax.f32 %v902, %v906
        %v911 = vmax.f32 %v903, %v907
        %v912 = vmax.f32 %v904, %v908
        %v913 = vld [vmem:[%s2] sm:$0xf]
        %v915 = vlaneseq
        %v916 = vshrl.u32 %v915, 7
        %v917 = vsub.s32 0, %v916
        %v918 = vrot.slane %v913, %v917
        %v919 = vlaneseq
        %v920 = vshrl.u32 %v919, 7
        %v921 = vsub.s32 1, %v920
        %v922 = vrot.slane %v913, %v921
        %v923 = vlaneseq
        %v924 = vshrl.u32 %v923, 7
        %v925 = vsub.s32 2, %v924
        %v926 = vrot.slane %v913, %v925
        %v927 = vlaneseq
        %v928 = vshrl.u32 %v927, 7
        %v929 = vsub.s32 3, %v928
        %v930 = vrot.slane %v913, %v929
        %v935 = vadd.f32 %v909, %v918
        %v936 = vadd.f32 %v910, %v922
        %v937 = vadd.f32 %v911, %v926
        %v938 = vadd.f32 %v912, %v930
        %v939 = vmax.f32 %v935, 0.0
        %v940 = vmax.f32 %v936, 0.0
        %v941 = vmax.f32 %v937, 0.0
        %v942 = vmax.f32 %v938, 0.0
        %v943 = vpack.c.bf16 %v939, %v939
        %v944 = vpack.c.bf16 %v940, %v940
        %v945 = vpack.c.bf16 %v941, %v941
        %v946 = vpack.c.bf16 %v942, %v942
        %v947 = vld [vmem:[%s3] sm:$0xf]
        %v948 = vld [vmem:[%s3 + $0x4] sm:$0xf]
        %v949 = vld [vmem:[%s3 + $0x8] sm:$0xf]
        %v950 = vld [vmem:[%s3 + $0xc] sm:$0xf]
        %v951 = vld [vmem:[%s3 + $0x10] sm:$0xf]
        %v952 = vld [vmem:[%s3 + $0x14] sm:$0xf]
        %v953 = vld [vmem:[%s3 + $0x18] sm:$0xf]
        %v954 = vld [vmem:[%s3 + $0x1c] sm:$0xf]
        %v955 = vld [vmem:[%s3 + $0x20] sm:$0xf]
        %v956 = vld [vmem:[%s3 + $0x24] sm:$0xf]
        %v957 = vld [vmem:[%s3 + $0x28] sm:$0xf]
        %v958 = vld [vmem:[%s3 + $0x2c] sm:$0xf]
        %v959 = vld [vmem:[%s3 + $0x30] sm:$0xf]
        %v960 = vld [vmem:[%s3 + $0x34] sm:$0xf]
        %v961 = vld [vmem:[%s3 + $0x38] sm:$0xf]
        %v962 = vld [vmem:[%s3 + $0x3c] sm:$0xf]
        %v963 = vld [vmem:[%s3 + $0x40] sm:$0xf]
        %v964 = vld [vmem:[%s3 + $0x44] sm:$0xf]
        %v965 = vld [vmem:[%s3 + $0x48] sm:$0xf]
        %v966 = vld [vmem:[%s3 + $0x4c] sm:$0xf]
        %v967 = vld [vmem:[%s3 + $0x50] sm:$0xf]
        %v968 = vld [vmem:[%s3 + $0x54] sm:$0xf]
        %v969 = vld [vmem:[%s3 + $0x58] sm:$0xf]
        %v970 = vld [vmem:[%s3 + $0x5c] sm:$0xf]
        %v971 = vld [vmem:[%s3 + $0x60] sm:$0xf]
        %v972 = vld [vmem:[%s3 + $0x64] sm:$0xf]
        %v973 = vld [vmem:[%s3 + $0x68] sm:$0xf]
        %v974 = vld [vmem:[%s3 + $0x6c] sm:$0xf]
        %v975 = vld [vmem:[%s3 + $0x70] sm:$0xf]
        %v976 = vld [vmem:[%s3 + $0x74] sm:$0xf]
        %v977 = vld [vmem:[%s3 + $0x78] sm:$0xf]
        %v978 = vld [vmem:[%s3 + $0x7c] sm:$0xf]
        %v979 = vld [vmem:[%s3 + $0x80] sm:$0xf]
        %v980 = vld [vmem:[%s3 + $0x84] sm:$0xf]
        %v981 = vld [vmem:[%s3 + $0x88] sm:$0xf]
        %v982 = vld [vmem:[%s3 + $0x8c] sm:$0xf]
        %v983 = vld [vmem:[%s3 + $0x90] sm:$0xf]
        %v984 = vld [vmem:[%s3 + $0x94] sm:$0xf]
        %v985 = vld [vmem:[%s3 + $0x98] sm:$0xf]
        %v986 = vld [vmem:[%s3 + $0x9c] sm:$0xf]
        %v987 = vld [vmem:[%s3 + $0xa0] sm:$0xf]
        %v988 = vld [vmem:[%s3 + $0xa4] sm:$0xf]
        %v989 = vld [vmem:[%s3 + $0xa8] sm:$0xf]
        %v990 = vld [vmem:[%s3 + $0xac] sm:$0xf]
        %v991 = vld [vmem:[%s3 + $0xb0] sm:$0xf]
        %v992 = vld [vmem:[%s3 + $0xb4] sm:$0xf]
        %v993 = vld [vmem:[%s3 + $0xb8] sm:$0xf]
        %v994 = vld [vmem:[%s3 + $0xbc] sm:$0xf]
        %v995 = vld [vmem:[%s3 + $0xc0] sm:$0xf]
        %v996 = vld [vmem:[%s3 + $0xc4] sm:$0xf]
        %v1047 = vunpack.c.l.b16 %v947
        %v1048 = vunpack.c.l.b16 %v948
        %v1049 = vunpack.c.l.b16 %v949
        %v1050 = vunpack.c.l.b16 %v950
        %v1051 = vunpack.c.l.b16 %v951
        %v1052 = vunpack.c.l.b16 %v952
        %v1053 = vunpack.c.l.b16 %v953
        %v1054 = vunpack.c.l.b16 %v954
        %v1055 = vunpack.c.l.b16 %v955
        %v1056 = vunpack.c.l.b16 %v956
        %v1057 = vunpack.c.l.b16 %v957
        %v1058 = vunpack.c.l.b16 %v958
        %v1059 = vunpack.c.l.b16 %v959
        %v1060 = vunpack.c.l.b16 %v960
        %v1061 = vunpack.c.l.b16 %v961
        %v1062 = vunpack.c.l.b16 %v962
        %v1063 = vunpack.c.l.b16 %v963
        %v1064 = vunpack.c.l.b16 %v964
        %v1065 = vunpack.c.l.b16 %v965
        %v1066 = vunpack.c.l.b16 %v966
        %v1067 = vunpack.c.l.b16 %v967
        %v1068 = vunpack.c.l.b16 %v968
        %v1069 = vunpack.c.l.b16 %v969
        %v1070 = vunpack.c.l.b16 %v970
        %v1071 = vunpack.c.l.b16 %v971
        %v1072 = vunpack.c.l.b16 %v972
        %v1073 = vunpack.c.l.b16 %v973
        %v1074 = vunpack.c.l.b16 %v974
        %v1075 = vunpack.c.l.b16 %v975
        %v1076 = vunpack.c.l.b16 %v976
        %v1077 = vunpack.c.l.b16 %v977
        %v1078 = vunpack.c.l.b16 %v978
        %v1079 = vunpack.c.l.b16 %v979
        %v1080 = vunpack.c.l.b16 %v980
        %v1081 = vunpack.c.l.b16 %v981
        %v1082 = vunpack.c.l.b16 %v982
        %v1083 = vunpack.c.l.b16 %v983
        %v1084 = vunpack.c.l.b16 %v984
        %v1085 = vunpack.c.l.b16 %v985
        %v1086 = vunpack.c.l.b16 %v986
        %v1087 = vunpack.c.l.b16 %v987
        %v1088 = vunpack.c.l.b16 %v988
        %v1089 = vunpack.c.l.b16 %v989
        %v1090 = vunpack.c.l.b16 %v990
        %v1091 = vunpack.c.l.b16 %v991
        %v1092 = vunpack.c.l.b16 %v992
        %v1093 = vunpack.c.l.b16 %v993
        %v1094 = vunpack.c.l.b16 %v994
        %v1095 = vunpack.c.l.b16 %v995
        %v1096 = vunpack.c.l.b16 %v996
        %v1097 = vpack.c.b16 %v1048, %v1047
        %v1098 = vpack.c.b16 %v1050, %v1049
        %v1099 = vpack.c.b16 %v1052, %v1051
        %v1100 = vpack.c.b16 %v1054, %v1053
        %v1101 = vpack.c.b16 %v1056, %v1055
        %v1102 = vpack.c.b16 %v1058, %v1057
        %v1103 = vpack.c.b16 %v1060, %v1059
        %v1104 = vpack.c.b16 %v1062, %v1061
        %v1105 = vpack.c.b16 %v1064, %v1063
        %v1106 = vpack.c.b16 %v1066, %v1065
        %v1107 = vpack.c.b16 %v1068, %v1067
        %v1108 = vpack.c.b16 %v1070, %v1069
        %v1109 = vpack.c.b16 %v1072, %v1071
        %v1110 = vpack.c.b16 %v1074, %v1073
        %v1111 = vpack.c.b16 %v1076, %v1075
        %v1112 = vpack.c.b16 %v1078, %v1077
        %v1113 = vpack.c.b16 %v1080, %v1079
        %v1114 = vpack.c.b16 %v1082, %v1081
        %v1115 = vpack.c.b16 %v1084, %v1083
        %v1116 = vpack.c.b16 %v1086, %v1085
        %v1117 = vpack.c.b16 %v1088, %v1087
        %v1118 = vpack.c.b16 %v1090, %v1089
        %v1119 = vpack.c.b16 %v1092, %v1091
        %v1120 = vpack.c.b16 %v1094, %v1093
        %v1121 = vpack.c.b16 %v1096, %v1095
        %vm1147 = vcmask 130048
        %v1149 = vsel %vm1147, %v946, 0
        %1151 = vmatprep.subr.bf16.mxu0 0
        %1152 = vmatpush1.bf16.msra.mxu0 %v1104
        %1153 = vmatprep.subr.bf16.mxu0 0
        %1154 = vmatpush1.bf16.msra.mxu0 %v1103
        %1155 = vmatprep.subr.bf16.mxu0 0
        %1156 = vmatpush1.bf16.msra.mxu0 %v1102
        %1157 = vmatprep.subr.bf16.mxu0 0
        %1158 = vmatpush1.bf16.msra.mxu0 %v1101
        %1159 = vmatprep.subr.bf16.mxu0 0
        %1160 = vmatpush1.bf16.msra.mxu0 %v1100
        %1161 = vmatprep.subr.bf16.mxu0 0
        %1162 = vmatpush1.bf16.msra.mxu0 %v1099
        %1163 = vmatprep.subr.bf16.mxu0 0
        %1164 = vmatpush1.bf16.msra.mxu0 %v1098
        %1165 = vmatprep.subr.bf16.mxu0 0
        %1166 = vmatpush1.bf16.msra.mxu0 %v1097
        %1167 = vmatprep.subr.bf16.mxu0 0
        %1168 = vmatpush2.bf16.msra.mxu0 %v1112
        %1169 = vmatprep.subr.bf16.mxu0 0
        %1170 = vmatpush2.bf16.msra.mxu0 %v1111
        %1171 = vmatprep.subr.bf16.mxu0 0
        %1172 = vmatpush2.bf16.msra.mxu0 %v1110
        %1173 = vmatprep.subr.bf16.mxu0 0
        %1174 = vmatpush2.bf16.msra.mxu0 %v1109
        %1175 = vmatprep.subr.bf16.mxu0 0
        %1176 = vmatpush2.bf16.msra.mxu0 %v1108
        %1177 = vmatprep.subr.bf16.mxu0 0
        %1178 = vmatpush2.bf16.msra.mxu0 %v1107
        %1179 = vmatprep.subr.bf16.mxu0 0
        %1180 = vmatpush2.bf16.msra.mxu0 %v1106
        %1181 = vmatprep.subr.bf16.mxu0 0
        %1182 = vmatpush2.bf16.msra.mxu0 %v1105
        %1183 = vmatprep.mubr.bf16.mxu0 %v944
        %1184 = vmatmul.mubr.bf16.gmra.mxu0 %v943
        %v1185 = vpop.f32.mrf.mxu0
        %v1186 = vadd.f32 0.0, %v1185
        %v1187 = vpop.f32.mrf.mxu0
        %v1188 = vpop.f32.mrf.mxu0
        %v1189 = vpop.f32.mrf.mxu0
        %1190 = vdwg.mxu0
        %1191 = vmatprep.subr.bf16.mxu0 0
        %1192 = vmatpush1.bf16.msra.mxu0 %v1120
        %1193 = vmatprep.subr.bf16.mxu0 0
        %1194 = vmatpush1.bf16.msra.mxu0 %v1119
        %1195 = vmatprep.subr.bf16.mxu0 0
        %1196 = vmatpush1.bf16.msra.mxu0 %v1118
        %1197 = vmatprep.subr.bf16.mxu0 0
        %1198 = vmatpush1.bf16.msra.mxu0 %v1117
        %1199 = vmatprep.subr.bf16.mxu0 0
        %1200 = vmatpush1.bf16.msra.mxu0 %v1116
        %1201 = vmatprep.subr.bf16.mxu0 0
        %1202 = vmatpush1.bf16.msra.mxu0 %v1115
        %1203 = vmatprep.subr.bf16.mxu0 0
        %1204 = vmatpush1.bf16.msra.mxu0 %v1114
        %1205 = vmatprep.subr.bf16.mxu0 0
        %1206 = vmatpush1.bf16.msra.mxu0 %v1113
        %1207 = vmatprep.subr.bf16.mxu0 0
        %1208 = vmatpush2.bf16.msra.mxu0 0
        %1209 = vmatprep.subr.bf16.mxu0 0
        %1210 = vmatpush2.bf16.msra.mxu0 0
        %1211 = vmatprep.subr.bf16.mxu0 0
        %1212 = vmatpush2.bf16.msra.mxu0 0
        %1213 = vmatprep.subr.bf16.mxu0 0
        %1214 = vmatpush2.bf16.msra.mxu0 0
        %1215 = vmatprep.subr.bf16.mxu0 0
        %1216 = vmatpush2.bf16.msra.mxu0 0
        %1217 = vmatprep.subr.bf16.mxu0 0
        %1218 = vmatpush2.bf16.msra.mxu0 0
        %1219 = vmatprep.subr.bf16.mxu0 0
        %1220 = vmatpush2.bf16.msra.mxu0 0
        %1221 = vmatprep.subr.bf16.mxu0 0
        %1222 = vmatpush2.bf16.msra.mxu0 %v1121
        %1223 = vmatprep.mubr.bf16.mxu0 %v1149
        %1224 = vmatmul.mubr.bf16.gmra.mxu0 %v945
        %v1225 = vpop.f32.mrf.mxu0
        %v1226 = vadd.f32 %v1186, %v1225
        %v1227 = vpop.f32.mrf.mxu0
        %v1228 = vpop.f32.mrf.mxu0
        %v1229 = vpop.f32.mrf.mxu0
        %1230 = vdwg.mxu0
        %1232 = vrot.lane.b32.xlu0 %v1226, 104
        %v1233 = vpop.permute.xlu0 %1232
        %v1235 = vmax.f32 %v1226, %v1233
        %1237 = vrot.lane.b32.xlu0 %v1235, 120
        %v1238 = vpop.permute.xlu0 %1237
        %v1240 = vmax.f32 %v1235, %v1238
        %1242 = vrot.lane.b32.xlu0 %v1240, 120
        %v1243 = vpop.permute.xlu0 %1242
        %v1245 = vsel %vm1147, %v1240, %v1243
        %v1246 = vld [vmem:[%s4] sm:$0x1]
        %v1248 = vlaneseq
        %v1249 = vshrl.u32 %v1248, 7
        %v1250 = vsub.s32 0, %v1249
        %v1251 = vrot.slane %v1246, %v1250
        %v1253 = vadd.f32 %v1245, %v1251
        %v1254 = vmax.f32 %v1253, 0.0
        %v1255 = vpack.c.bf16 %v1254, %v1254
        %v1256 = vld [vmem:[%s5] sm:$0xff]
        %v1257 = vld [vmem:[%s5 + $0x8] sm:$0xff]
        %v1258 = vld [vmem:[%s5 + $0x10] sm:$0xff]
        %v1259 = vld [vmem:[%s5 + $0x18] sm:$0xff]
        %v1260 = vld [vmem:[%s5 + $0x20] sm:$0xff]
        %v1261 = vld [vmem:[%s5 + $0x28] sm:$0xff]
        %v1262 = vld [vmem:[%s5 + $0x30] sm:$0xff]
        %v1263 = vld [vmem:[%s5 + $0x38] sm:$0xff]
        %v1264 = vld [vmem:[%s6] sm:$0xf]
        %v1266 = vlaneseq
        %v1267 = vshrl.u32 %v1266, 7
        %v1268 = vsub.s32 0, %v1267
        %v1269 = vrot.slane %v1264, %v1268
        %v1270 = vlaneseq
        %v1271 = vshrl.u32 %v1270, 7
        %v1272 = vsub.s32 1, %v1271
        %v1273 = vrot.slane %v1264, %v1272
        %v1274 = vlaneseq
        %v1275 = vshrl.u32 %v1274, 7
        %v1276 = vsub.s32 2, %v1275
        %v1277 = vrot.slane %v1264, %v1276
        %v1278 = vlaneseq
        %v1279 = vshrl.u32 %v1278, 7
        %v1280 = vsub.s32 3, %v1279
        %v1281 = vrot.slane %v1264, %v1280
        %v1294 = vunpack.c.l.b16 %v1256
        %v1295 = vunpack.c.h.b16 %v1256
        %v1296 = vunpack.c.l.b16 %v1257
        %v1297 = vunpack.c.h.b16 %v1257
        %v1298 = vunpack.c.l.b16 %v1258
        %v1299 = vunpack.c.h.b16 %v1258
        %v1300 = vunpack.c.l.b16 %v1259
        %v1301 = vunpack.c.h.b16 %v1259
        %v1302 = vunpack.c.l.b16 %v1260
        %v1303 = vunpack.c.h.b16 %v1260
        %v1304 = vunpack.c.l.b16 %v1261
        %v1305 = vunpack.c.h.b16 %v1261
        %v1306 = vunpack.c.l.b16 %v1262
        %v1307 = vunpack.c.h.b16 %v1262
        %v1308 = vunpack.c.l.b16 %v1263
        %v1309 = vunpack.c.h.b16 %v1263
        %v1310 = vpack.c.b16 %v1298, %v1294
        %v1311 = vpack.c.b16 %v1299, %v1295
        %v1312 = vpack.c.b16 %v1300, %v1296
        %v1313 = vpack.c.b16 %v1301, %v1297
        %v1314 = vpack.c.b16 %v1306, %v1302
        %v1315 = vpack.c.b16 %v1307, %v1303
        %v1316 = vpack.c.b16 %v1308, %v1304
        %v1317 = vpack.c.b16 %v1309, %v1305
        %vm1326 = vcmask 261120
        %v1328 = vsel %vm1326, %v1255, 0
        %1330 = vmatprep.subr.bf16.mxu0 0
        %1331 = vmatpush1.bf16.msra.mxu0 0
        %1332 = vmatprep.subr.bf16.mxu0 0
        %1333 = vmatpush1.bf16.msra.mxu0 0
        %1334 = vmatprep.subr.bf16.mxu0 0
        %1335 = vmatpush1.bf16.msra.mxu0 0
        %1336 = vmatprep.subr.bf16.mxu0 0
        %1337 = vmatpush1.bf16.msra.mxu0 0
        %1338 = vmatprep.subr.bf16.mxu0 0
        %1339 = vmatpush1.bf16.msra.mxu0 0
        %1340 = vmatprep.subr.bf16.mxu0 0
        %1341 = vmatpush1.bf16.msra.mxu0 0
        %1342 = vmatprep.subr.bf16.mxu0 %v1315
        %1343 = vmatpush1.bf16.msra.mxu0 %v1314
        %1344 = vmatprep.subr.bf16.mxu0 %v1311
        %1345 = vmatpush1.bf16.msra.mxu0 %v1310
        %1346 = vmatprep.subr.bf16.mxu0 0
        %1347 = vmatpush2.bf16.msra.mxu0 0
        %1348 = vmatprep.subr.bf16.mxu0 0
        %1349 = vmatpush2.bf16.msra.mxu0 0
        %1350 = vmatprep.subr.bf16.mxu0 0
        %1351 = vmatpush2.bf16.msra.mxu0 0
        %1352 = vmatprep.subr.bf16.mxu0 0
        %1353 = vmatpush2.bf16.msra.mxu0 0
        %1354 = vmatprep.subr.bf16.mxu0 0
        %1355 = vmatpush2.bf16.msra.mxu0 0
        %1356 = vmatprep.subr.bf16.mxu0 0
        %1357 = vmatpush2.bf16.msra.mxu0 0
        %1358 = vmatprep.subr.bf16.mxu0 0
        %1359 = vmatpush2.bf16.msra.mxu0 0
        %1360 = vmatprep.subr.bf16.mxu0 0
        %1361 = vmatpush2.bf16.msra.mxu0 0
        %1362 = vmatprep.mubr.bf16.mxu0 0
        %1363 = vmatmul.mubr.bf16.gmra.mxu0 %v1328
        %v1364 = vpop.f32.mrf.mxu0
        %v1365 = vadd.f32 %v1269, %v1364
        %v1366 = vpop.f32.mrf.mxu0
        %v1367 = vadd.f32 %v1273, %v1366
        %v1368 = vpop.f32.mrf.mxu0
        %v1369 = vpop.f32.mrf.mxu0
        %1370 = vdwg.mxu0
        %1371 = vmatprep.subr.bf16.mxu0 0
        %1372 = vmatpush1.bf16.msra.mxu0 0
        %1373 = vmatprep.subr.bf16.mxu0 0
        %1374 = vmatpush1.bf16.msra.mxu0 0
        %1375 = vmatprep.subr.bf16.mxu0 0
        %1376 = vmatpush1.bf16.msra.mxu0 0
        %1377 = vmatprep.subr.bf16.mxu0 0
        %1378 = vmatpush1.bf16.msra.mxu0 0
        %1379 = vmatprep.subr.bf16.mxu0 0
        %1380 = vmatpush1.bf16.msra.mxu0 0
        %1381 = vmatprep.subr.bf16.mxu0 0
        %1382 = vmatpush1.bf16.msra.mxu0 0
        %1383 = vmatprep.subr.bf16.mxu0 %v1317
        %1384 = vmatpush1.bf16.msra.mxu0 %v1316
        %1385 = vmatprep.subr.bf16.mxu0 %v1313
        %1386 = vmatpush1.bf16.msra.mxu0 %v1312
        %1387 = vmatprep.subr.bf16.mxu0 0
        %1388 = vmatpush2.bf16.msra.mxu0 0
        %1389 = vmatprep.subr.bf16.mxu0 0
        %1390 = vmatpush2.bf16.msra.mxu0 0
        %1391 = vmatprep.subr.bf16.mxu0 0
        %1392 = vmatpush2.bf16.msra.mxu0 0
        %1393 = vmatprep.subr.bf16.mxu0 0
        %1394 = vmatpush2.bf16.msra.mxu0 0
        %1395 = vmatprep.subr.bf16.mxu0 0
        %1396 = vmatpush2.bf16.msra.mxu0 0
        %1397 = vmatprep.subr.bf16.mxu0 0
        %1398 = vmatpush2.bf16.msra.mxu0 0
        %1399 = vmatprep.subr.bf16.mxu0 0
        %1400 = vmatpush2.bf16.msra.mxu0 0
        %1401 = vmatprep.subr.bf16.mxu0 0
        %1402 = vmatpush2.bf16.msra.mxu0 0
        %1403 = vmatprep.mubr.bf16.mxu0 0
        %1404 = vmatmul.mubr.bf16.gmra.mxu0 %v1328
        %v1405 = vpop.f32.mrf.mxu0
        %v1406 = vadd.f32 %v1277, %v1405
        %v1407 = vpop.f32.mrf.mxu0
        %v1408 = vadd.f32 %v1281, %v1407
        %v1409 = vpop.f32.mrf.mxu0
        %v1410 = vpop.f32.mrf.mxu0
        %1411 = vdwg.mxu0
        %v1412 = vmax.f32 %v1365, 0.0
        %v1413 = vmax.f32 %v1367, 0.0
        %v1414 = vmax.f32 %v1406, 0.0
        %v1415 = vmax.f32 %v1408, 0.0
        %v1416 = vpack.c.bf16 %v1412, %v1412
        %v1417 = vpack.c.bf16 %v1413, %v1413
        %v1418 = vpack.c.bf16 %v1414, %v1414
        %v1419 = vpack.c.bf16 %v1415, %v1415
        %v1420 = vld [vmem:[%s7] sm:$0xff]
        %v1421 = vld [vmem:[%s7 + $0x8] sm:$0xff]
        %v1422 = vld [vmem:[%s7 + $0x10] sm:$0xff]
        %v1423 = vld [vmem:[%s7 + $0x18] sm:$0xff]
        %v1424 = vld [vmem:[%s7 + $0x20] sm:$0xff]
        %v1425 = vld [vmem:[%s7 + $0x28] sm:$0xff]
        %v1426 = vld [vmem:[%s7 + $0x30] sm:$0xff]
        %v1427 = vld [vmem:[%s7 + $0x38] sm:$0xf]
        %v1428 = vld [vmem:[%s7 + $0x3c] sm:$0xff]
        %v1429 = vld [vmem:[%s7 + $0x44] sm:$0xff]
        %v1430 = vld [vmem:[%s7 + $0x4c] sm:$0xff]
        %v1431 = vld [vmem:[%s7 + $0x54] sm:$0xff]
        %v1432 = vld [vmem:[%s7 + $0x5c] sm:$0xff]
        %v1433 = vld [vmem:[%s7 + $0x64] sm:$0xff]
        %v1434 = vld [vmem:[%s7 + $0x6c] sm:$0xff]
        %v1435 = vld [vmem:[%s7 + $0x74] sm:$0xf]
        %v1436 = vld [vmem:[%s7 + $0x78] sm:$0xff]
        %v1437 = vld [vmem:[%s7 + $0x80] sm:$0xff]
        %v1438 = vld [vmem:[%s7 + $0x88] sm:$0xff]
        %v1439 = vld [vmem:[%s7 + $0x90] sm:$0xff]
        %v1440 = vld [vmem:[%s7 + $0x98] sm:$0xff]
        %v1441 = vld [vmem:[%s7 + $0xa0] sm:$0xff]
        %v1442 = vld [vmem:[%s7 + $0xa8] sm:$0xff]
        %v1443 = vld [vmem:[%s7 + $0xb0] sm:$0xf]
        %v1444 = vld [vmem:[%s7 + $0xb4] sm:$0xff]
        %v1445 = vld [vmem:[%s7 + $0xbc] sm:$0xff]
        %v1446 = vld [vmem:[%s7 + $0xc4] sm:$0xff]
        %v1447 = vld [vmem:[%s7 + $0xcc] sm:$0xff]
        %v1448 = vld [vmem:[%s7 + $0xd4] sm:$0xff]
        %v1449 = vld [vmem:[%s7 + $0xdc] sm:$0xff]
        %v1450 = vld [vmem:[%s7 + $0xe4] sm:$0xff]
        %v1451 = vld [vmem:[%s7 + $0xec] sm:$0xf]
        %v1452 = vld [vmem:[%s7 + $0xf0] sm:$0xff]
        %v1453 = vld [vmem:[%s7 + $0xf8] sm:$0xff]
        %v1454 = vld [vmem:[%s7 + $0x100] sm:$0xff]
        %v1455 = vld [vmem:[%s7 + $0x108] sm:$0xff]
        %v1456 = vld [vmem:[%s7 + $0x110] sm:$0xff]
        %v1457 = vld [vmem:[%s7 + $0x118] sm:$0xff]
        %v1458 = vld [vmem:[%s7 + $0x120] sm:$0xff]
        %v1459 = vld [vmem:[%s7 + $0x128] sm:$0xf]
        %v1460 = vld [vmem:[%s7 + $0x12c] sm:$0xff]
        %v1461 = vld [vmem:[%s7 + $0x134] sm:$0xff]
        %v1462 = vld [vmem:[%s7 + $0x13c] sm:$0xff]
        %v1463 = vld [vmem:[%s7 + $0x144] sm:$0xff]
        %v1464 = vld [vmem:[%s7 + $0x14c] sm:$0xff]
        %v1465 = vld [vmem:[%s7 + $0x154] sm:$0xff]
        %v1466 = vld [vmem:[%s7 + $0x15c] sm:$0xff]
        %v1467 = vld [vmem:[%s7 + $0x164] sm:$0xf]
        %v1468 = vld [vmem:[%s7 + $0x168] sm:$0xff]
        %v1469 = vld [vmem:[%s7 + $0x170] sm:$0xff]
        %v1470 = vld [vmem:[%s7 + $0x178] sm:$0xff]
        %v1471 = vld [vmem:[%s7 + $0x180] sm:$0xff]
        %v1472 = vld [vmem:[%s7 + $0x188] sm:$0xff]
        %v1473 = vld [vmem:[%s7 + $0x190] sm:$0xff]
        %v1474 = vld [vmem:[%s7 + $0x198] sm:$0xff]
        %v1475 = vld [vmem:[%s7 + $0x1a0] sm:$0xf]
        %v1476 = vld [vmem:[%s7 + $0x1a4] sm:$0xff]
        %v1477 = vld [vmem:[%s7 + $0x1ac] sm:$0xff]
        %v1478 = vld [vmem:[%s7 + $0x1b4] sm:$0xff]
        %v1479 = vld [vmem:[%s7 + $0x1bc] sm:$0xff]
        %v1480 = vld [vmem:[%s7 + $0x1c4] sm:$0xff]
        %v1481 = vld [vmem:[%s7 + $0x1cc] sm:$0xff]
        %v1482 = vld [vmem:[%s7 + $0x1d4] sm:$0xff]
        %v1483 = vld [vmem:[%s7 + $0x1dc] sm:$0xf]
        %v1484 = vld [vmem:[%s7 + $0x1e0] sm:$0xff]
        %v1485 = vld [vmem:[%s7 + $0x1e8] sm:$0xff]
        %v1486 = vld [vmem:[%s7 + $0x1f0] sm:$0xff]
        %v1487 = vld [vmem:[%s7 + $0x1f8] sm:$0xff]
        %v1488 = vld [vmem:[%s7 + $0x200] sm:$0xff]
        %v1489 = vld [vmem:[%s7 + $0x208] sm:$0xff]
        %v1490 = vld [vmem:[%s7 + $0x210] sm:$0xff]
        %v1491 = vld [vmem:[%s7 + $0x218] sm:$0xf]
        %v1492 = vld [vmem:[%s7 + $0x21c] sm:$0xff]
        %v1493 = vld [vmem:[%s7 + $0x224] sm:$0xff]
        %v1494 = vld [vmem:[%s7 + $0x22c] sm:$0xff]
        %v1495 = vld [vmem:[%s7 + $0x234] sm:$0xff]
        %v1496 = vld [vmem:[%s7 + $0x23c] sm:$0xff]
        %v1497 = vld [vmem:[%s7 + $0x244] sm:$0xff]
        %v1498 = vld [vmem:[%s7 + $0x24c] sm:$0xff]
        %v1499 = vld [vmem:[%s7 + $0x254] sm:$0xf]
        %v1500 = vld [vmem:[%s7 + $0x258] sm:$0xff]
        %v1501 = vld [vmem:[%s7 + $0x260] sm:$0xff]
        %v1502 = vld [vmem:[%s7 + $0x268] sm:$0xff]
        %v1503 = vld [vmem:[%s7 + $0x270] sm:$0xff]
        %v1504 = vld [vmem:[%s7 + $0x278] sm:$0xff]
        %v1505 = vld [vmem:[%s7 + $0x280] sm:$0xff]
        %v1506 = vld [vmem:[%s7 + $0x288] sm:$0xff]
        %v1507 = vld [vmem:[%s7 + $0x290] sm:$0xf]
        %v1508 = vld [vmem:[%s7 + $0x294] sm:$0xff]
        %v1509 = vld [vmem:[%s7 + $0x29c] sm:$0xff]
        %v1510 = vld [vmem:[%s7 + $0x2a4] sm:$0xff]
        %v1511 = vld [vmem:[%s7 + $0x2ac] sm:$0xff]
        %v1512 = vld [vmem:[%s7 + $0x2b4] sm:$0xff]
        %v1513 = vld [vmem:[%s7 + $0x2bc] sm:$0xff]
        %v1514 = vld [vmem:[%s7 + $0x2c4] sm:$0xff]
        %v1515 = vld [vmem:[%s7 + $0x2cc] sm:$0xf]
        %v1516 = vld [vmem:[%s7 + $0x2d0] sm:$0xff]
        %v1517 = vld [vmem:[%s7 + $0x2d8] sm:$0xff]
        %v1518 = vld [vmem:[%s7 + $0x2e0] sm:$0xff]
        %v1519 = vld [vmem:[%s7 + $0x2e8] sm:$0xff]
        %v1520 = vld [vmem:[%s7 + $0x2f0] sm:$0xff]
        %v1521 = vld [vmem:[%s7 + $0x2f8] sm:$0xff]
        %v1522 = vld [vmem:[%s7 + $0x300] sm:$0xff]
        %v1523 = vld [vmem:[%s7 + $0x308] sm:$0xf]
        %v1524 = vld [vmem:[%s7 + $0x30c] sm:$0xff]
        %v1525 = vld [vmem:[%s7 + $0x314] sm:$0xff]
        %v1526 = vld [vmem:[%s7 + $0x31c] sm:$0xff]
        %v1527 = vld [vmem:[%s7 + $0x324] sm:$0xff]
        %v1528 = vld [vmem:[%s7 + $0x32c] sm:$0xff]
        %v1529 = vld [vmem:[%s7 + $0x334] sm:$0xff]
        %v1530 = vld [vmem:[%s7 + $0x33c] sm:$0xff]
        %v1531 = vld [vmem:[%s7 + $0x344] sm:$0xf]
        %v1532 = vld [vmem:[%s7 + $0x348] sm:$0xff]
        %v1533 = vld [vmem:[%s7 + $0x350] sm:$0xff]
        %v1534 = vld [vmem:[%s7 + $0x358] sm:$0xff]
        %v1535 = vld [vmem:[%s7 + $0x360] sm:$0xff]
        %v1536 = vld [vmem:[%s7 + $0x368] sm:$0xff]
        %v1537 = vld [vmem:[%s7 + $0x370] sm:$0xff]
        %v1538 = vld [vmem:[%s7 + $0x378] sm:$0xff]
        %v1539 = vld [vmem:[%s7 + $0x380] sm:$0xf]
        %v1540 = vld [vmem:[%s7 + $0x384] sm:$0xff]
        %v1541 = vld [vmem:[%s7 + $0x38c] sm:$0xff]
        %v1542 = vld [vmem:[%s7 + $0x394] sm:$0xff]
        %v1543 = vld [vmem:[%s7 + $0x39c] sm:$0xff]
        %v1544 = vld [vmem:[%s7 + $0x3a4] sm:$0xff]
        %v1545 = vld [vmem:[%s7 + $0x3ac] sm:$0xff]
        %v1546 = vld [vmem:[%s7 + $0x3b4] sm:$0xff]
        %v1547 = vld [vmem:[%s7 + $0x3bc] sm:$0xf]
        %v1548 = vld [vmem:[%s7 + $0x3c0] sm:$0xff]
        %v1549 = vld [vmem:[%s7 + $0x3c8] sm:$0xff]
        %v1550 = vld [vmem:[%s7 + $0x3d0] sm:$0xff]
        %v1551 = vld [vmem:[%s7 + $0x3d8] sm:$0xff]
        %v1552 = vld [vmem:[%s7 + $0x3e0] sm:$0xff]
        %v1553 = vld [vmem:[%s7 + $0x3e8] sm:$0xff]
        %v1554 = vld [vmem:[%s7 + $0x3f0] sm:$0xff]
        %v1555 = vld [vmem:[%s7 + $0x3f8] sm:$0xf]
        %v1556 = vld [vmem:[%s7 + $0x3fc] sm:$0xff]
        %v1557 = vld [vmem:[%s7 + $0x404] sm:$0xff]
        %v1558 = vld [vmem:[%s7 + $0x40c] sm:$0xff]
        %v1559 = vld [vmem:[%s7 + $0x414] sm:$0xff]
        %v1560 = vld [vmem:[%s7 + $0x41c] sm:$0xff]
        %v1561 = vld [vmem:[%s7 + $0x424] sm:$0xff]
        %v1562 = vld [vmem:[%s7 + $0x42c] sm:$0xff]
        %v1563 = vld [vmem:[%s7 + $0x434] sm:$0xf]
        %v1564 = vld [vmem:[%s7 + $0x438] sm:$0xff]
        %v1565 = vld [vmem:[%s7 + $0x440] sm:$0xff]
        %v1566 = vld [vmem:[%s7 + $0x448] sm:$0xff]
        %v1567 = vld [vmem:[%s7 + $0x450] sm:$0xff]
        %v1568 = vld [vmem:[%s7 + $0x458] sm:$0xff]
        %v1569 = vld [vmem:[%s7 + $0x460] sm:$0xff]
        %v1570 = vld [vmem:[%s7 + $0x468] sm:$0xff]
        %v1571 = vld [vmem:[%s7 + $0x470] sm:$0xf]
        %v1572 = vld [vmem:[%s7 + $0x474] sm:$0xff]
        %v1573 = vld [vmem:[%s7 + $0x47c] sm:$0xff]
        %v1574 = vld [vmem:[%s7 + $0x484] sm:$0xff]
        %v1575 = vld [vmem:[%s7 + $0x48c] sm:$0xff]
        %v1576 = vld [vmem:[%s7 + $0x494] sm:$0xff]
        %v1577 = vld [vmem:[%s7 + $0x49c] sm:$0xff]
        %v1578 = vld [vmem:[%s7 + $0x4a4] sm:$0xff]
        %v1579 = vld [vmem:[%s7 + $0x4ac] sm:$0xf]
        %v1580 = vld [vmem:[%s7 + $0x4b0] sm:$0xff]
        %v1581 = vld [vmem:[%s7 + $0x4b8] sm:$0xff]
        %v1582 = vld [vmem:[%s7 + $0x4c0] sm:$0xff]
        %v1583 = vld [vmem:[%s7 + $0x4c8] sm:$0xff]
        %v1584 = vld [vmem:[%s7 + $0x4d0] sm:$0xff]
        %v1585 = vld [vmem:[%s7 + $0x4d8] sm:$0xff]
        %v1586 = vld [vmem:[%s7 + $0x4e0] sm:$0xff]
        %v1587 = vld [vmem:[%s7 + $0x4e8] sm:$0xf]
        %v1588 = vld [vmem:[%s7 + $0x4ec] sm:$0xff]
        %v1589 = vld [vmem:[%s7 + $0x4f4] sm:$0xff]
        %v1590 = vld [vmem:[%s7 + $0x4fc] sm:$0xff]
        %v1591 = vld [vmem:[%s7 + $0x504] sm:$0xff]
        %v1592 = vld [vmem:[%s7 + $0x50c] sm:$0xff]
        %v1593 = vld [vmem:[%s7 + $0x514] sm:$0xff]
        %v1594 = vld [vmem:[%s7 + $0x51c] sm:$0xff]
        %v1595 = vld [vmem:[%s7 + $0x524] sm:$0xf]
        %v1596 = vld [vmem:[%s7 + $0x528] sm:$0xff]
        %v1597 = vld [vmem:[%s7 + $0x530] sm:$0xff]
        %v1598 = vld [vmem:[%s7 + $0x538] sm:$0xff]
        %v1599 = vld [vmem:[%s7 + $0x540] sm:$0xff]
        %v1600 = vld [vmem:[%s7 + $0x548] sm:$0xff]
        %v1601 = vld [vmem:[%s7 + $0x550] sm:$0xff]
        %v1602 = vld [vmem:[%s7 + $0x558] sm:$0xff]
        %v1603 = vld [vmem:[%s7 + $0x560] sm:$0xf]
        %v1604 = vld [vmem:[%s7 + $0x564] sm:$0xff]
        %v1605 = vld [vmem:[%s7 + $0x56c] sm:$0xff]
        %v1606 = vld [vmem:[%s7 + $0x574] sm:$0xff]
        %v1607 = vld [vmem:[%s7 + $0x57c] sm:$0xff]
        %v1608 = vld [vmem:[%s7 + $0x584] sm:$0xff]
        %v1609 = vld [vmem:[%s7 + $0x58c] sm:$0xff]
        %v1610 = vld [vmem:[%s7 + $0x594] sm:$0xff]
        %v1611 = vld [vmem:[%s7 + $0x59c] sm:$0xf]
        %v1612 = vld [vmem:[%s7 + $0x5a0] sm:$0xff]
        %v1613 = vld [vmem:[%s7 + $0x5a8] sm:$0xff]
        %v1614 = vld [vmem:[%s7 + $0x5b0] sm:$0xff]
        %v1615 = vld [vmem:[%s7 + $0x5b8] sm:$0xff]
        %v1616 = vld [vmem:[%s7 + $0x5c0] sm:$0xff]
        %v1617 = vld [vmem:[%s7 + $0x5c8] sm:$0xff]
        %v1618 = vld [vmem:[%s7 + $0x5d0] sm:$0xff]
        %v1619 = vld [vmem:[%s7 + $0x5d8] sm:$0xf]
        %v1620 = vld [vmem:[%s7 + $0x5dc] sm:$0xff]
        %v1621 = vld [vmem:[%s7 + $0x5e4] sm:$0xff]
        %v1622 = vld [vmem:[%s7 + $0x5ec] sm:$0xff]
        %v1623 = vld [vmem:[%s7 + $0x5f4] sm:$0xff]
        %v1624 = vld [vmem:[%s7 + $0x5fc] sm:$0xff]
        %v1625 = vld [vmem:[%s7 + $0x604] sm:$0xff]
        %v1626 = vld [vmem:[%s7 + $0x60c] sm:$0xff]
        %v1627 = vld [vmem:[%s7 + $0x614] sm:$0xf]
        %v1628 = vld [vmem:[%s7 + $0x618] sm:$0xff]
        %v1629 = vld [vmem:[%s7 + $0x620] sm:$0xff]
        %v1630 = vld [vmem:[%s7 + $0x628] sm:$0xff]
        %v1631 = vld [vmem:[%s7 + $0x630] sm:$0xff]
        %v1632 = vld [vmem:[%s7 + $0x638] sm:$0xff]
        %v1633 = vld [vmem:[%s7 + $0x640] sm:$0xff]
        %v1634 = vld [vmem:[%s7 + $0x648] sm:$0xff]
        %v1635 = vld [vmem:[%s7 + $0x650] sm:$0xf]
        %v1636 = vld [vmem:[%s7 + $0x654] sm:$0xff]
        %v1637 = vld [vmem:[%s7 + $0x65c] sm:$0xff]
        %v1638 = vld [vmem:[%s7 + $0x664] sm:$0xff]
        %v1639 = vld [vmem:[%s7 + $0x66c] sm:$0xff]
        %v1640 = vld [vmem:[%s7 + $0x674] sm:$0xff]
        %v1641 = vld [vmem:[%s7 + $0x67c] sm:$0xff]
        %v1642 = vld [vmem:[%s7 + $0x684] sm:$0xff]
        %v1643 = vld [vmem:[%s7 + $0x68c] sm:$0xf]
        %v1644 = vld [vmem:[%s7 + $0x690] sm:$0xff]
        %v1645 = vld [vmem:[%s7 + $0x698] sm:$0xff]
        %v1646 = vld [vmem:[%s7 + $0x6a0] sm:$0xff]
        %v1647 = vld [vmem:[%s7 + $0x6a8] sm:$0xff]
        %v1648 = vld [vmem:[%s7 + $0x6b0] sm:$0xff]
        %v1649 = vld [vmem:[%s7 + $0x6b8] sm:$0xff]
        %v1650 = vld [vmem:[%s7 + $0x6c0] sm:$0xff]
        %v1651 = vld [vmem:[%s7 + $0x6c8] sm:$0xf]
        %v1652 = vld [vmem:[%s7 + $0x6cc] sm:$0xff]
        %v1653 = vld [vmem:[%s7 + $0x6d4] sm:$0xff]
        %v1654 = vld [vmem:[%s7 + $0x6dc] sm:$0xff]
        %v1655 = vld [vmem:[%s7 + $0x6e4] sm:$0xff]
        %v1656 = vld [vmem:[%s7 + $0x6ec] sm:$0xff]
        %v1657 = vld [vmem:[%s7 + $0x6f4] sm:$0xff]
        %v1658 = vld [vmem:[%s7 + $0x6fc] sm:$0xff]
        %v1659 = vld [vmem:[%s7 + $0x704] sm:$0xf]
        %v1660 = vld [vmem:[%s7 + $0x708] sm:$0xff]
        %v1661 = vld [vmem:[%s7 + $0x710] sm:$0xff]
        %v1662 = vld [vmem:[%s7 + $0x718] sm:$0xff]
        %v1663 = vld [vmem:[%s7 + $0x720] sm:$0xff]
        %v1664 = vld [vmem:[%s7 + $0x728] sm:$0xff]
        %v1665 = vld [vmem:[%s7 + $0x730] sm:$0xff]
        %v1666 = vld [vmem:[%s7 + $0x738] sm:$0xff]
        %v1667 = vld [vmem:[%s7 + $0x740] sm:$0xf]
        %v1668 = vld [vmem:[%s7 + $0x744] sm:$0xff]
        %v1669 = vld [vmem:[%s7 + $0x74c] sm:$0xff]
        %v1670 = vld [vmem:[%s7 + $0x754] sm:$0xff]
        %v1671 = vld [vmem:[%s7 + $0x75c] sm:$0xff]
        %v1672 = vld [vmem:[%s7 + $0x764] sm:$0xff]
        %v1673 = vld [vmem:[%s7 + $0x76c] sm:$0xff]
        %v1674 = vld [vmem:[%s7 + $0x774] sm:$0xff]
        %v1675 = vld [vmem:[%s7 + $0x77c] sm:$0xf]
        %v1676 = vld [vmem:[%s7 + $0x780] sm:$0xff]
        %v1677 = vld [vmem:[%s7 + $0x788] sm:$0xff]
        %v1678 = vld [vmem:[%s7 + $0x790] sm:$0xff]
        %v1679 = vld [vmem:[%s7 + $0x798] sm:$0xff]
        %v1680 = vld [vmem:[%s7 + $0x7a0] sm:$0xff]
        %v1681 = vld [vmem:[%s7 + $0x7a8] sm:$0xff]
        %v1682 = vld [vmem:[%s7 + $0x7b0] sm:$0xff]
        %v1683 = vld [vmem:[%s7 + $0x7b8] sm:$0xf]
        %v1684 = vld [vmem:[%s7 + $0x7bc] sm:$0xff]
        %v1685 = vld [vmem:[%s7 + $0x7c4] sm:$0xff]
        %v1686 = vld [vmem:[%s7 + $0x7cc] sm:$0xff]
        %v1687 = vld [vmem:[%s7 + $0x7d4] sm:$0xff]
        %v1688 = vld [vmem:[%s7 + $0x7dc] sm:$0xff]
        %v1689 = vld [vmem:[%s7 + $0x7e4] sm:$0xff]
        %v1690 = vld [vmem:[%s7 + $0x7ec] sm:$0xff]
        %v1691 = vld [vmem:[%s7 + $0x7f4] sm:$0xf]
        %v1692 = vld [vmem:[%s7 + $0x7f8] sm:$0xff]
        %v1693 = vld [vmem:[%s7 + $0x800] sm:$0xff]
        %v1694 = vld [vmem:[%s7 + $0x808] sm:$0xff]
        %v1695 = vld [vmem:[%s7 + $0x810] sm:$0xff]
        %v1696 = vld [vmem:[%s7 + $0x818] sm:$0xff]
        %v1697 = vld [vmem:[%s7 + $0x820] sm:$0xff]
        %v1698 = vld [vmem:[%s7 + $0x828] sm:$0xff]
        %v1699 = vld [vmem:[%s7 + $0x830] sm:$0xf]
        %v1700 = vld [vmem:[%s7 + $0x834] sm:$0xff]
        %v1701 = vld [vmem:[%s7 + $0x83c] sm:$0xff]
        %v1702 = vld [vmem:[%s7 + $0x844] sm:$0xff]
        %v1703 = vld [vmem:[%s7 + $0x84c] sm:$0xff]
        %v1704 = vld [vmem:[%s7 + $0x854] sm:$0xff]
        %v1705 = vld [vmem:[%s7 + $0x85c] sm:$0xff]
        %v1706 = vld [vmem:[%s7 + $0x864] sm:$0xff]
        %v1707 = vld [vmem:[%s7 + $0x86c] sm:$0xf]
        %v1708 = vld [vmem:[%s7 + $0x870] sm:$0xff]
        %v1709 = vld [vmem:[%s7 + $0x878] sm:$0xff]
        %v1710 = vld [vmem:[%s7 + $0x880] sm:$0xff]
        %v1711 = vld [vmem:[%s7 + $0x888] sm:$0xff]
        %v1712 = vld [vmem:[%s7 + $0x890] sm:$0xff]
        %v1713 = vld [vmem:[%s7 + $0x898] sm:$0xff]
        %v1714 = vld [vmem:[%s7 + $0x8a0] sm:$0xff]
        %v1715 = vld [vmem:[%s7 + $0x8a8] sm:$0xf]
        %v1716 = vld [vmem:[%s7 + $0x8ac] sm:$0xff]
        %v1717 = vld [vmem:[%s7 + $0x8b4] sm:$0xff]
        %v1718 = vld [vmem:[%s7 + $0x8bc] sm:$0xff]
        %v1719 = vld [vmem:[%s7 + $0x8c4] sm:$0xff]
        %v1720 = vld [vmem:[%s7 + $0x8cc] sm:$0xff]
        %v1721 = vld [vmem:[%s7 + $0x8d4] sm:$0xff]
        %v1722 = vld [vmem:[%s7 + $0x8dc] sm:$0xff]
        %v1723 = vld [vmem:[%s7 + $0x8e4] sm:$0xf]
        %v1724 = vld [vmem:[%s7 + $0x8e8] sm:$0xff]
        %v1725 = vld [vmem:[%s7 + $0x8f0] sm:$0xff]
        %v1726 = vld [vmem:[%s7 + $0x8f8] sm:$0xff]
        %v1727 = vld [vmem:[%s7 + $0x900] sm:$0xff]
        %v1728 = vld [vmem:[%s7 + $0x908] sm:$0xff]
        %v1729 = vld [vmem:[%s7 + $0x910] sm:$0xff]
        %v1730 = vld [vmem:[%s7 + $0x918] sm:$0xff]
        %v1731 = vld [vmem:[%s7 + $0x920] sm:$0xf]
        %v1732 = vld [vmem:[%s7 + $0x924] sm:$0xff]
        %v1733 = vld [vmem:[%s7 + $0x92c] sm:$0xff]
        %v1734 = vld [vmem:[%s7 + $0x934] sm:$0xff]
        %v1735 = vld [vmem:[%s7 + $0x93c] sm:$0xff]
        %v1736 = vld [vmem:[%s7 + $0x944] sm:$0xff]
        %v1737 = vld [vmem:[%s7 + $0x94c] sm:$0xff]
        %v1738 = vld [vmem:[%s7 + $0x954] sm:$0xff]
        %v1739 = vld [vmem:[%s7 + $0x95c] sm:$0xf]
        %v1740 = vld [vmem:[%s7 + $0x960] sm:$0xff]
        %v1741 = vld [vmem:[%s7 + $0x968] sm:$0xff]
        %v1742 = vld [vmem:[%s7 + $0x970] sm:$0xff]
        %v1743 = vld [vmem:[%s7 + $0x978] sm:$0xff]
        %v1744 = vld [vmem:[%s7 + $0x980] sm:$0xff]
        %v1745 = vld [vmem:[%s7 + $0x988] sm:$0xff]
        %v1746 = vld [vmem:[%s7 + $0x990] sm:$0xff]
        %v1747 = vld [vmem:[%s7 + $0x998] sm:$0xf]
        %v1748 = vld [vmem:[%s7 + $0x99c] sm:$0xff]
        %v1749 = vld [vmem:[%s7 + $0x9a4] sm:$0xff]
        %v1750 = vld [vmem:[%s7 + $0x9ac] sm:$0xff]
        %v1751 = vld [vmem:[%s7 + $0x9b4] sm:$0xff]
        %v1752 = vld [vmem:[%s7 + $0x9bc] sm:$0xff]
        %v1753 = vld [vmem:[%s7 + $0x9c4] sm:$0xff]
        %v1754 = vld [vmem:[%s7 + $0x9cc] sm:$0xff]
        %v1755 = vld [vmem:[%s7 + $0x9d4] sm:$0xf]
        %v1756 = vld [vmem:[%s7 + $0x9d8] sm:$0xff]
        %v1757 = vld [vmem:[%s7 + $0x9e0] sm:$0xff]
        %v1758 = vld [vmem:[%s7 + $0x9e8] sm:$0xff]
        %v1759 = vld [vmem:[%s7 + $0x9f0] sm:$0xff]
        %v1760 = vld [vmem:[%s7 + $0x9f8] sm:$0xff]
        %v1761 = vld [vmem:[%s7 + $0xa00] sm:$0xff]
        %v1762 = vld [vmem:[%s7 + $0xa08] sm:$0xff]
        %v1763 = vld [vmem:[%s7 + $0xa10] sm:$0xf]
        %v1764 = vld [vmem:[%s7 + $0xa14] sm:$0xff]
        %v1765 = vld [vmem:[%s7 + $0xa1c] sm:$0xff]
        %v1766 = vld [vmem:[%s7 + $0xa24] sm:$0xff]
        %v1767 = vld [vmem:[%s7 + $0xa2c] sm:$0xff]
        %v1768 = vld [vmem:[%s7 + $0xa34] sm:$0xff]
        %v1769 = vld [vmem:[%s7 + $0xa3c] sm:$0xff]
        %v1770 = vld [vmem:[%s7 + $0xa44] sm:$0xff]
        %v1771 = vld [vmem:[%s7 + $0xa4c] sm:$0xf]
        %v1772 = vld [vmem:[%s7 + $0xa50] sm:$0xff]
        %v1773 = vld [vmem:[%s7 + $0xa58] sm:$0xff]
        %v1774 = vld [vmem:[%s7 + $0xa60] sm:$0xff]
        %v1775 = vld [vmem:[%s7 + $0xa68] sm:$0xff]
        %v1776 = vld [vmem:[%s7 + $0xa70] sm:$0xff]
        %v1777 = vld [vmem:[%s7 + $0xa78] sm:$0xff]
        %v1778 = vld [vmem:[%s7 + $0xa80] sm:$0xff]
        %v1779 = vld [vmem:[%s7 + $0xa88] sm:$0xf]
        %v1780 = vld [vmem:[%s7 + $0xa8c] sm:$0xff]
        %v1781 = vld [vmem:[%s7 + $0xa94] sm:$0xff]
        %v1782 = vld [vmem:[%s7 + $0xa9c] sm:$0xff]
        %v1783 = vld [vmem:[%s7 + $0xaa4] sm:$0xff]
        %v1784 = vld [vmem:[%s7 + $0xaac] sm:$0xff]
        %v1785 = vld [vmem:[%s7 + $0xab4] sm:$0xff]
        %v1786 = vld [vmem:[%s7 + $0xabc] sm:$0xff]
        %v1787 = vld [vmem:[%s7 + $0xac4] sm:$0xf]
        %v1788 = vld [vmem:[%s7 + $0xac8] sm:$0xff]
        %v1789 = vld [vmem:[%s7 + $0xad0] sm:$0xff]
        %v1790 = vld [vmem:[%s7 + $0xad8] sm:$0xff]
        %v1791 = vld [vmem:[%s7 + $0xae0] sm:$0xff]
        %v1792 = vld [vmem:[%s7 + $0xae8] sm:$0xff]
        %v1793 = vld [vmem:[%s7 + $0xaf0] sm:$0xff]
        %v1794 = vld [vmem:[%s7 + $0xaf8] sm:$0xff]
        %v1795 = vld [vmem:[%s7 + $0xb00] sm:$0xf]
        %v1796 = vld [vmem:[%s7 + $0xb04] sm:$0xff]
        %v1797 = vld [vmem:[%s7 + $0xb0c] sm:$0xff]
        %v1798 = vld [vmem:[%s7 + $0xb14] sm:$0xff]
        %v1799 = vld [vmem:[%s7 + $0xb1c] sm:$0xff]
        %v1800 = vld [vmem:[%s7 + $0xb24] sm:$0xff]
        %v1801 = vld [vmem:[%s7 + $0xb2c] sm:$0xff]
        %v1802 = vld [vmem:[%s7 + $0xb34] sm:$0xff]
        %v1803 = vld [vmem:[%s7 + $0xb3c] sm:$0xf]
        %v1804 = vld [vmem:[%s7 + $0xb40] sm:$0xff]
        %v1805 = vld [vmem:[%s7 + $0xb48] sm:$0xff]
        %v1806 = vld [vmem:[%s7 + $0xb50] sm:$0xff]
        %v1807 = vld [vmem:[%s7 + $0xb58] sm:$0xff]
        %v1808 = vld [vmem:[%s7 + $0xb60] sm:$0xff]
        %v1809 = vld [vmem:[%s7 + $0xb68] sm:$0xff]
        %v1810 = vld [vmem:[%s7 + $0xb70] sm:$0xff]
        %v1811 = vld [vmem:[%s7 + $0xb78] sm:$0xf]
        %v1812 = vld [vmem:[%s7 + $0xb7c] sm:$0xff]
        %v1813 = vld [vmem:[%s7 + $0xb84] sm:$0xff]
        %v1814 = vld [vmem:[%s7 + $0xb8c] sm:$0xff]
        %v1815 = vld [vmem:[%s7 + $0xb94] sm:$0xff]
        %v1816 = vld [vmem:[%s7 + $0xb9c] sm:$0xff]
        %v1817 = vld [vmem:[%s7 + $0xba4] sm:$0xff]
        %v1818 = vld [vmem:[%s7 + $0xbac] sm:$0xff]
        %v1819 = vld [vmem:[%s7 + $0xbb4] sm:$0xf]
        %v1820 = vld [vmem:[%s8] sm:$0xff]
        %v1821 = vld [vmem:[%s8 + $0x8] sm:$0x7f]
        %v1824 = vlaneseq
        %v1825 = vshrl.u32 %v1824, 7
        %v1826 = vsub.s32 0, %v1825
        %v1827 = vrot.slane %v1820, %v1826
        %v1828 = vlaneseq
        %v1829 = vshrl.u32 %v1828, 7
        %v1830 = vsub.s32 1, %v1829
        %v1831 = vrot.slane %v1820, %v1830
        %v1832 = vlaneseq
        %v1833 = vshrl.u32 %v1832, 7
        %v1834 = vsub.s32 2, %v1833
        %v1835 = vrot.slane %v1820, %v1834
        %v1836 = vlaneseq
        %v1837 = vshrl.u32 %v1836, 7
        %v1838 = vsub.s32 3, %v1837
        %v1839 = vrot.slane %v1820, %v1838
        %v1840 = vlaneseq
        %v1841 = vshrl.u32 %v1840, 7
        %v1842 = vsub.s32 4, %v1841
        %v1843 = vrot.slane %v1820, %v1842
        %v1844 = vlaneseq
        %v1845 = vshrl.u32 %v1844, 7
        %v1846 = vsub.s32 5, %v1845
        %v1847 = vrot.slane %v1820, %v1846
        %v1848 = vlaneseq
        %v1849 = vshrl.u32 %v1848, 7
        %v1850 = vsub.s32 6, %v1849
        %v1851 = vrot.slane %v1820, %v1850
        %v1852 = vlaneseq
        %v1853 = vshrl.u32 %v1852, 7
        %v1854 = vsub.s32 7, %v1853
        %v1855 = vrot.slane %v1820, %v1854
        %v1856 = vlaneseq
        %v1857 = vshrl.u32 %v1856, 7
        %v1858 = vsub.s32 0, %v1857
        %v1859 = vrot.slane %v1821, %v1858
        %v1860 = vlaneseq
        %v1861 = vshrl.u32 %v1860, 7
        %v1862 = vsub.s32 1, %v1861
        %v1863 = vrot.slane %v1821, %v1862
        %v1864 = vlaneseq
        %v1865 = vshrl.u32 %v1864, 7
        %v1866 = vsub.s32 2, %v1865
        %v1867 = vrot.slane %v1821, %v1866
        %v1868 = vlaneseq
        %v1869 = vshrl.u32 %v1868, 7
        %v1870 = vsub.s32 3, %v1869
        %v1871 = vrot.slane %v1821, %v1870
        %v1872 = vlaneseq
        %v1873 = vshrl.u32 %v1872, 7
        %v1874 = vsub.s32 4, %v1873
        %v1875 = vrot.slane %v1821, %v1874
        %v1876 = vlaneseq
        %v1877 = vshrl.u32 %v1876, 7
        %v1878 = vsub.s32 5, %v1877
        %v1879 = vrot.slane %v1821, %v1878
        %v1880 = vlaneseq
        %v1881 = vshrl.u32 %v1880, 7
        %v1882 = vsub.s32 6, %v1881
        %v1883 = vrot.slane %v1821, %v1882
        %v2299 = vunpack.c.l.b16 %v1420
        %v2300 = vunpack.c.h.b16 %v1420
        %v2301 = vunpack.c.l.b16 %v1421
        %v2302 = vunpack.c.h.b16 %v1421
        %v2303 = vunpack.c.l.b16 %v1422
        %v2304 = vunpack.c.h.b16 %v1422
        %v2305 = vunpack.c.l.b16 %v1423
        %v2306 = vunpack.c.h.b16 %v1423
        %v2307 = vunpack.c.l.b16 %v1424
        %v2308 = vunpack.c.h.b16 %v1424
        %v2309 = vunpack.c.l.b16 %v1425
        %v2310 = vunpack.c.h.b16 %v1425
        %v2311 = vunpack.c.l.b16 %v1426
        %v2312 = vunpack.c.h.b16 %v1426
        %v2313 = vunpack.c.l.b16 %v1427
        %v2314 = vunpack.c.l.b16 %v1428
        %v2315 = vunpack.c.h.b16 %v1428
        %v2316 = vunpack.c.l.b16 %v1429
        %v2317 = vunpack.c.h.b16 %v1429
        %v2318 = vunpack.c.l.b16 %v1430
        %v2319 = vunpack.c.h.b16 %v1430
        %v2320 = vunpack.c.l.b16 %v1431
        %v2321 = vunpack.c.h.b16 %v1431
        %v2322 = vunpack.c.l.b16 %v1432
        %v2323 = vunpack.c.h.b16 %v1432
        %v2324 = vunpack.c.l.b16 %v1433
        %v2325 = vunpack.c.h.b16 %v1433
        %v2326 = vunpack.c.l.b16 %v1434
        %v2327 = vunpack.c.h.b16 %v1434
        %v2328 = vunpack.c.l.b16 %v1435
        %v2329 = vunpack.c.l.b16 %v1436
        %v2330 = vunpack.c.h.b16 %v1436
        %v2331 = vunpack.c.l.b16 %v1437
        %v2332 = vunpack.c.h.b16 %v1437
        %v2333 = vunpack.c.l.b16 %v1438
        %v2334 = vunpack.c.h.b16 %v1438
        %v2335 = vunpack.c.l.b16 %v1439
        %v2336 = vunpack.c.h.b16 %v1439
        %v2337 = vunpack.c.l.b16 %v1440
        %v2338 = vunpack.c.h.b16 %v1440
        %v2339 = vunpack.c.l.b16 %v1441
        %v2340 = vunpack.c.h.b16 %v1441
        %v2341 = vunpack.c.l.b16 %v1442
        %v2342 = vunpack.c.h.b16 %v1442
        %v2343 = vunpack.c.l.b16 %v1443
        %v2344 = vunpack.c.l.b16 %v1444
        %v2345 = vunpack.c.h.b16 %v1444
        %v2346 = vunpack.c.l.b16 %v1445
        %v2347 = vunpack.c.h.b16 %v1445
        %v2348 = vunpack.c.l.b16 %v1446
        %v2349 = vunpack.c.h.b16 %v1446
        %v2350 = vunpack.c.l.b16 %v1447
        %v2351 = vunpack.c.h.b16 %v1447
        %v2352 = vunpack.c.l.b16 %v1448
        %v2353 = vunpack.c.h.b16 %v1448
        %v2354 = vunpack.c.l.b16 %v1449
        %v2355 = vunpack.c.h.b16 %v1449
        %v2356 = vunpack.c.l.b16 %v1450
        %v2357 = vunpack.c.h.b16 %v1450
        %v2358 = vunpack.c.l.b16 %v1451
        %v2359 = vunpack.c.l.b16 %v1452
        %v2360 = vunpack.c.h.b16 %v1452
        %v2361 = vunpack.c.l.b16 %v1453
        %v2362 = vunpack.c.h.b16 %v1453
        %v2363 = vunpack.c.l.b16 %v1454
        %v2364 = vunpack.c.h.b16 %v1454
        %v2365 = vunpack.c.l.b16 %v1455
        %v2366 = vunpack.c.h.b16 %v1455
        %v2367 = vunpack.c.l.b16 %v1456
        %v2368 = vunpack.c.h.b16 %v1456
        %v2369 = vunpack.c.l.b16 %v1457
        %v2370 = vunpack.c.h.b16 %v1457
        %v2371 = vunpack.c.l.b16 %v1458
        %v2372 = vunpack.c.h.b16 %v1458
        %v2373 = vunpack.c.l.b16 %v1459
        %v2374 = vunpack.c.l.b16 %v1460
        %v2375 = vunpack.c.h.b16 %v1460
        %v2376 = vunpack.c.l.b16 %v1461
        %v2377 = vunpack.c.h.b16 %v1461
        %v2378 = vunpack.c.l.b16 %v1462
        %v2379 = vunpack.c.h.b16 %v1462
        %v2380 = vunpack.c.l.b16 %v1463
        %v2381 = vunpack.c.h.b16 %v1463
        %v2382 = vunpack.c.l.b16 %v1464
        %v2383 = vunpack.c.h.b16 %v1464
        %v2384 = vunpack.c.l.b16 %v1465
        %v2385 = vunpack.c.h.b16 %v1465
        %v2386 = vunpack.c.l.b16 %v1466
        %v2387 = vunpack.c.h.b16 %v1466
        %v2388 = vunpack.c.l.b16 %v1467
        %v2389 = vunpack.c.l.b16 %v1468
        %v2390 = vunpack.c.h.b16 %v1468
        %v2391 = vunpack.c.l.b16 %v1469
        %v2392 = vunpack.c.h.b16 %v1469
        %v2393 = vunpack.c.l.b16 %v1470
        %v2394 = vunpack.c.h.b16 %v1470
        %v2395 = vunpack.c.l.b16 %v1471
        %v2396 = vunpack.c.h.b16 %v1471
        %v2397 = vunpack.c.l.b16 %v1472
        %v2398 = vunpack.c.h.b16 %v1472
        %v2399 = vunpack.c.l.b16 %v1473
        %v2400 = vunpack.c.h.b16 %v1473
        %v2401 = vunpack.c.l.b16 %v1474
        %v2402 = vunpack.c.h.b16 %v1474
        %v2403 = vunpack.c.l.b16 %v1475
        %v2404 = vunpack.c.l.b16 %v1476
        %v2405 = vunpack.c.h.b16 %v1476
        %v2406 = vunpack.c.l.b16 %v1477
        %v2407 = vunpack.c.h.b16 %v1477
        %v2408 = vunpack.c.l.b16 %v1478
        %v2409 = vunpack.c.h.b16 %v1478
        %v2410 = vunpack.c.l.b16 %v1479
        %v2411 = vunpack.c.h.b16 %v1479
        %v2412 = vunpack.c.l.b16 %v1480
        %v2413 = vunpack.c.h.b16 %v1480
        %v2414 = vunpack.c.l.b16 %v1481
        %v2415 = vunpack.c.h.b16 %v1481
        %v2416 = vunpack.c.l.b16 %v1482
        %v2417 = vunpack.c.h.b16 %v1482
        %v2418 = vunpack.c.l.b16 %v1483
        %v2419 = vunpack.c.l.b16 %v1484
        %v2420 = vunpack.c.h.b16 %v1484
        %v2421 = vunpack.c.l.b16 %v1485
        %v2422 = vunpack.c.h.b16 %v1485
        %v2423 = vunpack.c.l.b16 %v1486
        %v2424 = vunpack.c.h.b16 %v1486
        %v2425 = vunpack.c.l.b16 %v1487
        %v2426 = vunpack.c.h.b16 %v1487
        %v2427 = vunpack.c.l.b16 %v1488
        %v2428 = vunpack.c.h.b16 %v1488
        %v2429 = vunpack.c.l.b16 %v1489
        %v2430 = vunpack.c.h.b16 %v1489
        %v2431 = vunpack.c.l.b16 %v1490
        %v2432 = vunpack.c.h.b16 %v1490
        %v2433 = vunpack.c.l.b16 %v1491
        %v2434 = vunpack.c.l.b16 %v1492
        %v2435 = vunpack.c.h.b16 %v1492
        %v2436 = vunpack.c.l.b16 %v1493
        %v2437 = vunpack.c.h.b16 %v1493
        %v2438 = vunpack.c.l.b16 %v1494
        %v2439 = vunpack.c.h.b16 %v1494
        %v2440 = vunpack.c.l.b16 %v1495
        %v2441 = vunpack.c.h.b16 %v1495
        %v2442 = vunpack.c.l.b16 %v1496
        %v2443 = vunpack.c.h.b16 %v1496
        %v2444 = vunpack.c.l.b16 %v1497
        %v2445 = vunpack.c.h.b16 %v1497
        %v2446 = vunpack.c.l.b16 %v1498
        %v2447 = vunpack.c.h.b16 %v1498
        %v2448 = vunpack.c.l.b16 %v1499
        %v2449 = vunpack.c.l.b16 %v1500
        %v2450 = vunpack.c.h.b16 %v1500
        %v2451 = vunpack.c.l.b16 %v1501
        %v2452 = vunpack.c.h.b16 %v1501
        %v2453 = vunpack.c.l.b16 %v1502
        %v2454 = vunpack.c.h.b16 %v1502
        %v2455 = vunpack.c.l.b16 %v1503
        %v2456 = vunpack.c.h.b16 %v1503
        %v2457 = vunpack.c.l.b16 %v1504
        %v2458 = vunpack.c.h.b16 %v1504
        %v2459 = vunpack.c.l.b16 %v1505
        %v2460 = vunpack.c.h.b16 %v1505
        %v2461 = vunpack.c.l.b16 %v1506
        %v2462 = vunpack.c.h.b16 %v1506
        %v2463 = vunpack.c.l.b16 %v1507
        %v2464 = vunpack.c.l.b16 %v1508
        %v2465 = vunpack.c.h.b16 %v1508
        %v2466 = vunpack.c.l.b16 %v1509
        %v2467 = vunpack.c.h.b16 %v1509
        %v2468 = vunpack.c.l.b16 %v1510
        %v2469 = vunpack.c.h.b16 %v1510
        %v2470 = vunpack.c.l.b16 %v1511
        %v2471 = vunpack.c.h.b16 %v1511
        %v2472 = vunpack.c.l.b16 %v1512
        %v2473 = vunpack.c.h.b16 %v1512
        %v2474 = vunpack.c.l.b16 %v1513
        %v2475 = vunpack.c.h.b16 %v1513
        %v2476 = vunpack.c.l.b16 %v1514
        %v2477 = vunpack.c.h.b16 %v1514
        %v2478 = vunpack.c.l.b16 %v1515
        %v2479 = vunpack.c.l.b16 %v1516
        %v2480 = vunpack.c.h.b16 %v1516
        %v2481 = vunpack.c.l.b16 %v1517
        %v2482 = vunpack.c.h.b16 %v1517
        %v2483 = vunpack.c.l.b16 %v1518
        %v2484 = vunpack.c.h.b16 %v1518
        %v2485 = vunpack.c.l.b16 %v1519
        %v2486 = vunpack.c.h.b16 %v1519
        %v2487 = vunpack.c.l.b16 %v1520
        %v2488 = vunpack.c.h.b16 %v1520
        %v2489 = vunpack.c.l.b16 %v1521
        %v2490 = vunpack.c.h.b16 %v1521
        %v2491 = vunpack.c.l.b16 %v1522
        %v2492 = vunpack.c.h.b16 %v1522
        %v2493 = vunpack.c.l.b16 %v1523
        %v2494 = vunpack.c.l.b16 %v1524
        %v2495 = vunpack.c.h.b16 %v1524
        %v2496 = vunpack.c.l.b16 %v1525
        %v2497 = vunpack.c.h.b16 %v1525
        %v2498 = vunpack.c.l.b16 %v1526
        %v2499 = vunpack.c.h.b16 %v1526
        %v2500 = vunpack.c.l.b16 %v1527
        %v2501 = vunpack.c.h.b16 %v1527
        %v2502 = vunpack.c.l.b16 %v1528
        %v2503 = vunpack.c.h.b16 %v1528
        %v2504 = vunpack.c.l.b16 %v1529
        %v2505 = vunpack.c.h.b16 %v1529
        %v2506 = vunpack.c.l.b16 %v1530
        %v2507 = vunpack.c.h.b16 %v1530
        %v2508 = vunpack.c.l.b16 %v1531
        %v2509 = vunpack.c.l.b16 %v1532
        %v2510 = vunpack.c.h.b16 %v1532
        %v2511 = vunpack.c.l.b16 %v1533
        %v2512 = vunpack.c.h.b16 %v1533
        %v2513 = vunpack.c.l.b16 %v1534
        %v2514 = vunpack.c.h.b16 %v1534
        %v2515 = vunpack.c.l.b16 %v1535
        %v2516 = vunpack.c.h.b16 %v1535
        %v2517 = vunpack.c.l.b16 %v1536
        %v2518 = vunpack.c.h.b16 %v1536
        %v2519 = vunpack.c.l.b16 %v1537
        %v2520 = vunpack.c.h.b16 %v1537
        %v2521 = vunpack.c.l.b16 %v1538
        %v2522 = vunpack.c.h.b16 %v1538
        %v2523 = vunpack.c.l.b16 %v1539
        %v2524 = vunpack.c.l.b16 %v1540
        %v2525 = vunpack.c.h.b16 %v1540
        %v2526 = vunpack.c.l.b16 %v1541
        %v2527 = vunpack.c.h.b16 %v1541
        %v2528 = vunpack.c.l.b16 %v1542
        %v2529 = vunpack.c.h.b16 %v1542
        %v2530 = vunpack.c.l.b16 %v1543
        %v2531 = vunpack.c.h.b16 %v1543
        %v2532 = vunpack.c.l.b16 %v1544
        %v2533 = vunpack.c.h.b16 %v1544
        %v2534 = vunpack.c.l.b16 %v1545
        %v2535 = vunpack.c.h.b16 %v1545
        %v2536 = vunpack.c.l.b16 %v1546
        %v2537 = vunpack.c.h.b16 %v1546
        %v2538 = vunpack.c.l.b16 %v1547
        %v2539 = vunpack.c.l.b16 %v1548
        %v2540 = vunpack.c.h.b16 %v1548
        %v2541 = vunpack.c.l.b16 %v1549
        %v2542 = vunpack.c.h.b16 %v1549
        %v2543 = vunpack.c.l.b16 %v1550
        %v2544 = vunpack.c.h.b16 %v1550
        %v2545 = vunpack.c.l.b16 %v1551
        %v2546 = vunpack.c.h.b16 %v1551
        %v2547 = vunpack.c.l.b16 %v1552
        %v2548 = vunpack.c.h.b16 %v1552
        %v2549 = vunpack.c.l.b16 %v1553
        %v2550 = vunpack.c.h.b16 %v1553
        %v2551 = vunpack.c.l.b16 %v1554
        %v2552 = vunpack.c.h.b16 %v1554
        %v2553 = vunpack.c.l.b16 %v1555
        %v2554 = vunpack.c.l.b16 %v1556
        %v2555 = vunpack.c.h.b16 %v1556
        %v2556 = vunpack.c.l.b16 %v1557
        %v2557 = vunpack.c.h.b16 %v1557
        %v2558 = vunpack.c.l.b16 %v1558
        %v2559 = vunpack.c.h.b16 %v1558
        %v2560 = vunpack.c.l.b16 %v1559
        %v2561 = vunpack.c.h.b16 %v1559
        %v2562 = vunpack.c.l.b16 %v1560
        %v2563 = vunpack.c.h.b16 %v1560
        %v2564 = vunpack.c.l.b16 %v1561
        %v2565 = vunpack.c.h.b16 %v1561
        %v2566 = vunpack.c.l.b16 %v1562
        %v2567 = vunpack.c.h.b16 %v1562
        %v2568 = vunpack.c.l.b16 %v1563
        %v2569 = vunpack.c.l.b16 %v1564
        %v2570 = vunpack.c.h.b16 %v1564
        %v2571 = vunpack.c.l.b16 %v1565
        %v2572 = vunpack.c.h.b16 %v1565
        %v2573 = vunpack.c.l.b16 %v1566
        %v2574 = vunpack.c.h.b16 %v1566
        %v2575 = vunpack.c.l.b16 %v1567
        %v2576 = vunpack.c.h.b16 %v1567
        %v2577 = vunpack.c.l.b16 %v1568
        %v2578 = vunpack.c.h.b16 %v1568
        %v2579 = vunpack.c.l.b16 %v1569
        %v2580 = vunpack.c.h.b16 %v1569
        %v2581 = vunpack.c.l.b16 %v1570
        %v2582 = vunpack.c.h.b16 %v1570
        %v2583 = vunpack.c.l.b16 %v1571
        %v2584 = vunpack.c.l.b16 %v1572
        %v2585 = vunpack.c.h.b16 %v1572
        %v2586 = vunpack.c.l.b16 %v1573
        %v2587 = vunpack.c.h.b16 %v1573
        %v2588 = vunpack.c.l.b16 %v1574
        %v2589 = vunpack.c.h.b16 %v1574
        %v2590 = vunpack.c.l.b16 %v1575
        %v2591 = vunpack.c.h.b16 %v1575
        %v2592 = vunpack.c.l.b16 %v1576
        %v2593 = vunpack.c.h.b16 %v1576
        %v2594 = vunpack.c.l.b16 %v1577
        %v2595 = vunpack.c.h.b16 %v1577
        %v2596 = vunpack.c.l.b16 %v1578
        %v2597 = vunpack.c.h.b16 %v1578
        %v2598 = vunpack.c.l.b16 %v1579
        %v2599 = vunpack.c.l.b16 %v1580
        %v2600 = vunpack.c.h.b16 %v1580
        %v2601 = vunpack.c.l.b16 %v1581
        %v2602 = vunpack.c.h.b16 %v1581
        %v2603 = vunpack.c.l.b16 %v1582
        %v2604 = vunpack.c.h.b16 %v1582
        %v2605 = vunpack.c.l.b16 %v1583
        %v2606 = vunpack.c.h.b16 %v1583
        %v2607 = vunpack.c.l.b16 %v1584
        %v2608 = vunpack.c.h.b16 %v1584
        %v2609 = vunpack.c.l.b16 %v1585
        %v2610 = vunpack.c.h.b16 %v1585
        %v2611 = vunpack.c.l.b16 %v1586
        %v2612 = vunpack.c.h.b16 %v1586
        %v2613 = vunpack.c.l.b16 %v1587
        %v2614 = vunpack.c.l.b16 %v1588
        %v2615 = vunpack.c.h.b16 %v1588
        %v2616 = vunpack.c.l.b16 %v1589
        %v2617 = vunpack.c.h.b16 %v1589
        %v2618 = vunpack.c.l.b16 %v1590
        %v2619 = vunpack.c.h.b16 %v1590
        %v2620 = vunpack.c.l.b16 %v1591
        %v2621 = vunpack.c.h.b16 %v1591
        %v2622 = vunpack.c.l.b16 %v1592
        %v2623 = vunpack.c.h.b16 %v1592
        %v2624 = vunpack.c.l.b16 %v1593
        %v2625 = vunpack.c.h.b16 %v1593
        %v2626 = vunpack.c.l.b16 %v1594
        %v2627 = vunpack.c.h.b16 %v1594
        %v2628 = vunpack.c.l.b16 %v1595
        %v2629 = vunpack.c.l.b16 %v1596
        %v2630 = vunpack.c.h.b16 %v1596
        %v2631 = vunpack.c.l.b16 %v1597
        %v2632 = vunpack.c.h.b16 %v1597
        %v2633 = vunpack.c.l.b16 %v1598
        %v2634 = vunpack.c.h.b16 %v1598
        %v2635 = vunpack.c.l.b16 %v1599
        %v2636 = vunpack.c.h.b16 %v1599
        %v2637 = vunpack.c.l.b16 %v1600
        %v2638 = vunpack.c.h.b16 %v1600
        %v2639 = vunpack.c.l.b16 %v1601
        %v2640 = vunpack.c.h.b16 %v1601
        %v2641 = vunpack.c.l.b16 %v1602
        %v2642 = vunpack.c.h.b16 %v1602
        %v2643 = vunpack.c.l.b16 %v1603
        %v2644 = vunpack.c.l.b16 %v1604
        %v2645 = vunpack.c.h.b16 %v1604
        %v2646 = vunpack.c.l.b16 %v1605
        %v2647 = vunpack.c.h.b16 %v1605
        %v2648 = vunpack.c.l.b16 %v1606
        %v2649 = vunpack.c.h.b16 %v1606
        %v2650 = vunpack.c.l.b16 %v1607
        %v2651 = vunpack.c.h.b16 %v1607
        %v2652 = vunpack.c.l.b16 %v1608
        %v2653 = vunpack.c.h.b16 %v1608
        %v2654 = vunpack.c.l.b16 %v1609
        %v2655 = vunpack.c.h.b16 %v1609
        %v2656 = vunpack.c.l.b16 %v1610
        %v2657 = vunpack.c.h.b16 %v1610
        %v2658 = vunpack.c.l.b16 %v1611
        %v2659 = vunpack.c.l.b16 %v1612
        %v2660 = vunpack.c.h.b16 %v1612
        %v2661 = vunpack.c.l.b16 %v1613
        %v2662 = vunpack.c.h.b16 %v1613
        %v2663 = vunpack.c.l.b16 %v1614
        %v2664 = vunpack.c.h.b16 %v1614
        %v2665 = vunpack.c.l.b16 %v1615
        %v2666 = vunpack.c.h.b16 %v1615
        %v2667 = vunpack.c.l.b16 %v1616
        %v2668 = vunpack.c.h.b16 %v1616
        %v2669 = vunpack.c.l.b16 %v1617
        %v2670 = vunpack.c.h.b16 %v1617
        %v2671 = vunpack.c.l.b16 %v1618
        %v2672 = vunpack.c.h.b16 %v1618
        %v2673 = vunpack.c.l.b16 %v1619
        %v2674 = vunpack.c.l.b16 %v1620
        %v2675 = vunpack.c.h.b16 %v1620
        %v2676 = vunpack.c.l.b16 %v1621
        %v2677 = vunpack.c.h.b16 %v1621
        %v2678 = vunpack.c.l.b16 %v1622
        %v2679 = vunpack.c.h.b16 %v1622
        %v2680 = vunpack.c.l.b16 %v1623
        %v2681 = vunpack.c.h.b16 %v1623
        %v2682 = vunpack.c.l.b16 %v1624
        %v2683 = vunpack.c.h.b16 %v1624
        %v2684 = vunpack.c.l.b16 %v1625
        %v2685 = vunpack.c.h.b16 %v1625
        %v2686 = vunpack.c.l.b16 %v1626
        %v2687 = vunpack.c.h.b16 %v1626
        %v2688 = vunpack.c.l.b16 %v1627
        %v2689 = vunpack.c.l.b16 %v1628
        %v2690 = vunpack.c.h.b16 %v1628
        %v2691 = vunpack.c.l.b16 %v1629
        %v2692 = vunpack.c.h.b16 %v1629
        %v2693 = vunpack.c.l.b16 %v1630
        %v2694 = vunpack.c.h.b16 %v1630
        %v2695 = vunpack.c.l.b16 %v1631
        %v2696 = vunpack.c.h.b16 %v1631
        %v2697 = vunpack.c.l.b16 %v1632
        %v2698 = vunpack.c.h.b16 %v1632
        %v2699 = vunpack.c.l.b16 %v1633
        %v2700 = vunpack.c.h.b16 %v1633
        %v2701 = vunpack.c.l.b16 %v1634
        %v2702 = vunpack.c.h.b16 %v1634
        %v2703 = vunpack.c.l.b16 %v1635
        %v2704 = vunpack.c.l.b16 %v1636
        %v2705 = vunpack.c.h.b16 %v1636
        %v2706 = vunpack.c.l.b16 %v1637
        %v2707 = vunpack.c.h.b16 %v1637
        %v2708 = vunpack.c.l.b16 %v1638
        %v2709 = vunpack.c.h.b16 %v1638
        %v2710 = vunpack.c.l.b16 %v1639
        %v2711 = vunpack.c.h.b16 %v1639
        %v2712 = vunpack.c.l.b16 %v1640
        %v2713 = vunpack.c.h.b16 %v1640
        %v2714 = vunpack.c.l.b16 %v1641
        %v2715 = vunpack.c.h.b16 %v1641
        %v2716 = vunpack.c.l.b16 %v1642
        %v2717 = vunpack.c.h.b16 %v1642
        %v2718 = vunpack.c.l.b16 %v1643
        %v2719 = vunpack.c.l.b16 %v1644
        %v2720 = vunpack.c.h.b16 %v1644
        %v2721 = vunpack.c.l.b16 %v1645
        %v2722 = vunpack.c.h.b16 %v1645
        %v2723 = vunpack.c.l.b16 %v1646
        %v2724 = vunpack.c.h.b16 %v1646
        %v2725 = vunpack.c.l.b16 %v1647
        %v2726 = vunpack.c.h.b16 %v1647
        %v2727 = vunpack.c.l.b16 %v1648
        %v2728 = vunpack.c.h.b16 %v1648
        %v2729 = vunpack.c.l.b16 %v1649
        %v2730 = vunpack.c.h.b16 %v1649
        %v2731 = vunpack.c.l.b16 %v1650
        %v2732 = vunpack.c.h.b16 %v1650
        %v2733 = vunpack.c.l.b16 %v1651
        %v2734 = vunpack.c.l.b16 %v1652
        %v2735 = vunpack.c.h.b16 %v1652
        %v2736 = vunpack.c.l.b16 %v1653
        %v2737 = vunpack.c.h.b16 %v1653
        %v2738 = vunpack.c.l.b16 %v1654
        %v2739 = vunpack.c.h.b16 %v1654
        %v2740 = vunpack.c.l.b16 %v1655
        %v2741 = vunpack.c.h.b16 %v1655
        %v2742 = vunpack.c.l.b16 %v1656
        %v2743 = vunpack.c.h.b16 %v1656
        %v2744 = vunpack.c.l.b16 %v1657
        %v2745 = vunpack.c.h.b16 %v1657
        %v2746 = vunpack.c.l.b16 %v1658
        %v2747 = vunpack.c.h.b16 %v1658
        %v2748 = vunpack.c.l.b16 %v1659
        %v2749 = vunpack.c.l.b16 %v1660
        %v2750 = vunpack.c.h.b16 %v1660
        %v2751 = vunpack.c.l.b16 %v1661
        %v2752 = vunpack.c.h.b16 %v1661
        %v2753 = vunpack.c.l.b16 %v1662
        %v2754 = vunpack.c.h.b16 %v1662
        %v2755 = vunpack.c.l.b16 %v1663
        %v2756 = vunpack.c.h.b16 %v1663
        %v2757 = vunpack.c.l.b16 %v1664
        %v2758 = vunpack.c.h.b16 %v1664
        %v2759 = vunpack.c.l.b16 %v1665
        %v2760 = vunpack.c.h.b16 %v1665
        %v2761 = vunpack.c.l.b16 %v1666
        %v2762 = vunpack.c.h.b16 %v1666
        %v2763 = vunpack.c.l.b16 %v1667
        %v2764 = vunpack.c.l.b16 %v1668
        %v2765 = vunpack.c.h.b16 %v1668
        %v2766 = vunpack.c.l.b16 %v1669
        %v2767 = vunpack.c.h.b16 %v1669
        %v2768 = vunpack.c.l.b16 %v1670
        %v2769 = vunpack.c.h.b16 %v1670
        %v2770 = vunpack.c.l.b16 %v1671
        %v2771 = vunpack.c.h.b16 %v1671
        %v2772 = vunpack.c.l.b16 %v1672
        %v2773 = vunpack.c.h.b16 %v1672
        %v2774 = vunpack.c.l.b16 %v1673
        %v2775 = vunpack.c.h.b16 %v1673
        %v2776 = vunpack.c.l.b16 %v1674
        %v2777 = vunpack.c.h.b16 %v1674
        %v2778 = vunpack.c.l.b16 %v1675
        %v2779 = vunpack.c.l.b16 %v1676
        %v2780 = vunpack.c.h.b16 %v1676
        %v2781 = vunpack.c.l.b16 %v1677
        %v2782 = vunpack.c.h.b16 %v1677
        %v2783 = vunpack.c.l.b16 %v1678
        %v2784 = vunpack.c.h.b16 %v1678
        %v2785 = vunpack.c.l.b16 %v1679
        %v2786 = vunpack.c.h.b16 %v1679
        %v2787 = vunpack.c.l.b16 %v1680
        %v2788 = vunpack.c.h.b16 %v1680
        %v2789 = vunpack.c.l.b16 %v1681
        %v2790 = vunpack.c.h.b16 %v1681
        %v2791 = vunpack.c.l.b16 %v1682
        %v2792 = vunpack.c.h.b16 %v1682
        %v2793 = vunpack.c.l.b16 %v1683
        %v2794 = vunpack.c.l.b16 %v1684
        %v2795 = vunpack.c.h.b16 %v1684
        %v2796 = vunpack.c.l.b16 %v1685
        %v2797 = vunpack.c.h.b16 %v1685
        %v2798 = vunpack.c.l.b16 %v1686
        %v2799 = vunpack.c.h.b16 %v1686
        %v2800 = vunpack.c.l.b16 %v1687
        %v2801 = vunpack.c.h.b16 %v1687
        %v2802 = vunpack.c.l.b16 %v1688
        %v2803 = vunpack.c.h.b16 %v1688
        %v2804 = vunpack.c.l.b16 %v1689
        %v2805 = vunpack.c.h.b16 %v1689
        %v2806 = vunpack.c.l.b16 %v1690
        %v2807 = vunpack.c.h.b16 %v1690
        %v2808 = vunpack.c.l.b16 %v1691
        %v2809 = vunpack.c.l.b16 %v1692
        %v2810 = vunpack.c.h.b16 %v1692
        %v2811 = vunpack.c.l.b16 %v1693
        %v2812 = vunpack.c.h.b16 %v1693
        %v2813 = vunpack.c.l.b16 %v1694
        %v2814 = vunpack.c.h.b16 %v1694
        %v2815 = vunpack.c.l.b16 %v1695
        %v2816 = vunpack.c.h.b16 %v1695
        %v2817 = vunpack.c.l.b16 %v1696
        %v2818 = vunpack.c.h.b16 %v1696
        %v2819 = vunpack.c.l.b16 %v1697
        %v2820 = vunpack.c.h.b16 %v1697
        %v2821 = vunpack.c.l.b16 %v1698
        %v2822 = vunpack.c.h.b16 %v1698
        %v2823 = vunpack.c.l.b16 %v1699
        %v2824 = vunpack.c.l.b16 %v1700
        %v2825 = vunpack.c.h.b16 %v1700
        %v2826 = vunpack.c.l.b16 %v1701
        %v2827 = vunpack.c.h.b16 %v1701
        %v2828 = vunpack.c.l.b16 %v1702
        %v2829 = vunpack.c.h.b16 %v1702
        %v2830 = vunpack.c.l.b16 %v1703
        %v2831 = vunpack.c.h.b16 %v1703
        %v2832 = vunpack.c.l.b16 %v1704
        %v2833 = vunpack.c.h.b16 %v1704
        %v2834 = vunpack.c.l.b16 %v1705
        %v2835 = vunpack.c.h.b16 %v1705
        %v2836 = vunpack.c.l.b16 %v1706
        %v2837 = vunpack.c.h.b16 %v1706
        %v2838 = vunpack.c.l.b16 %v1707
        %v2839 = vunpack.c.l.b16 %v1708
        %v2840 = vunpack.c.h.b16 %v1708
        %v2841 = vunpack.c.l.b16 %v1709
        %v2842 = vunpack.c.h.b16 %v1709
        %v2843 = vunpack.c.l.b16 %v1710
        %v2844 = vunpack.c.h.b16 %v1710
        %v2845 = vunpack.c.l.b16 %v1711
        %v2846 = vunpack.c.h.b16 %v1711
        %v2847 = vunpack.c.l.b16 %v1712
        %v2848 = vunpack.c.h.b16 %v1712
        %v2849 = vunpack.c.l.b16 %v1713
        %v2850 = vunpack.c.h.b16 %v1713
        %v2851 = vunpack.c.l.b16 %v1714
        %v2852 = vunpack.c.h.b16 %v1714
        %v2853 = vunpack.c.l.b16 %v1715
        %v2854 = vunpack.c.l.b16 %v1716
        %v2855 = vunpack.c.h.b16 %v1716
        %v2856 = vunpack.c.l.b16 %v1717
        %v2857 = vunpack.c.h.b16 %v1717
        %v2858 = vunpack.c.l.b16 %v1718
        %v2859 = vunpack.c.h.b16 %v1718
        %v2860 = vunpack.c.l.b16 %v1719
        %v2861 = vunpack.c.h.b16 %v1719
        %v2862 = vunpack.c.l.b16 %v1720
        %v2863 = vunpack.c.h.b16 %v1720
        %v2864 = vunpack.c.l.b16 %v1721
        %v2865 = vunpack.c.h.b16 %v1721
        %v2866 = vunpack.c.l.b16 %v1722
        %v2867 = vunpack.c.h.b16 %v1722
        %v2868 = vunpack.c.l.b16 %v1723
        %v2869 = vunpack.c.l.b16 %v1724
        %v2870 = vunpack.c.h.b16 %v1724
        %v2871 = vunpack.c.l.b16 %v1725
        %v2872 = vunpack.c.h.b16 %v1725
        %v2873 = vunpack.c.l.b16 %v1726
        %v2874 = vunpack.c.h.b16 %v1726
        %v2875 = vunpack.c.l.b16 %v1727
        %v2876 = vunpack.c.h.b16 %v1727
        %v2877 = vunpack.c.l.b16 %v1728
        %v2878 = vunpack.c.h.b16 %v1728
        %v2879 = vunpack.c.l.b16 %v1729
        %v2880 = vunpack.c.h.b16 %v1729
        %v2881 = vunpack.c.l.b16 %v1730
        %v2882 = vunpack.c.h.b16 %v1730
        %v2883 = vunpack.c.l.b16 %v1731
        %v2884 = vunpack.c.l.b16 %v1732
        %v2885 = vunpack.c.h.b16 %v1732
        %v2886 = vunpack.c.l.b16 %v1733
        %v2887 = vunpack.c.h.b16 %v1733
        %v2888 = vunpack.c.l.b16 %v1734
        %v2889 = vunpack.c.h.b16 %v1734
        %v2890 = vunpack.c.l.b16 %v1735
        %v2891 = vunpack.c.h.b16 %v1735
        %v2892 = vunpack.c.l.b16 %v1736
        %v2893 = vunpack.c.h.b16 %v1736
        %v2894 = vunpack.c.l.b16 %v1737
        %v2895 = vunpack.c.h.b16 %v1737
        %v2896 = vunpack.c.l.b16 %v1738
        %v2897 = vunpack.c.h.b16 %v1738
        %v2898 = vunpack.c.l.b16 %v1739
        %v2899 = vunpack.c.l.b16 %v1740
        %v2900 = vunpack.c.h.b16 %v1740
        %v2901 = vunpack.c.l.b16 %v1741
        %v2902 = vunpack.c.h.b16 %v1741
        %v2903 = vunpack.c.l.b16 %v1742
        %v2904 = vunpack.c.h.b16 %v1742
        %v2905 = vunpack.c.l.b16 %v1743
        %v2906 = vunpack.c.h.b16 %v1743
        %v2907 = vunpack.c.l.b16 %v1744
        %v2908 = vunpack.c.h.b16 %v1744
        %v2909 = vunpack.c.l.b16 %v1745
        %v2910 = vunpack.c.h.b16 %v1745
        %v2911 = vunpack.c.l.b16 %v1746
        %v2912 = vunpack.c.h.b16 %v1746
        %v2913 = vunpack.c.l.b16 %v1747
        %v2914 = vunpack.c.l.b16 %v1748
        %v2915 = vunpack.c.h.b16 %v1748
        %v2916 = vunpack.c.l.b16 %v1749
        %v2917 = vunpack.c.h.b16 %v1749
        %v2918 = vunpack.c.l.b16 %v1750
        %v2919 = vunpack.c.h.b16 %v1750
        %v2920 = vunpack.c.l.b16 %v1751
        %v2921 = vunpack.c.h.b16 %v1751
        %v2922 = vunpack.c.l.b16 %v1752
        %v2923 = vunpack.c.h.b16 %v1752
        %v2924 = vunpack.c.l.b16 %v1753
        %v2925 = vunpack.c.h.b16 %v1753
        %v2926 = vunpack.c.l.b16 %v1754
        %v2927 = vunpack.c.h.b16 %v1754
        %v2928 = vunpack.c.l.b16 %v1755
        %v2929 = vunpack.c.l.b16 %v1756
        %v2930 = vunpack.c.h.b16 %v1756
        %v2931 = vunpack.c.l.b16 %v1757
        %v2932 = vunpack.c.h.b16 %v1757
        %v2933 = vunpack.c.l.b16 %v1758
        %v2934 = vunpack.c.h.b16 %v1758
        %v2935 = vunpack.c.l.b16 %v1759
        %v2936 = vunpack.c.h.b16 %v1759
        %v2937 = vunpack.c.l.b16 %v1760
        %v2938 = vunpack.c.h.b16 %v1760
        %v2939 = vunpack.c.l.b16 %v1761
        %v2940 = vunpack.c.h.b16 %v1761
        %v2941 = vunpack.c.l.b16 %v1762
        %v2942 = vunpack.c.h.b16 %v1762
        %v2943 = vunpack.c.l.b16 %v1763
        %v2944 = vunpack.c.l.b16 %v1764
        %v2945 = vunpack.c.h.b16 %v1764
        %v2946 = vunpack.c.l.b16 %v1765
        %v2947 = vunpack.c.h.b16 %v1765
        %v2948 = vunpack.c.l.b16 %v1766
        %v2949 = vunpack.c.h.b16 %v1766
        %v2950 = vunpack.c.l.b16 %v1767
        %v2951 = vunpack.c.h.b16 %v1767
        %v2952 = vunpack.c.l.b16 %v1768
        %v2953 = vunpack.c.h.b16 %v1768
        %v2954 = vunpack.c.l.b16 %v1769
        %v2955 = vunpack.c.h.b16 %v1769
        %v2956 = vunpack.c.l.b16 %v1770
        %v2957 = vunpack.c.h.b16 %v1770
        %v2958 = vunpack.c.l.b16 %v1771
        %v2959 = vunpack.c.l.b16 %v1772
        %v2960 = vunpack.c.h.b16 %v1772
        %v2961 = vunpack.c.l.b16 %v1773
        %v2962 = vunpack.c.h.b16 %v1773
        %v2963 = vunpack.c.l.b16 %v1774
        %v2964 = vunpack.c.h.b16 %v1774
        %v2965 = vunpack.c.l.b16 %v1775
        %v2966 = vunpack.c.h.b16 %v1775
        %v2967 = vunpack.c.l.b16 %v1776
        %v2968 = vunpack.c.h.b16 %v1776
        %v2969 = vunpack.c.l.b16 %v1777
        %v2970 = vunpack.c.h.b16 %v1777
        %v2971 = vunpack.c.l.b16 %v1778
        %v2972 = vunpack.c.h.b16 %v1778
        %v2973 = vunpack.c.l.b16 %v1779
        %v2974 = vunpack.c.l.b16 %v1780
        %v2975 = vunpack.c.h.b16 %v1780
        %v2976 = vunpack.c.l.b16 %v1781
        %v2977 = vunpack.c.h.b16 %v1781
        %v2978 = vunpack.c.l.b16 %v1782
        %v2979 = vunpack.c.h.b16 %v1782
        %v2980 = vunpack.c.l.b16 %v1783
        %v2981 = vunpack.c.h.b16 %v1783
        %v2982 = vunpack.c.l.b16 %v1784
        %v2983 = vunpack.c.h.b16 %v1784
        %v2984 = vunpack.c.l.b16 %v1785
        %v2985 = vunpack.c.h.b16 %v1785
        %v2986 = vunpack.c.l.b16 %v1786
        %v2987 = vunpack.c.h.b16 %v1786
        %v2988 = vunpack.c.l.b16 %v1787
        %v2989 = vunpack.c.l.b16 %v1788
        %v2990 = vunpack.c.h.b16 %v1788
        %v2991 = vunpack.c.l.b16 %v1789
        %v2992 = vunpack.c.h.b16 %v1789
        %v2993 = vunpack.c.l.b16 %v1790
        %v2994 = vunpack.c.h.b16 %v1790
        %v2995 = vunpack.c.l.b16 %v1791
        %v2996 = vunpack.c.h.b16 %v1791
        %v2997 = vunpack.c.l.b16 %v1792
        %v2998 = vunpack.c.h.b16 %v1792
        %v2999 = vunpack.c.l.b16 %v1793
        %v3000 = vunpack.c.h.b16 %v1793
        %v3001 = vunpack.c.l.b16 %v1794
        %v3002 = vunpack.c.h.b16 %v1794
        %v3003 = vunpack.c.l.b16 %v1795
        %v3004 = vunpack.c.l.b16 %v1796
        %v3005 = vunpack.c.h.b16 %v1796
        %v3006 = vunpack.c.l.b16 %v1797
        %v3007 = vunpack.c.h.b16 %v1797
        %v3008 = vunpack.c.l.b16 %v1798
        %v3009 = vunpack.c.h.b16 %v1798
        %v3010 = vunpack.c.l.b16 %v1799
        %v3011 = vunpack.c.h.b16 %v1799
        %v3012 = vunpack.c.l.b16 %v1800
        %v3013 = vunpack.c.h.b16 %v1800
        %v3014 = vunpack.c.l.b16 %v1801
        %v3015 = vunpack.c.h.b16 %v1801
        %v3016 = vunpack.c.l.b16 %v1802
        %v3017 = vunpack.c.h.b16 %v1802
        %v3018 = vunpack.c.l.b16 %v1803
        %v3019 = vunpack.c.l.b16 %v1804
        %v3020 = vunpack.c.h.b16 %v1804
        %v3021 = vunpack.c.l.b16 %v1805
        %v3022 = vunpack.c.h.b16 %v1805
        %v3023 = vunpack.c.l.b16 %v1806
        %v3024 = vunpack.c.h.b16 %v1806
        %v3025 = vunpack.c.l.b16 %v1807
        %v3026 = vunpack.c.h.b16 %v1807
        %v3027 = vunpack.c.l.b16 %v1808
        %v3028 = vunpack.c.h.b16 %v1808
        %v3029 = vunpack.c.l.b16 %v1809
        %v3030 = vunpack.c.h.b16 %v1809
        %v3031 = vunpack.c.l.b16 %v1810
        %v3032 = vunpack.c.h.b16 %v1810
        %v3033 = vunpack.c.l.b16 %v1811
        %v3034 = vunpack.c.l.b16 %v1812
        %v3035 = vunpack.c.h.b16 %v1812
        %v3036 = vunpack.c.l.b16 %v1813
        %v3037 = vunpack.c.h.b16 %v1813
        %v3038 = vunpack.c.l.b16 %v1814
        %v3039 = vunpack.c.h.b16 %v1814
        %v3040 = vunpack.c.l.b16 %v1815
        %v3041 = vunpack.c.h.b16 %v1815
        %v3042 = vunpack.c.l.b16 %v1816
        %v3043 = vunpack.c.h.b16 %v1816
        %v3044 = vunpack.c.l.b16 %v1817
        %v3045 = vunpack.c.h.b16 %v1817
        %v3046 = vunpack.c.l.b16 %v1818
        %v3047 = vunpack.c.h.b16 %v1818
        %v3048 = vunpack.c.l.b16 %v1819
        %v3049 = vpack.c.b16 %v2314, %v2299
        %v3050 = vpack.c.b16 %v2315, %v2300
        %v3051 = vpack.c.b16 %v2316, %v2301
        %v3052 = vpack.c.b16 %v2317, %v2302
        %v3053 = vpack.c.b16 %v2318, %v2303
        %v3054 = vpack.c.b16 %v2319, %v2304
        %v3055 = vpack.c.b16 %v2320, %v2305
        %v3056 = vpack.c.b16 %v2321, %v2306
        %v3057 = vpack.c.b16 %v2322, %v2307
        %v3058 = vpack.c.b16 %v2323, %v2308
        %v3059 = vpack.c.b16 %v2324, %v2309
        %v3060 = vpack.c.b16 %v2325, %v2310
        %v3061 = vpack.c.b16 %v2326, %v2311
        %v3062 = vpack.c.b16 %v2327, %v2312
        %v3063 = vpack.c.b16 %v2328, %v2313
        %v3064 = vpack.c.b16 %v2344, %v2329
        %v3065 = vpack.c.b16 %v2345, %v2330
        %v3066 = vpack.c.b16 %v2346, %v2331
        %v3067 = vpack.c.b16 %v2347, %v2332
        %v3068 = vpack.c.b16 %v2348, %v2333
        %v3069 = vpack.c.b16 %v2349, %v2334
        %v3070 = vpack.c.b16 %v2350, %v2335
        %v3071 = vpack.c.b16 %v2351, %v2336
        %v3072 = vpack.c.b16 %v2352, %v2337
        %v3073 = vpack.c.b16 %v2353, %v2338
        %v3074 = vpack.c.b16 %v2354, %v2339
        %v3075 = vpack.c.b16 %v2355, %v2340
        %v3076 = vpack.c.b16 %v2356, %v2341
        %v3077 = vpack.c.b16 %v2357, %v2342
        %v3078 = vpack.c.b16 %v2358, %v2343
        %v3079 = vpack.c.b16 %v2374, %v2359
        %v3080 = vpack.c.b16 %v2375, %v2360
        %v3081 = vpack.c.b16 %v2376, %v2361
        %v3082 = vpack.c.b16 %v2377, %v2362
        %v3083 = vpack.c.b16 %v2378, %v2363
        %v3084 = vpack.c.b16 %v2379, %v2364
        %v3085 = vpack.c.b16 %v2380, %v2365
        %v3086 = vpack.c.b16 %v2381, %v2366
        %v3087 = vpack.c.b16 %v2382, %v2367
        %v3088 = vpack.c.b16 %v2383, %v2368
        %v3089 = vpack.c.b16 %v2384, %v2369
        %v3090 = vpack.c.b16 %v2385, %v2370
        %v3091 = vpack.c.b16 %v2386, %v2371
        %v3092 = vpack.c.b16 %v2387, %v2372
        %v3093 = vpack.c.b16 %v2388, %v2373
        %v3094 = vpack.c.b16 %v2404, %v2389
        %v3095 = vpack.c.b16 %v2405, %v2390
        %v3096 = vpack.c.b16 %v2406, %v2391
        %v3097 = vpack.c.b16 %v2407, %v2392
        %v3098 = vpack.c.b16 %v2408, %v2393
        %v3099 = vpack.c.b16 %v2409, %v2394
        %v3100 = vpack.c.b16 %v2410, %v2395
        %v3101 = vpack.c.b16 %v2411, %v2396
        %v3102 = vpack.c.b16 %v2412, %v2397
        %v3103 = vpack.c.b16 %v2413, %v2398
        %v3104 = vpack.c.b16 %v2414, %v2399
        %v3105 = vpack.c.b16 %v2415, %v2400
        %v3106 = vpack.c.b16 %v2416, %v2401
        %v3107 = vpack.c.b16 %v2417, %v2402
        %v3108 = vpack.c.b16 %v2418, %v2403
        %v3109 = vpack.c.b16 %v2434, %v2419
        %v3110 = vpack.c.b16 %v2435, %v2420
        %v3111 = vpack.c.b16 %v2436, %v2421
        %v3112 = vpack.c.b16 %v2437, %v2422
        %v3113 = vpack.c.b16 %v2438, %v2423
        %v3114 = vpack.c.b16 %v2439, %v2424
        %v3115 = vpack.c.b16 %v2440, %v2425
        %v3116 = vpack.c.b16 %v2441, %v2426
        %v3117 = vpack.c.b16 %v2442, %v2427
        %v3118 = vpack.c.b16 %v2443, %v2428
        %v3119 = vpack.c.b16 %v2444, %v2429
        %v3120 = vpack.c.b16 %v2445, %v2430
        %v3121 = vpack.c.b16 %v2446, %v2431
        %v3122 = vpack.c.b16 %v2447, %v2432
        %v3123 = vpack.c.b16 %v2448, %v2433
        %v3124 = vpack.c.b16 %v2464, %v2449
        %v3125 = vpack.c.b16 %v2465, %v2450
        %v3126 = vpack.c.b16 %v2466, %v2451
        %v3127 = vpack.c.b16 %v2467, %v2452
        %v3128 = vpack.c.b16 %v2468, %v2453
        %v3129 = vpack.c.b16 %v2469, %v2454
        %v3130 = vpack.c.b16 %v2470, %v2455
        %v3131 = vpack.c.b16 %v2471, %v2456
        %v3132 = vpack.c.b16 %v2472, %v2457
        %v3133 = vpack.c.b16 %v2473, %v2458
        %v3134 = vpack.c.b16 %v2474, %v2459
        %v3135 = vpack.c.b16 %v2475, %v2460
        %v3136 = vpack.c.b16 %v2476, %v2461
        %v3137 = vpack.c.b16 %v2477, %v2462
        %v3138 = vpack.c.b16 %v2478, %v2463
        %v3139 = vpack.c.b16 %v2494, %v2479
        %v3140 = vpack.c.b16 %v2495, %v2480
        %v3141 = vpack.c.b16 %v2496, %v2481
        %v3142 = vpack.c.b16 %v2497, %v2482
        %v3143 = vpack.c.b16 %v2498, %v2483
        %v3144 = vpack.c.b16 %v2499, %v2484
        %v3145 = vpack.c.b16 %v2500, %v2485
        %v3146 = vpack.c.b16 %v2501, %v2486
        %v3147 = vpack.c.b16 %v2502, %v2487
        %v3148 = vpack.c.b16 %v2503, %v2488
        %v3149 = vpack.c.b16 %v2504, %v2489
        %v3150 = vpack.c.b16 %v2505, %v2490
        %v3151 = vpack.c.b16 %v2506, %v2491
        %v3152 = vpack.c.b16 %v2507, %v2492
        %v3153 = vpack.c.b16 %v2508, %v2493
        %v3154 = vpack.c.b16 %v2524, %v2509
        %v3155 = vpack.c.b16 %v2525, %v2510
        %v3156 = vpack.c.b16 %v2526, %v2511
        %v3157 = vpack.c.b16 %v2527, %v2512
        %v3158 = vpack.c.b16 %v2528, %v2513
        %v3159 = vpack.c.b16 %v2529, %v2514
        %v3160 = vpack.c.b16 %v2530, %v2515
        %v3161 = vpack.c.b16 %v2531, %v2516
        %v3162 = vpack.c.b16 %v2532, %v2517
        %v3163 = vpack.c.b16 %v2533, %v2518
        %v3164 = vpack.c.b16 %v2534, %v2519
        %v3165 = vpack.c.b16 %v2535, %v2520
        %v3166 = vpack.c.b16 %v2536, %v2521
        %v3167 = vpack.c.b16 %v2537, %v2522
        %v3168 = vpack.c.b16 %v2538, %v2523
        %v3169 = vpack.c.b16 %v2554, %v2539
        %v3170 = vpack.c.b16 %v2555, %v2540
        %v3171 = vpack.c.b16 %v2556, %v2541
        %v3172 = vpack.c.b16 %v2557, %v2542
        %v3173 = vpack.c.b16 %v2558, %v2543
        %v3174 = vpack.c.b16 %v2559, %v2544
        %v3175 = vpack.c.b16 %v2560, %v2545
        %v3176 = vpack.c.b16 %v2561, %v2546
        %v3177 = vpack.c.b16 %v2562, %v2547
        %v3178 = vpack.c.b16 %v2563, %v2548
        %v3179 = vpack.c.b16 %v2564, %v2549
        %v3180 = vpack.c.b16 %v2565, %v2550
        %v3181 = vpack.c.b16 %v2566, %v2551
        %v3182 = vpack.c.b16 %v2567, %v2552
        %v3183 = vpack.c.b16 %v2568, %v2553
        %v3184 = vpack.c.b16 %v2584, %v2569
        %v3185 = vpack.c.b16 %v2585, %v2570
        %v3186 = vpack.c.b16 %v2586, %v2571
        %v3187 = vpack.c.b16 %v2587, %v2572
        %v3188 = vpack.c.b16 %v2588, %v2573
        %v3189 = vpack.c.b16 %v2589, %v2574
        %v3190 = vpack.c.b16 %v2590, %v2575
        %v3191 = vpack.c.b16 %v2591, %v2576
        %v3192 = vpack.c.b16 %v2592, %v2577
        %v3193 = vpack.c.b16 %v2593, %v2578
        %v3194 = vpack.c.b16 %v2594, %v2579
        %v3195 = vpack.c.b16 %v2595, %v2580
        %v3196 = vpack.c.b16 %v2596, %v2581
        %v3197 = vpack.c.b16 %v2597, %v2582
        %v3198 = vpack.c.b16 %v2598, %v2583
        %v3199 = vpack.c.b16 %v2614, %v2599
        %v3200 = vpack.c.b16 %v2615, %v2600
        %v3201 = vpack.c.b16 %v2616, %v2601
        %v3202 = vpack.c.b16 %v2617, %v2602
        %v3203 = vpack.c.b16 %v2618, %v2603
        %v3204 = vpack.c.b16 %v2619, %v2604
        %v3205 = vpack.c.b16 %v2620, %v2605
        %v3206 = vpack.c.b16 %v2621, %v2606
        %v3207 = vpack.c.b16 %v2622, %v2607
        %v3208 = vpack.c.b16 %v2623, %v2608
        %v3209 = vpack.c.b16 %v2624, %v2609
        %v3210 = vpack.c.b16 %v2625, %v2610
        %v3211 = vpack.c.b16 %v2626, %v2611
        %v3212 = vpack.c.b16 %v2627, %v2612
        %v3213 = vpack.c.b16 %v2628, %v2613
        %v3214 = vpack.c.b16 %v2644, %v2629
        %v3215 = vpack.c.b16 %v2645, %v2630
        %v3216 = vpack.c.b16 %v2646, %v2631
        %v3217 = vpack.c.b16 %v2647, %v2632
        %v3218 = vpack.c.b16 %v2648, %v2633
        %v3219 = vpack.c.b16 %v2649, %v2634
        %v3220 = vpack.c.b16 %v2650, %v2635
        %v3221 = vpack.c.b16 %v2651, %v2636
        %v3222 = vpack.c.b16 %v2652, %v2637
        %v3223 = vpack.c.b16 %v2653, %v2638
        %v3224 = vpack.c.b16 %v2654, %v2639
        %v3225 = vpack.c.b16 %v2655, %v2640
        %v3226 = vpack.c.b16 %v2656, %v2641
        %v3227 = vpack.c.b16 %v2657, %v2642
        %v3228 = vpack.c.b16 %v2658, %v2643
        %v3229 = vpack.c.b16 %v2674, %v2659
        %v3230 = vpack.c.b16 %v2675, %v2660
        %v3231 = vpack.c.b16 %v2676, %v2661
        %v3232 = vpack.c.b16 %v2677, %v2662
        %v3233 = vpack.c.b16 %v2678, %v2663
        %v3234 = vpack.c.b16 %v2679, %v2664
        %v3235 = vpack.c.b16 %v2680, %v2665
        %v3236 = vpack.c.b16 %v2681, %v2666
        %v3237 = vpack.c.b16 %v2682, %v2667
        %v3238 = vpack.c.b16 %v2683, %v2668
        %v3239 = vpack.c.b16 %v2684, %v2669
        %v3240 = vpack.c.b16 %v2685, %v2670
        %v3241 = vpack.c.b16 %v2686, %v2671
        %v3242 = vpack.c.b16 %v2687, %v2672
        %v3243 = vpack.c.b16 %v2688, %v2673
        %v3244 = vpack.c.b16 %v2704, %v2689
        %v3245 = vpack.c.b16 %v2705, %v2690
        %v3246 = vpack.c.b16 %v2706, %v2691
        %v3247 = vpack.c.b16 %v2707, %v2692
        %v3248 = vpack.c.b16 %v2708, %v2693
        %v3249 = vpack.c.b16 %v2709, %v2694
        %v3250 = vpack.c.b16 %v2710, %v2695
        %v3251 = vpack.c.b16 %v2711, %v2696
        %v3252 = vpack.c.b16 %v2712, %v2697
        %v3253 = vpack.c.b16 %v2713, %v2698
        %v3254 = vpack.c.b16 %v2714, %v2699
        %v3255 = vpack.c.b16 %v2715, %v2700
        %v3256 = vpack.c.b16 %v2716, %v2701
        %v3257 = vpack.c.b16 %v2717, %v2702
        %v3258 = vpack.c.b16 %v2718, %v2703
        %v3259 = vpack.c.b16 %v2734, %v2719
        %v3260 = vpack.c.b16 %v2735, %v2720
        %v3261 = vpack.c.b16 %v2736, %v2721
        %v3262 = vpack.c.b16 %v2737, %v2722
        %v3263 = vpack.c.b16 %v2738, %v2723
        %v3264 = vpack.c.b16 %v2739, %v2724
        %v3265 = vpack.c.b16 %v2740, %v2725
        %v3266 = vpack.c.b16 %v2741, %v2726
        %v3267 = vpack.c.b16 %v2742, %v2727
        %v3268 = vpack.c.b16 %v2743, %v2728
        %v3269 = vpack.c.b16 %v2744, %v2729
        %v3270 = vpack.c.b16 %v2745, %v2730
        %v3271 = vpack.c.b16 %v2746, %v2731
        %v3272 = vpack.c.b16 %v2747, %v2732
        %v3273 = vpack.c.b16 %v2748, %v2733
        %v3274 = vpack.c.b16 %v2764, %v2749
        %v3275 = vpack.c.b16 %v2765, %v2750
        %v3276 = vpack.c.b16 %v2766, %v2751
        %v3277 = vpack.c.b16 %v2767, %v2752
        %v3278 = vpack.c.b16 %v2768, %v2753
        %v3279 = vpack.c.b16 %v2769, %v2754
        %v3280 = vpack.c.b16 %v2770, %v2755
        %v3281 = vpack.c.b16 %v2771, %v2756
        %v3282 = vpack.c.b16 %v2772, %v2757
        %v3283 = vpack.c.b16 %v2773, %v2758
        %v3284 = vpack.c.b16 %v2774, %v2759
        %v3285 = vpack.c.b16 %v2775, %v2760
        %v3286 = vpack.c.b16 %v2776, %v2761
        %v3287 = vpack.c.b16 %v2777, %v2762
        %v3288 = vpack.c.b16 %v2778, %v2763
        %v3289 = vpack.c.b16 %v2794, %v2779
        %v3290 = vpack.c.b16 %v2795, %v2780
        %v3291 = vpack.c.b16 %v2796, %v2781
        %v3292 = vpack.c.b16 %v2797, %v2782
        %v3293 = vpack.c.b16 %v2798, %v2783
        %v3294 = vpack.c.b16 %v2799, %v2784
        %v3295 = vpack.c.b16 %v2800, %v2785
        %v3296 = vpack.c.b16 %v2801, %v2786
        %v3297 = vpack.c.b16 %v2802, %v2787
        %v3298 = vpack.c.b16 %v2803, %v2788
        %v3299 = vpack.c.b16 %v2804, %v2789
        %v3300 = vpack.c.b16 %v2805, %v2790
        %v3301 = vpack.c.b16 %v2806, %v2791
        %v3302 = vpack.c.b16 %v2807, %v2792
        %v3303 = vpack.c.b16 %v2808, %v2793
        %v3304 = vpack.c.b16 %v2824, %v2809
        %v3305 = vpack.c.b16 %v2825, %v2810
        %v3306 = vpack.c.b16 %v2826, %v2811
        %v3307 = vpack.c.b16 %v2827, %v2812
        %v3308 = vpack.c.b16 %v2828, %v2813
        %v3309 = vpack.c.b16 %v2829, %v2814
        %v3310 = vpack.c.b16 %v2830, %v2815
        %v3311 = vpack.c.b16 %v2831, %v2816
        %v3312 = vpack.c.b16 %v2832, %v2817
        %v3313 = vpack.c.b16 %v2833, %v2818
        %v3314 = vpack.c.b16 %v2834, %v2819
        %v3315 = vpack.c.b16 %v2835, %v2820
        %v3316 = vpack.c.b16 %v2836, %v2821
        %v3317 = vpack.c.b16 %v2837, %v2822
        %v3318 = vpack.c.b16 %v2838, %v2823
        %v3319 = vpack.c.b16 %v2854, %v2839
        %v3320 = vpack.c.b16 %v2855, %v2840
        %v3321 = vpack.c.b16 %v2856, %v2841
        %v3322 = vpack.c.b16 %v2857, %v2842
        %v3323 = vpack.c.b16 %v2858, %v2843
        %v3324 = vpack.c.b16 %v2859, %v2844
        %v3325 = vpack.c.b16 %v2860, %v2845
        %v3326 = vpack.c.b16 %v2861, %v2846
        %v3327 = vpack.c.b16 %v2862, %v2847
        %v3328 = vpack.c.b16 %v2863, %v2848
        %v3329 = vpack.c.b16 %v2864, %v2849
        %v3330 = vpack.c.b16 %v2865, %v2850
        %v3331 = vpack.c.b16 %v2866, %v2851
        %v3332 = vpack.c.b16 %v2867, %v2852
        %v3333 = vpack.c.b16 %v2868, %v2853
        %v3334 = vpack.c.b16 %v2884, %v2869
        %v3335 = vpack.c.b16 %v2885, %v2870
        %v3336 = vpack.c.b16 %v2886, %v2871
        %v3337 = vpack.c.b16 %v2887, %v2872
        %v3338 = vpack.c.b16 %v2888, %v2873
        %v3339 = vpack.c.b16 %v2889, %v2874
        %v3340 = vpack.c.b16 %v2890, %v2875
        %v3341 = vpack.c.b16 %v2891, %v2876
        %v3342 = vpack.c.b16 %v2892, %v2877
        %v3343 = vpack.c.b16 %v2893, %v2878
        %v3344 = vpack.c.b16 %v2894, %v2879
        %v3345 = vpack.c.b16 %v2895, %v2880
        %v3346 = vpack.c.b16 %v2896, %v2881
        %v3347 = vpack.c.b16 %v2897, %v2882
        %v3348 = vpack.c.b16 %v2898, %v2883
        %v3349 = vpack.c.b16 %v2914, %v2899
        %v3350 = vpack.c.b16 %v2915, %v2900
        %v3351 = vpack.c.b16 %v2916, %v2901
        %v3352 = vpack.c.b16 %v2917, %v2902
        %v3353 = vpack.c.b16 %v2918, %v2903
        %v3354 = vpack.c.b16 %v2919, %v2904
        %v3355 = vpack.c.b16 %v2920, %v2905
        %v3356 = vpack.c.b16 %v2921, %v2906
        %v3357 = vpack.c.b16 %v2922, %v2907
        %v3358 = vpack.c.b16 %v2923, %v2908
        %v3359 = vpack.c.b16 %v2924, %v2909
        %v3360 = vpack.c.b16 %v2925, %v2910
        %v3361 = vpack.c.b16 %v2926, %v2911
        %v3362 = vpack.c.b16 %v2927, %v2912
        %v3363 = vpack.c.b16 %v2928, %v2913
        %v3364 = vpack.c.b16 %v2944, %v2929
        %v3365 = vpack.c.b16 %v2945, %v2930
        %v3366 = vpack.c.b16 %v2946, %v2931
        %v3367 = vpack.c.b16 %v2947, %v2932
        %v3368 = vpack.c.b16 %v2948, %v2933
        %v3369 = vpack.c.b16 %v2949, %v2934
        %v3370 = vpack.c.b16 %v2950, %v2935
        %v3371 = vpack.c.b16 %v2951, %v2936
        %v3372 = vpack.c.b16 %v2952, %v2937
        %v3373 = vpack.c.b16 %v2953, %v2938
        %v3374 = vpack.c.b16 %v2954, %v2939
        %v3375 = vpack.c.b16 %v2955, %v2940
        %v3376 = vpack.c.b16 %v2956, %v2941
        %v3377 = vpack.c.b16 %v2957, %v2942
        %v3378 = vpack.c.b16 %v2958, %v2943
        %v3379 = vpack.c.b16 %v2974, %v2959
        %v3380 = vpack.c.b16 %v2975, %v2960
        %v3381 = vpack.c.b16 %v2976, %v2961
        %v3382 = vpack.c.b16 %v2977, %v2962
        %v3383 = vpack.c.b16 %v2978, %v2963
        %v3384 = vpack.c.b16 %v2979, %v2964
        %v3385 = vpack.c.b16 %v2980, %v2965
        %v3386 = vpack.c.b16 %v2981, %v2966
        %v3387 = vpack.c.b16 %v2982, %v2967
        %v3388 = vpack.c.b16 %v2983, %v2968
        %v3389 = vpack.c.b16 %v2984, %v2969
        %v3390 = vpack.c.b16 %v2985, %v2970
        %v3391 = vpack.c.b16 %v2986, %v2971
        %v3392 = vpack.c.b16 %v2987, %v2972
        %v3393 = vpack.c.b16 %v2988, %v2973
        %v3394 = vpack.c.b16 %v3004, %v2989
        %v3395 = vpack.c.b16 %v3005, %v2990
        %v3396 = vpack.c.b16 %v3006, %v2991
        %v3397 = vpack.c.b16 %v3007, %v2992
        %v3398 = vpack.c.b16 %v3008, %v2993
        %v3399 = vpack.c.b16 %v3009, %v2994
        %v3400 = vpack.c.b16 %v3010, %v2995
        %v3401 = vpack.c.b16 %v3011, %v2996
        %v3402 = vpack.c.b16 %v3012, %v2997
        %v3403 = vpack.c.b16 %v3013, %v2998
        %v3404 = vpack.c.b16 %v3014, %v2999
        %v3405 = vpack.c.b16 %v3015, %v3000
        %v3406 = vpack.c.b16 %v3016, %v3001
        %v3407 = vpack.c.b16 %v3017, %v3002
        %v3408 = vpack.c.b16 %v3018, %v3003
        %v3409 = vpack.c.b16 %v3034, %v3019
        %v3410 = vpack.c.b16 %v3035, %v3020
        %v3411 = vpack.c.b16 %v3036, %v3021
        %v3412 = vpack.c.b16 %v3037, %v3022
        %v3413 = vpack.c.b16 %v3038, %v3023
        %v3414 = vpack.c.b16 %v3039, %v3024
        %v3415 = vpack.c.b16 %v3040, %v3025
        %v3416 = vpack.c.b16 %v3041, %v3026
        %v3417 = vpack.c.b16 %v3042, %v3027
        %v3418 = vpack.c.b16 %v3043, %v3028
        %v3419 = vpack.c.b16 %v3044, %v3029
        %v3420 = vpack.c.b16 %v3045, %v3030
        %v3421 = vpack.c.b16 %v3046, %v3031
        %v3422 = vpack.c.b16 %v3047, %v3032
        %v3423 = vpack.c.b16 %v3048, %v3033
        %v3800 = vsel %vm1147, %v1419, 0
        %3802 = vmatprep.subr.bf16.mxu0 %v3155
        %3803 = vmatpush1.bf16.msra.mxu0 %v3154
        %3804 = vmatprep.subr.bf16.mxu0 %v3140
        %3805 = vmatpush1.bf16.msra.mxu0 %v3139
        %3806 = vmatprep.subr.bf16.mxu0 %v3125
        %3807 = vmatpush1.bf16.msra.mxu0 %v3124
        %3808 = vmatprep.subr.bf16.mxu0 %v3110
        %3809 = vmatpush1.bf16.msra.mxu0 %v3109
        %3810 = vmatprep.subr.bf16.mxu0 %v3095
        %3811 = vmatpush1.bf16.msra.mxu0 %v3094
        %3812 = vmatprep.subr.bf16.mxu0 %v3080
        %3813 = vmatpush1.bf16.msra.mxu0 %v3079
        %3814 = vmatprep.subr.bf16.mxu0 %v3065
        %3815 = vmatpush1.bf16.msra.mxu0 %v3064
        %3816 = vmatprep.subr.bf16.mxu0 %v3050
        %3817 = vmatpush1.bf16.msra.mxu0 %v3049
        %3818 = vmatprep.subr.bf16.mxu0 %v3275
        %3819 = vmatpush2.bf16.msra.mxu0 %v3274
        %3820 = vmatprep.subr.bf16.mxu0 %v3260
        %3821 = vmatpush2.bf16.msra.mxu0 %v3259
        %3822 = vmatprep.subr.bf16.mxu0 %v3245
        %3823 = vmatpush2.bf16.msra.mxu0 %v3244
        %3824 = vmatprep.subr.bf16.mxu0 %v3230
        %3825 = vmatpush2.bf16.msra.mxu0 %v3229
        %3826 = vmatprep.subr.bf16.mxu0 %v3215
        %3827 = vmatpush2.bf16.msra.mxu0 %v3214
        %3828 = vmatprep.subr.bf16.mxu0 %v3200
        %3829 = vmatpush2.bf16.msra.mxu0 %v3199
        %3830 = vmatprep.subr.bf16.mxu0 %v3185
        %3831 = vmatpush2.bf16.msra.mxu0 %v3184
        %3832 = vmatprep.subr.bf16.mxu0 %v3170
        %3833 = vmatpush2.bf16.msra.mxu0 %v3169
        %3834 = vmatprep.mubr.bf16.mxu0 %v1417
        %3835 = vmatmul.mubr.bf16.gmra.mxu0 %v1416
        %v3836 = vpop.f32.mrf.mxu0
        %v3837 = vadd.f32 %v1827, %v3836
        %v3838 = vpop.f32.mrf.mxu0
        %v3839 = vadd.f32 %v1831, %v3838
        %v3840 = vpop.f32.mrf.mxu0
        %v3841 = vpop.f32.mrf.mxu0
        %3842 = vdwg.mxu0
        %3843 = vmatprep.subr.bf16.mxu0 %v3395
        %3844 = vmatpush1.bf16.msra.mxu0 %v3394
        %3845 = vmatprep.subr.bf16.mxu0 %v3380
        %3846 = vmatpush1.bf16.msra.mxu0 %v3379
        %3847 = vmatprep.subr.bf16.mxu0 %v3365
        %3848 = vmatpush1.bf16.msra.mxu0 %v3364
        %3849 = vmatprep.subr.bf16.mxu0 %v3350
        %3850 = vmatpush1.bf16.msra.mxu0 %v3349
        %3851 = vmatprep.subr.bf16.mxu0 %v3335
        %3852 = vmatpush1.bf16.msra.mxu0 %v3334
        %3853 = vmatprep.subr.bf16.mxu0 %v3320
        %3854 = vmatpush1.bf16.msra.mxu0 %v3319
        %3855 = vmatprep.subr.bf16.mxu0 %v3305
        %3856 = vmatpush1.bf16.msra.mxu0 %v3304
        %3857 = vmatprep.subr.bf16.mxu0 %v3290
        %3858 = vmatpush1.bf16.msra.mxu0 %v3289
        %3859 = vmatprep.subr.bf16.mxu0 0
        %3860 = vmatpush2.bf16.msra.mxu0 0
        %3861 = vmatprep.subr.bf16.mxu0 0
        %3862 = vmatpush2.bf16.msra.mxu0 0
        %3863 = vmatprep.subr.bf16.mxu0 0
        %3864 = vmatpush2.bf16.msra.mxu0 0
        %3865 = vmatprep.subr.bf16.mxu0 0
        %3866 = vmatpush2.bf16.msra.mxu0 0
        %3867 = vmatprep.subr.bf16.mxu0 0
        %3868 = vmatpush2.bf16.msra.mxu0 0
        %3869 = vmatprep.subr.bf16.mxu0 0
        %3870 = vmatpush2.bf16.msra.mxu0 0
        %3871 = vmatprep.subr.bf16.mxu0 0
        %3872 = vmatpush2.bf16.msra.mxu0 0
        %3873 = vmatprep.subr.bf16.mxu0 %v3410
        %3874 = vmatpush2.bf16.msra.mxu0 %v3409
        %3875 = vmatprep.mubr.bf16.mxu0 %v3800
        %3876 = vmatmul.mubr.bf16.gmra.mxu0 %v1418
        %v3877 = vpop.f32.mrf.mxu0
        %v3878 = vadd.f32 %v3837, %v3877
        %v3879 = vpop.f32.mrf.mxu0
        %v3880 = vadd.f32 %v3839, %v3879
        %v3881 = vpop.f32.mrf.mxu0
        %v3882 = vpop.f32.mrf.mxu0
        %3883 = vdwg.mxu0
        %3884 = vmatprep.subr.bf16.mxu0 %v3157
        %3885 = vmatpush1.bf16.msra.mxu0 %v3156
        %3886 = vmatprep.subr.bf16.mxu0 %v3142
        %3887 = vmatpush1.bf16.msra.mxu0 %v3141
        %3888 = vmatprep.subr.bf16.mxu0 %v3127
        %3889 = vmatpush1.bf16.msra.mxu0 %v3126
        %3890 = vmatprep.subr.bf16.mxu0 %v3112
        %3891 = vmatpush1.bf16.msra.mxu0 %v3111
        %3892 = vmatprep.subr.bf16.mxu0 %v3097
        %3893 = vmatpush1.bf16.msra.mxu0 %v3096
        %3894 = vmatprep.subr.bf16.mxu0 %v3082
        %3895 = vmatpush1.bf16.msra.mxu0 %v3081
        %3896 = vmatprep.subr.bf16.mxu0 %v3067
        %3897 = vmatpush1.bf16.msra.mxu0 %v3066
        %3898 = vmatprep.subr.bf16.mxu0 %v3052
        %3899 = vmatpush1.bf16.msra.mxu0 %v3051
        %3900 = vmatprep.subr.bf16.mxu0 %v3277
        %3901 = vmatpush2.bf16.msra.mxu0 %v3276
        %3902 = vmatprep.subr.bf16.mxu0 %v3262
        %3903 = vmatpush2.bf16.msra.mxu0 %v3261
        %3904 = vmatprep.subr.bf16.mxu0 %v3247
        %3905 = vmatpush2.bf16.msra.mxu0 %v3246
        %3906 = vmatprep.subr.bf16.mxu0 %v3232
        %3907 = vmatpush2.bf16.msra.mxu0 %v3231
        %3908 = vmatprep.subr.bf16.mxu0 %v3217
        %3909 = vmatpush2.bf16.msra.mxu0 %v3216
        %3910 = vmatprep.subr.bf16.mxu0 %v3202
        %3911 = vmatpush2.bf16.msra.mxu0 %v3201
        %3912 = vmatprep.subr.bf16.mxu0 %v3187
        %3913 = vmatpush2.bf16.msra.mxu0 %v3186
        %3914 = vmatprep.subr.bf16.mxu0 %v3172
        %3915 = vmatpush2.bf16.msra.mxu0 %v3171
        %3916 = vmatprep.mubr.bf16.mxu0 %v1417
        %3917 = vmatmul.mubr.bf16.gmra.mxu0 %v1416
        %v3918 = vpop.f32.mrf.mxu0
        %v3919 = vadd.f32 %v1835, %v3918
        %v3920 = vpop.f32.mrf.mxu0
        %v3921 = vadd.f32 %v1839, %v3920
        %v3922 = vpop.f32.mrf.mxu0
        %v3923 = vpop.f32.mrf.mxu0
        %3924 = vdwg.mxu0
        %3925 = vmatprep.subr.bf16.mxu0 %v3397
        %3926 = vmatpush1.bf16.msra.mxu0 %v3396
        %3927 = vmatprep.subr.bf16.mxu0 %v3382
        %3928 = vmatpush1.bf16.msra.mxu0 %v3381
        %3929 = vmatprep.subr.bf16.mxu0 %v3367
        %3930 = vmatpush1.bf16.msra.mxu0 %v3366
        %3931 = vmatprep.subr.bf16.mxu0 %v3352
        %3932 = vmatpush1.bf16.msra.mxu0 %v3351
        %3933 = vmatprep.subr.bf16.mxu0 %v3337
        %3934 = vmatpush1.bf16.msra.mxu0 %v3336
        %3935 = vmatprep.subr.bf16.mxu0 %v3322
        %3936 = vmatpush1.bf16.msra.mxu0 %v3321
        %3937 = vmatprep.subr.bf16.mxu0 %v3307
        %3938 = vmatpush1.bf16.msra.mxu0 %v3306
        %3939 = vmatprep.subr.bf16.mxu0 %v3292
        %3940 = vmatpush1.bf16.msra.mxu0 %v3291
        %3941 = vmatprep.subr.bf16.mxu0 0
        %3942 = vmatpush2.bf16.msra.mxu0 0
        %3943 = vmatprep.subr.bf16.mxu0 0
        %3944 = vmatpush2.bf16.msra.mxu0 0
        %3945 = vmatprep.subr.bf16.mxu0 0
        %3946 = vmatpush2.bf16.msra.mxu0 0
        %3947 = vmatprep.subr.bf16.mxu0 0
        %3948 = vmatpush2.bf16.msra.mxu0 0
        %3949 = vmatprep.subr.bf16.mxu0 0
        %3950 = vmatpush2.bf16.msra.mxu0 0
        %3951 = vmatprep.subr.bf16.mxu0 0
        %3952 = vmatpush2.bf16.msra.mxu0 0
        %3953 = vmatprep.subr.bf16.mxu0 0
        %3954 = vmatpush2.bf16.msra.mxu0 0
        %3955 = vmatprep.subr.bf16.mxu0 %v3412
        %3956 = vmatpush2.bf16.msra.mxu0 %v3411
        %3957 = vmatprep.mubr.bf16.mxu0 %v3800
        %3958 = vmatmul.mubr.bf16.gmra.mxu0 %v1418
        %v3959 = vpop.f32.mrf.mxu0
        %v3960 = vadd.f32 %v3919, %v3959
        %v3961 = vpop.f32.mrf.mxu0
        %v3962 = vadd.f32 %v3921, %v3961
        %v3963 = vpop.f32.mrf.mxu0
        %v3964 = vpop.f32.mrf.mxu0
        %3965 = vdwg.mxu0
        %3966 = vmatprep.subr.bf16.mxu0 %v3159
        %3967 = vmatpush1.bf16.msra.mxu0 %v3158
        %3968 = vmatprep.subr.bf16.mxu0 %v3144
        %3969 = vmatpush1.bf16.msra.mxu0 %v3143
        %3970 = vmatprep.subr.bf16.mxu0 %v3129
        %3971 = vmatpush1.bf16.msra.mxu0 %v3128
        %3972 = vmatprep.subr.bf16.mxu0 %v3114
        %3973 = vmatpush1.bf16.msra.mxu0 %v3113
        %3974 = vmatprep.subr.bf16.mxu0 %v3099
        %3975 = vmatpush1.bf16.msra.mxu0 %v3098
        %3976 = vmatprep.subr.bf16.mxu0 %v3084
        %3977 = vmatpush1.bf16.msra.mxu0 %v3083
        %3978 = vmatprep.subr.bf16.mxu0 %v3069
        %3979 = vmatpush1.bf16.msra.mxu0 %v3068
        %3980 = vmatprep.subr.bf16.mxu0 %v3054
        %3981 = vmatpush1.bf16.msra.mxu0 %v3053
        %3982 = vmatprep.subr.bf16.mxu0 %v3279
        %3983 = vmatpush2.bf16.msra.mxu0 %v3278
        %3984 = vmatprep.subr.bf16.mxu0 %v3264
        %3985 = vmatpush2.bf16.msra.mxu0 %v3263
        %3986 = vmatprep.subr.bf16.mxu0 %v3249
        %3987 = vmatpush2.bf16.msra.mxu0 %v3248
        %3988 = vmatprep.subr.bf16.mxu0 %v3234
        %3989 = vmatpush2.bf16.msra.mxu0 %v3233
        %3990 = vmatprep.subr.bf16.mxu0 %v3219
        %3991 = vmatpush2.bf16.msra.mxu0 %v3218
        %3992 = vmatprep.subr.bf16.mxu0 %v3204
        %3993 = vmatpush2.bf16.msra.mxu0 %v3203
        %3994 = vmatprep.subr.bf16.mxu0 %v3189
        %3995 = vmatpush2.bf16.msra.mxu0 %v3188
        %3996 = vmatprep.subr.bf16.mxu0 %v3174
        %3997 = vmatpush2.bf16.msra.mxu0 %v3173
        %3998 = vmatprep.mubr.bf16.mxu0 %v1417
        %3999 = vmatmul.mubr.bf16.gmra.mxu0 %v1416
        %v4000 = vpop.f32.mrf.mxu0
        %v4001 = vadd.f32 %v1843, %v4000
        %v4002 = vpop.f32.mrf.mxu0
        %v4003 = vadd.f32 %v1847, %v4002
        %v4004 = vpop.f32.mrf.mxu0
        %v4005 = vpop.f32.mrf.mxu0
        %4006 = vdwg.mxu0
        %4007 = vmatprep.subr.bf16.mxu0 %v3399
        %4008 = vmatpush1.bf16.msra.mxu0 %v3398
        %4009 = vmatprep.subr.bf16.mxu0 %v3384
        %4010 = vmatpush1.bf16.msra.mxu0 %v3383
        %4011 = vmatprep.subr.bf16.mxu0 %v3369
        %4012 = vmatpush1.bf16.msra.mxu0 %v3368
        %4013 = vmatprep.subr.bf16.mxu0 %v3354
        %4014 = vmatpush1.bf16.msra.mxu0 %v3353
        %4015 = vmatprep.subr.bf16.mxu0 %v3339
        %4016 = vmatpush1.bf16.msra.mxu0 %v3338
        %4017 = vmatprep.subr.bf16.mxu0 %v3324
        %4018 = vmatpush1.bf16.msra.mxu0 %v3323
        %4019 = vmatprep.subr.bf16.mxu0 %v3309
        %4020 = vmatpush1.bf16.msra.mxu0 %v3308
        %4021 = vmatprep.subr.bf16.mxu0 %v3294
        %4022 = vmatpush1.bf16.msra.mxu0 %v3293
        %4023 = vmatprep.subr.bf16.mxu0 0
        %4024 = vmatpush2.bf16.msra.mxu0 0
        %4025 = vmatprep.subr.bf16.mxu0 0
        %4026 = vmatpush2.bf16.msra.mxu0 0
        %4027 = vmatprep.subr.bf16.mxu0 0
        %4028 = vmatpush2.bf16.msra.mxu0 0
        %4029 = vmatprep.subr.bf16.mxu0 0
        %4030 = vmatpush2.bf16.msra.mxu0 0
        %4031 = vmatprep.subr.bf16.mxu0 0
        %4032 = vmatpush2.bf16.msra.mxu0 0
        %4033 = vmatprep.subr.bf16.mxu0 0
        %4034 = vmatpush2.bf16.msra.mxu0 0
        %4035 = vmatprep.subr.bf16.mxu0 0
        %4036 = vmatpush2.bf16.msra.mxu0 0
        %4037 = vmatprep.subr.bf16.mxu0 %v3414
        %4038 = vmatpush2.bf16.msra.mxu0 %v3413
        %4039 = vmatprep.mubr.bf16.mxu0 %v3800
        %4040 = vmatmul.mubr.bf16.gmra.mxu0 %v1418
        %v4041 = vpop.f32.mrf.mxu0
        %v4042 = vadd.f32 %v4001, %v4041
        %v4043 = vpop.f32.mrf.mxu0
        %v4044 = vadd.f32 %v4003, %v4043
        %v4045 = vpop.f32.mrf.mxu0
        %v4046 = vpop.f32.mrf.mxu0
        %4047 = vdwg.mxu0
        %4048 = vmatprep.subr.bf16.mxu0 %v3161
        %4049 = vmatpush1.bf16.msra.mxu0 %v3160
        %4050 = vmatprep.subr.bf16.mxu0 %v3146
        %4051 = vmatpush1.bf16.msra.mxu0 %v3145
        %4052 = vmatprep.subr.bf16.mxu0 %v3131
        %4053 = vmatpush1.bf16.msra.mxu0 %v3130
        %4054 = vmatprep.subr.bf16.mxu0 %v3116
        %4055 = vmatpush1.bf16.msra.mxu0 %v3115
        %4056 = vmatprep.subr.bf16.mxu0 %v3101
        %4057 = vmatpush1.bf16.msra.mxu0 %v3100
        %4058 = vmatprep.subr.bf16.mxu0 %v3086
        %4059 = vmatpush1.bf16.msra.mxu0 %v3085
        %4060 = vmatprep.subr.bf16.mxu0 %v3071
        %4061 = vmatpush1.bf16.msra.mxu0 %v3070
        %4062 = vmatprep.subr.bf16.mxu0 %v3056
        %4063 = vmatpush1.bf16.msra.mxu0 %v3055
        %4064 = vmatprep.subr.bf16.mxu0 %v3281
        %4065 = vmatpush2.bf16.msra.mxu0 %v3280
        %4066 = vmatprep.subr.bf16.mxu0 %v3266
        %4067 = vmatpush2.bf16.msra.mxu0 %v3265
        %4068 = vmatprep.subr.bf16.mxu0 %v3251
        %4069 = vmatpush2.bf16.msra.mxu0 %v3250
        %4070 = vmatprep.subr.bf16.mxu0 %v3236
        %4071 = vmatpush2.bf16.msra.mxu0 %v3235
        %4072 = vmatprep.subr.bf16.mxu0 %v3221
        %4073 = vmatpush2.bf16.msra.mxu0 %v3220
        %4074 = vmatprep.subr.bf16.mxu0 %v3206
        %4075 = vmatpush2.bf16.msra.mxu0 %v3205
        %4076 = vmatprep.subr.bf16.mxu0 %v3191
        %4077 = vmatpush2.bf16.msra.mxu0 %v3190
        %4078 = vmatprep.subr.bf16.mxu0 %v3176
        %4079 = vmatpush2.bf16.msra.mxu0 %v3175
        %4080 = vmatprep.mubr.bf16.mxu0 %v1417
        %4081 = vmatmul.mubr.bf16.gmra.mxu0 %v1416
        %v4082 = vpop.f32.mrf.mxu0
        %v4083 = vadd.f32 %v1851, %v4082
        %v4084 = vpop.f32.mrf.mxu0
        %v4085 = vadd.f32 %v1855, %v4084
        %v4086 = vpop.f32.mrf.mxu0
        %v4087 = vpop.f32.mrf.mxu0
        %4088 = vdwg.mxu0
        %4089 = vmatprep.subr.bf16.mxu0 %v3401
        %4090 = vmatpush1.bf16.msra.mxu0 %v3400
        %4091 = vmatprep.subr.bf16.mxu0 %v3386
        %4092 = vmatpush1.bf16.msra.mxu0 %v3385
        %4093 = vmatprep.subr.bf16.mxu0 %v3371
        %4094 = vmatpush1.bf16.msra.mxu0 %v3370
        %4095 = vmatprep.subr.bf16.mxu0 %v3356
        %4096 = vmatpush1.bf16.msra.mxu0 %v3355
        %4097 = vmatprep.subr.bf16.mxu0 %v3341
        %4098 = vmatpush1.bf16.msra.mxu0 %v3340
        %4099 = vmatprep.subr.bf16.mxu0 %v3326
        %4100 = vmatpush1.bf16.msra.mxu0 %v3325
        %4101 = vmatprep.subr.bf16.mxu0 %v3311
        %4102 = vmatpush1.bf16.msra.mxu0 %v3310
        %4103 = vmatprep.subr.bf16.mxu0 %v3296
        %4104 = vmatpush1.bf16.msra.mxu0 %v3295
        %4105 = vmatprep.subr.bf16.mxu0 0
        %4106 = vmatpush2.bf16.msra.mxu0 0
        %4107 = vmatprep.subr.bf16.mxu0 0
        %4108 = vmatpush2.bf16.msra.mxu0 0
        %4109 = vmatprep.subr.bf16.mxu0 0
        %4110 = vmatpush2.bf16.msra.mxu0 0
        %4111 = vmatprep.subr.bf16.mxu0 0
        %4112 = vmatpush2.bf16.msra.mxu0 0
        %4113 = vmatprep.subr.bf16.mxu0 0
        %4114 = vmatpush2.bf16.msra.mxu0 0
        %4115 = vmatprep.subr.bf16.mxu0 0
        %4116 = vmatpush2.bf16.msra.mxu0 0
        %4117 = vmatprep.subr.bf16.mxu0 0
        %4118 = vmatpush2.bf16.msra.mxu0 0
        %4119 = vmatprep.subr.bf16.mxu0 %v3416
        %4120 = vmatpush2.bf16.msra.mxu0 %v3415
        %4121 = vmatprep.mubr.bf16.mxu0 %v3800
        %4122 = vmatmul.mubr.bf16.gmra.mxu0 %v1418
        %v4123 = vpop.f32.mrf.mxu0
        %v4124 = vadd.f32 %v4083, %v4123
        %v4125 = vpop.f32.mrf.mxu0
        %v4126 = vadd.f32 %v4085, %v4125
        %v4127 = vpop.f32.mrf.mxu0
        %v4128 = vpop.f32.mrf.mxu0
        %4129 = vdwg.mxu0
        %4130 = vmatprep.subr.bf16.mxu0 %v3163
        %4131 = vmatpush1.bf16.msra.mxu0 %v3162
        %4132 = vmatprep.subr.bf16.mxu0 %v3148
        %4133 = vmatpush1.bf16.msra.mxu0 %v3147
        %4134 = vmatprep.subr.bf16.mxu0 %v3133
        %4135 = vmatpush1.bf16.msra.mxu0 %v3132
        %4136 = vmatprep.subr.bf16.mxu0 %v3118
        %4137 = vmatpush1.bf16.msra.mxu0 %v3117
        %4138 = vmatprep.subr.bf16.mxu0 %v3103
        %4139 = vmatpush1.bf16.msra.mxu0 %v3102
        %4140 = vmatprep.subr.bf16.mxu0 %v3088
        %4141 = vmatpush1.bf16.msra.mxu0 %v3087
        %4142 = vmatprep.subr.bf16.mxu0 %v3073
        %4143 = vmatpush1.bf16.msra.mxu0 %v3072
        %4144 = vmatprep.subr.bf16.mxu0 %v3058
        %4145 = vmatpush1.bf16.msra.mxu0 %v3057
        %4146 = vmatprep.subr.bf16.mxu0 %v3283
        %4147 = vmatpush2.bf16.msra.mxu0 %v3282
        %4148 = vmatprep.subr.bf16.mxu0 %v3268
        %4149 = vmatpush2.bf16.msra.mxu0 %v3267
        %4150 = vmatprep.subr.bf16.mxu0 %v3253
        %4151 = vmatpush2.bf16.msra.mxu0 %v3252
        %4152 = vmatprep.subr.bf16.mxu0 %v3238
        %4153 = vmatpush2.bf16.msra.mxu0 %v3237
        %4154 = vmatprep.subr.bf16.mxu0 %v3223
        %4155 = vmatpush2.bf16.msra.mxu0 %v3222
        %4156 = vmatprep.subr.bf16.mxu0 %v3208
        %4157 = vmatpush2.bf16.msra.mxu0 %v3207
        %4158 = vmatprep.subr.bf16.mxu0 %v3193
        %4159 = vmatpush2.bf16.msra.mxu0 %v3192
        %4160 = vmatprep.subr.bf16.mxu0 %v3178
        %4161 = vmatpush2.bf16.msra.mxu0 %v3177
        %4162 = vmatprep.mubr.bf16.mxu0 %v1417
        %4163 = vmatmul.mubr.bf16.gmra.mxu0 %v1416
        %v4164 = vpop.f32.mrf.mxu0
        %v4165 = vadd.f32 %v1859, %v4164
        %v4166 = vpop.f32.mrf.mxu0
        %v4167 = vadd.f32 %v1863, %v4166
        %v4168 = vpop.f32.mrf.mxu0
        %v4169 = vpop.f32.mrf.mxu0
        %4170 = vdwg.mxu0
        %4171 = vmatprep.subr.bf16.mxu0 %v3403
        %4172 = vmatpush1.bf16.msra.mxu0 %v3402
        %4173 = vmatprep.subr.bf16.mxu0 %v3388
        %4174 = vmatpush1.bf16.msra.mxu0 %v3387
        %4175 = vmatprep.subr.bf16.mxu0 %v3373
        %4176 = vmatpush1.bf16.msra.mxu0 %v3372
        %4177 = vmatprep.subr.bf16.mxu0 %v3358
        %4178 = vmatpush1.bf16.msra.mxu0 %v3357
        %4179 = vmatprep.subr.bf16.mxu0 %v3343
        %4180 = vmatpush1.bf16.msra.mxu0 %v3342
        %4181 = vmatprep.subr.bf16.mxu0 %v3328
        %4182 = vmatpush1.bf16.msra.mxu0 %v3327
        %4183 = vmatprep.subr.bf16.mxu0 %v3313
        %4184 = vmatpush1.bf16.msra.mxu0 %v3312
        %4185 = vmatprep.subr.bf16.mxu0 %v3298
        %4186 = vmatpush1.bf16.msra.mxu0 %v3297
        %4187 = vmatprep.subr.bf16.mxu0 0
        %4188 = vmatpush2.bf16.msra.mxu0 0
        %4189 = vmatprep.subr.bf16.mxu0 0
        %4190 = vmatpush2.bf16.msra.mxu0 0
        %4191 = vmatprep.subr.bf16.mxu0 0
        %4192 = vmatpush2.bf16.msra.mxu0 0
        %4193 = vmatprep.subr.bf16.mxu0 0
        %4194 = vmatpush2.bf16.msra.mxu0 0
        %4195 = vmatprep.subr.bf16.mxu0 0
        %4196 = vmatpush2.bf16.msra.mxu0 0
        %4197 = vmatprep.subr.bf16.mxu0 0
        %4198 = vmatpush2.bf16.msra.mxu0 0
        %4199 = vmatprep.subr.bf16.mxu0 0
        %4200 = vmatpush2.bf16.msra.mxu0 0
        %4201 = vmatprep.subr.bf16.mxu0 %v3418
        %4202 = vmatpush2.bf16.msra.mxu0 %v3417
        %4203 = vmatprep.mubr.bf16.mxu0 %v3800
        %4204 = vmatmul.mubr.bf16.gmra.mxu0 %v1418
        %v4205 = vpop.f32.mrf.mxu0
        %v4206 = vadd.f32 %v4165, %v4205
        %v4207 = vpop.f32.mrf.mxu0
        %v4208 = vadd.f32 %v4167, %v4207
        %v4209 = vpop.f32.mrf.mxu0
        %v4210 = vpop.f32.mrf.mxu0
        %4211 = vdwg.mxu0
        %4212 = vmatprep.subr.bf16.mxu0 %v3165
        %4213 = vmatpush1.bf16.msra.mxu0 %v3164
        %4214 = vmatprep.subr.bf16.mxu0 %v3150
        %4215 = vmatpush1.bf16.msra.mxu0 %v3149
        %4216 = vmatprep.subr.bf16.mxu0 %v3135
        %4217 = vmatpush1.bf16.msra.mxu0 %v3134
        %4218 = vmatprep.subr.bf16.mxu0 %v3120
        %4219 = vmatpush1.bf16.msra.mxu0 %v3119
        %4220 = vmatprep.subr.bf16.mxu0 %v3105
        %4221 = vmatpush1.bf16.msra.mxu0 %v3104
        %4222 = vmatprep.subr.bf16.mxu0 %v3090
        %4223 = vmatpush1.bf16.msra.mxu0 %v3089
        %4224 = vmatprep.subr.bf16.mxu0 %v3075
        %4225 = vmatpush1.bf16.msra.mxu0 %v3074
        %4226 = vmatprep.subr.bf16.mxu0 %v3060
        %4227 = vmatpush1.bf16.msra.mxu0 %v3059
        %4228 = vmatprep.subr.bf16.mxu0 %v3285
        %4229 = vmatpush2.bf16.msra.mxu0 %v3284
        %4230 = vmatprep.subr.bf16.mxu0 %v3270
        %4231 = vmatpush2.bf16.msra.mxu0 %v3269
        %4232 = vmatprep.subr.bf16.mxu0 %v3255
        %4233 = vmatpush2.bf16.msra.mxu0 %v3254
        %4234 = vmatprep.subr.bf16.mxu0 %v3240
        %4235 = vmatpush2.bf16.msra.mxu0 %v3239
        %4236 = vmatprep.subr.bf16.mxu0 %v3225
        %4237 = vmatpush2.bf16.msra.mxu0 %v3224
        %4238 = vmatprep.subr.bf16.mxu0 %v3210
        %4239 = vmatpush2.bf16.msra.mxu0 %v3209
        %4240 = vmatprep.subr.bf16.mxu0 %v3195
        %4241 = vmatpush2.bf16.msra.mxu0 %v3194
        %4242 = vmatprep.subr.bf16.mxu0 %v3180
        %4243 = vmatpush2.bf16.msra.mxu0 %v3179
        %4244 = vmatprep.mubr.bf16.mxu0 %v1417
        %4245 = vmatmul.mubr.bf16.gmra.mxu0 %v1416
        %v4246 = vpop.f32.mrf.mxu0
        %v4247 = vadd.f32 %v1867, %v4246
        %v4248 = vpop.f32.mrf.mxu0
        %v4249 = vadd.f32 %v1871, %v4248
        %v4250 = vpop.f32.mrf.mxu0
        %v4251 = vpop.f32.mrf.mxu0
        %4252 = vdwg.mxu0
        %4253 = vmatprep.subr.bf16.mxu0 %v3405
        %4254 = vmatpush1.bf16.msra.mxu0 %v3404
        %4255 = vmatprep.subr.bf16.mxu0 %v3390
        %4256 = vmatpush1.bf16.msra.mxu0 %v3389
        %4257 = vmatprep.subr.bf16.mxu0 %v3375
        %4258 = vmatpush1.bf16.msra.mxu0 %v3374
        %4259 = vmatprep.subr.bf16.mxu0 %v3360
        %4260 = vmatpush1.bf16.msra.mxu0 %v3359
        %4261 = vmatprep.subr.bf16.mxu0 %v3345
        %4262 = vmatpush1.bf16.msra.mxu0 %v3344
        %4263 = vmatprep.subr.bf16.mxu0 %v3330
        %4264 = vmatpush1.bf16.msra.mxu0 %v3329
        %4265 = vmatprep.subr.bf16.mxu0 %v3315
        %4266 = vmatpush1.bf16.msra.mxu0 %v3314
        %4267 = vmatprep.subr.bf16.mxu0 %v3300
        %4268 = vmatpush1.bf16.msra.mxu0 %v3299
        %4269 = vmatprep.subr.bf16.mxu0 0
        %4270 = vmatpush2.bf16.msra.mxu0 0
        %4271 = vmatprep.subr.bf16.mxu0 0
        %4272 = vmatpush2.bf16.msra.mxu0 0
        %4273 = vmatprep.subr.bf16.mxu0 0
        %4274 = vmatpush2.bf16.msra.mxu0 0
        %4275 = vmatprep.subr.bf16.mxu0 0
        %4276 = vmatpush2.bf16.msra.mxu0 0
        %4277 = vmatprep.subr.bf16.mxu0 0
        %4278 = vmatpush2.bf16.msra.mxu0 0
        %4279 = vmatprep.subr.bf16.mxu0 0
        %4280 = vmatpush2.bf16.msra.mxu0 0
        %4281 = vmatprep.subr.bf16.mxu0 0
        %4282 = vmatpush2.bf16.msra.mxu0 0
        %4283 = vmatprep.subr.bf16.mxu0 %v3420
        %4284 = vmatpush2.bf16.msra.mxu0 %v3419
        %4285 = vmatprep.mubr.bf16.mxu0 %v3800
        %4286 = vmatmul.mubr.bf16.gmra.mxu0 %v1418
        %v4287 = vpop.f32.mrf.mxu0
        %v4288 = vadd.f32 %v4247, %v4287
        %v4289 = vpop.f32.mrf.mxu0
        %v4290 = vadd.f32 %v4249, %v4289
        %v4291 = vpop.f32.mrf.mxu0
        %v4292 = vpop.f32.mrf.mxu0
        %4293 = vdwg.mxu0
        %4294 = vmatprep.subr.bf16.mxu0 %v3167
        %4295 = vmatpush1.bf16.msra.mxu0 %v3166
        %4296 = vmatprep.subr.bf16.mxu0 %v3152
        %4297 = vmatpush1.bf16.msra.mxu0 %v3151
        %4298 = vmatprep.subr.bf16.mxu0 %v3137
        %4299 = vmatpush1.bf16.msra.mxu0 %v3136
        %4300 = vmatprep.subr.bf16.mxu0 %v3122
        %4301 = vmatpush1.bf16.msra.mxu0 %v3121
        %4302 = vmatprep.subr.bf16.mxu0 %v3107
        %4303 = vmatpush1.bf16.msra.mxu0 %v3106
        %4304 = vmatprep.subr.bf16.mxu0 %v3092
        %4305 = vmatpush1.bf16.msra.mxu0 %v3091
        %4306 = vmatprep.subr.bf16.mxu0 %v3077
        %4307 = vmatpush1.bf16.msra.mxu0 %v3076
        %4308 = vmatprep.subr.bf16.mxu0 %v3062
        %4309 = vmatpush1.bf16.msra.mxu0 %v3061
        %4310 = vmatprep.subr.bf16.mxu0 %v3287
        %4311 = vmatpush2.bf16.msra.mxu0 %v3286
        %4312 = vmatprep.subr.bf16.mxu0 %v3272
        %4313 = vmatpush2.bf16.msra.mxu0 %v3271
        %4314 = vmatprep.subr.bf16.mxu0 %v3257
        %4315 = vmatpush2.bf16.msra.mxu0 %v3256
        %4316 = vmatprep.subr.bf16.mxu0 %v3242
        %4317 = vmatpush2.bf16.msra.mxu0 %v3241
        %4318 = vmatprep.subr.bf16.mxu0 %v3227
        %4319 = vmatpush2.bf16.msra.mxu0 %v3226
        %4320 = vmatprep.subr.bf16.mxu0 %v3212
        %4321 = vmatpush2.bf16.msra.mxu0 %v3211
        %4322 = vmatprep.subr.bf16.mxu0 %v3197
        %4323 = vmatpush2.bf16.msra.mxu0 %v3196
        %4324 = vmatprep.subr.bf16.mxu0 %v3182
        %4325 = vmatpush2.bf16.msra.mxu0 %v3181
        %4326 = vmatprep.mubr.bf16.mxu0 %v1417
        %4327 = vmatmul.mubr.bf16.gmra.mxu0 %v1416
        %v4328 = vpop.f32.mrf.mxu0
        %v4329 = vadd.f32 %v1875, %v4328
        %v4330 = vpop.f32.mrf.mxu0
        %v4331 = vadd.f32 %v1879, %v4330
        %v4332 = vpop.f32.mrf.mxu0
        %v4333 = vpop.f32.mrf.mxu0
        %4334 = vdwg.mxu0
        %4335 = vmatprep.subr.bf16.mxu0 %v3407
        %4336 = vmatpush1.bf16.msra.mxu0 %v3406
        %4337 = vmatprep.subr.bf16.mxu0 %v3392
        %4338 = vmatpush1.bf16.msra.mxu0 %v3391
        %4339 = vmatprep.subr.bf16.mxu0 %v3377
        %4340 = vmatpush1.bf16.msra.mxu0 %v3376
        %4341 = vmatprep.subr.bf16.mxu0 %v3362
        %4342 = vmatpush1.bf16.msra.mxu0 %v3361
        %4343 = vmatprep.subr.bf16.mxu0 %v3347
        %4344 = vmatpush1.bf16.msra.mxu0 %v3346
        %4345 = vmatprep.subr.bf16.mxu0 %v3332
        %4346 = vmatpush1.bf16.msra.mxu0 %v3331
        %4347 = vmatprep.subr.bf16.mxu0 %v3317
        %4348 = vmatpush1.bf16.msra.mxu0 %v3316
        %4349 = vmatprep.subr.bf16.mxu0 %v3302
        %4350 = vmatpush1.bf16.msra.mxu0 %v3301
        %4351 = vmatprep.subr.bf16.mxu0 0
        %4352 = vmatpush2.bf16.msra.mxu0 0
        %4353 = vmatprep.subr.bf16.mxu0 0
        %4354 = vmatpush2.bf16.msra.mxu0 0
        %4355 = vmatprep.subr.bf16.mxu0 0
        %4356 = vmatpush2.bf16.msra.mxu0 0
        %4357 = vmatprep.subr.bf16.mxu0 0
        %4358 = vmatpush2.bf16.msra.mxu0 0
        %4359 = vmatprep.subr.bf16.mxu0 0
        %4360 = vmatpush2.bf16.msra.mxu0 0
        %4361 = vmatprep.subr.bf16.mxu0 0
        %4362 = vmatpush2.bf16.msra.mxu0 0
        %4363 = vmatprep.subr.bf16.mxu0 0
        %4364 = vmatpush2.bf16.msra.mxu0 0
        %4365 = vmatprep.subr.bf16.mxu0 %v3422
        %4366 = vmatpush2.bf16.msra.mxu0 %v3421
        %4367 = vmatprep.mubr.bf16.mxu0 %v3800
        %4368 = vmatmul.mubr.bf16.gmra.mxu0 %v1418
        %v4369 = vpop.f32.mrf.mxu0
        %v4370 = vadd.f32 %v4329, %v4369
        %v4371 = vpop.f32.mrf.mxu0
        %v4372 = vadd.f32 %v4331, %v4371
        %v4373 = vpop.f32.mrf.mxu0
        %v4374 = vpop.f32.mrf.mxu0
        %4375 = vdwg.mxu0
        %4376 = vmatprep.subr.bf16.mxu0 0
        %4377 = vmatpush1.bf16.msra.mxu0 %v3168
        %4378 = vmatprep.subr.bf16.mxu0 0
        %4379 = vmatpush1.bf16.msra.mxu0 %v3153
        %4380 = vmatprep.subr.bf16.mxu0 0
        %4381 = vmatpush1.bf16.msra.mxu0 %v3138
        %4382 = vmatprep.subr.bf16.mxu0 0
        %4383 = vmatpush1.bf16.msra.mxu0 %v3123
        %4384 = vmatprep.subr.bf16.mxu0 0
        %4385 = vmatpush1.bf16.msra.mxu0 %v3108
        %4386 = vmatprep.subr.bf16.mxu0 0
        %4387 = vmatpush1.bf16.msra.mxu0 %v3093
        %4388 = vmatprep.subr.bf16.mxu0 0
        %4389 = vmatpush1.bf16.msra.mxu0 %v3078
        %4390 = vmatprep.subr.bf16.mxu0 0
        %4391 = vmatpush1.bf16.msra.mxu0 %v3063
        %4392 = vmatprep.subr.bf16.mxu0 0
        %4393 = vmatpush2.bf16.msra.mxu0 %v3288
        %4394 = vmatprep.subr.bf16.mxu0 0
        %4395 = vmatpush2.bf16.msra.mxu0 %v3273
        %4396 = vmatprep.subr.bf16.mxu0 0
        %4397 = vmatpush2.bf16.msra.mxu0 %v3258
        %4398 = vmatprep.subr.bf16.mxu0 0
        %4399 = vmatpush2.bf16.msra.mxu0 %v3243
        %4400 = vmatprep.subr.bf16.mxu0 0
        %4401 = vmatpush2.bf16.msra.mxu0 %v3228
        %4402 = vmatprep.subr.bf16.mxu0 0
        %4403 = vmatpush2.bf16.msra.mxu0 %v3213
        %4404 = vmatprep.subr.bf16.mxu0 0
        %4405 = vmatpush2.bf16.msra.mxu0 %v3198
        %4406 = vmatprep.subr.bf16.mxu0 0
        %4407 = vmatpush2.bf16.msra.mxu0 %v3183
        %4408 = vmatprep.mubr.bf16.mxu0 %v1417
        %4409 = vmatmul.mubr.bf16.gmra.mxu0 %v1416
        %v4410 = vpop.f32.mrf.mxu0
        %v4411 = vadd.f32 %v1883, %v4410
        %v4412 = vpop.f32.mrf.mxu0
        %v4413 = vpop.f32.mrf.mxu0
        %v4414 = vpop.f32.mrf.mxu0
        %4415 = vdwg.mxu0
        %4416 = vmatprep.subr.bf16.mxu0 0
        %4417 = vmatpush1.bf16.msra.mxu0 %v3408
        %4418 = vmatprep.subr.bf16.mxu0 0
        %4419 = vmatpush1.bf16.msra.mxu0 %v3393
        %4420 = vmatprep.subr.bf16.mxu0 0
        %4421 = vmatpush1.bf16.msra.mxu0 %v3378
        %4422 = vmatprep.subr.bf16.mxu0 0
        %4423 = vmatpush1.bf16.msra.mxu0 %v3363
        %4424 = vmatprep.subr.bf16.mxu0 0
        %4425 = vmatpush1.bf16.msra.mxu0 %v3348
        %4426 = vmatprep.subr.bf16.mxu0 0
        %4427 = vmatpush1.bf16.msra.mxu0 %v3333
        %4428 = vmatprep.subr.bf16.mxu0 0
        %4429 = vmatpush1.bf16.msra.mxu0 %v3318
        %4430 = vmatprep.subr.bf16.mxu0 0
        %4431 = vmatpush1.bf16.msra.mxu0 %v3303
        %4432 = vmatprep.subr.bf16.mxu0 0
        %4433 = vmatpush2.bf16.msra.mxu0 0
        %4434 = vmatprep.subr.bf16.mxu0 0
        %4435 = vmatpush2.bf16.msra.mxu0 0
        %4436 = vmatprep.subr.bf16.mxu0 0
        %4437 = vmatpush2.bf16.msra.mxu0 0
        %4438 = vmatprep.subr.bf16.mxu0 0
        %4439 = vmatpush2.bf16.msra.mxu0 0
        %4440 = vmatprep.subr.bf16.mxu0 0
        %4441 = vmatpush2.bf16.msra.mxu0 0
        %4442 = vmatprep.subr.bf16.mxu0 0
        %4443 = vmatpush2.bf16.msra.mxu0 0
        %4444 = vmatprep.subr.bf16.mxu0 0
        %4445 = vmatpush2.bf16.msra.mxu0 0
        %4446 = vmatprep.subr.bf16.mxu0 0
        %4447 = vmatpush2.bf16.msra.mxu0 %v3423
        %4448 = vmatprep.mubr.bf16.mxu0 %v3800
        %4449 = vmatmul.mubr.bf16.gmra.mxu0 %v1418
        %v4450 = vpop.f32.mrf.mxu0
        %v4451 = vadd.f32 %v4411, %v4450
        %v4452 = vpop.f32.mrf.mxu0
        %v4453 = vpop.f32.mrf.mxu0
        %v4454 = vpop.f32.mrf.mxu0
        %4455 = vdwg.mxu0
        %v4456 = vmax.f32 %v3878, 0.0
        %v4457 = vmax.f32 %v3880, 0.0
        %v4458 = vmax.f32 %v3960, 0.0
        %v4459 = vmax.f32 %v3962, 0.0
        %v4460 = vmax.f32 %v4042, 0.0
        %v4461 = vmax.f32 %v4044, 0.0
        %v4462 = vmax.f32 %v4124, 0.0
        %v4463 = vmax.f32 %v4126, 0.0
        %v4464 = vmax.f32 %v4206, 0.0
        %v4465 = vmax.f32 %v4208, 0.0
        %v4466 = vmax.f32 %v4288, 0.0
        %v4467 = vmax.f32 %v4290, 0.0
        %v4468 = vmax.f32 %v4370, 0.0
        %v4469 = vmax.f32 %v4372, 0.0
        %v4470 = vmax.f32 %v4451, 0.0
        %s4471 = sld [smem:[#allocation2]]
        %s4472 = sld [smem:[#allocation3]]
        %v4473 = vstv %s4472
        %v4474 = vmul.f32 %v4456, %v4473
        %v4475 = vmul.f32 %v4457, %v4473
        %s4476 = sld [smem:[#allocation3 + $0x1]]
        %v4477 = vstv %s4476
        %v4478 = vmul.f32 %v4457, %v4477
        %v4479 = vmul.f32 %v4458, %v4477
        %v4480 = vmul.f32 %v4459, %v4477
        %4484 = vrot.lane.b32.xlu0 %v4478, 31
        %v4485 = vpop.permute.xlu0 %4484
        %4486 = vrot.lane.b32.xlu0 %v4479, 31
        %v4487 = vpop.permute.xlu0 %4486
        %4488 = vrot.lane.b32.xlu0 %v4480, 31
        %v4489 = vpop.permute.xlu0 %4488
        %vm4490 = vcmask 252928
        %v4491 = vsel %vm4490, %v4485, %v4487
        %v4492 = vsel %vm4490, %v4487, %v4489
        %v4495 = vadd.f32 %v4474, %v4491
        %v4496 = vadd.f32 %v4475, %v4492
        %s4497 = sld [smem:[#allocation3 + $0x2]]
        %v4498 = vstv %s4497
        %v4499 = vmul.f32 %v4459, %v4498
        %v4500 = vmul.f32 %v4460, %v4498
        %v4501 = vmul.f32 %v4461, %v4498
        %4505 = vrot.lane.b32.xlu0 %v4499, 62
        %v4506 = vpop.permute.xlu0 %4505
        %4507 = vrot.lane.b32.xlu0 %v4500, 62
        %v4508 = vpop.permute.xlu0 %4507
        %4509 = vrot.lane.b32.xlu0 %v4501, 62
        %v4510 = vpop.permute.xlu0 %4509
        %vm4511 = vcmask 506880
        %v4512 = vsel %vm4511, %v4506, %v4508
        %v4513 = vsel %vm4511, %v4508, %v4510
        %v4516 = vadd.f32 %v4495, %v4512
        %v4517 = vadd.f32 %v4496, %v4513
        %s4518 = sld [smem:[#allocation3 + $0x3]]
        %v4519 = vstv %s4518
        %v4520 = vmul.f32 %v4461, %v4519
        %v4521 = vmul.f32 %v4462, %v4519
        %v4522 = vmul.f32 %v4463, %v4519
        %4526 = vrot.lane.b32.xlu0 %v4520, 93
        %v4527 = vpop.permute.xlu0 %4526
        %4528 = vrot.lane.b32.xlu0 %v4521, 93
        %v4529 = vpop.permute.xlu0 %4528
        %4530 = vrot.lane.b32.xlu0 %v4522, 93
        %v4531 = vpop.permute.xlu0 %4530
        %vm4532 = vcmask 760832
        %v4533 = vsel %vm4532, %v4527, %v4529
        %v4534 = vsel %vm4532, %v4529, %v4531
        %v4537 = vadd.f32 %v4516, %v4533
        %v4538 = vadd.f32 %v4517, %v4534
        %s4539 = sld [smem:[#allocation3 + $0x4]]
        %v4540 = vstv %s4539
        %v4541 = vmul.f32 %v4463, %v4540
        %v4542 = vmul.f32 %v4464, %v4540
        %4545 = vrot.lane.b32.xlu0 %v4541, 124
        %v4546 = vpop.permute.xlu0 %4545
        %4547 = vrot.lane.b32.xlu0 %v4542, 124
        %v4548 = vpop.permute.xlu0 %4547
        %vm4549 = vcmask 1014784
        %v4550 = vsel %vm4549, %v4546, %v4548
        %v4553 = vadd.f32 %v4537, %v4550
        %v4554 = vadd.f32 %v4538, %v4548
        %s4555 = sld [smem:[#allocation3 + $0x5]]
        %v4556 = vstv %s4555
        %v4557 = vmul.f32 %v4464, %v4556
        %v4558 = vmul.f32 %v4465, %v4556
        %v4559 = vmul.f32 %v4466, %v4556
        %4563 = vrot.lane.b32.xlu0 %v4557, 27
        %v4564 = vpop.permute.xlu0 %4563
        %4565 = vrot.lane.b32.xlu0 %v4558, 27
        %v4566 = vpop.permute.xlu0 %4565
        %4567 = vrot.lane.b32.xlu0 %v4559, 27
        %v4568 = vpop.permute.xlu0 %4567
        %vm4569 = vcmask 220160
        %v4570 = vsel %vm4569, %v4564, %v4566
        %v4571 = vsel %vm4569, %v4566, %v4568
        %v4574 = vadd.f32 %v4553, %v4570
        %v4575 = vadd.f32 %v4554, %v4571
        %s4576 = sld [smem:[#allocation3 + $0x6]]
        %v4577 = vstv %s4576
        %v4578 = vmul.f32 %v4466, %v4577
        %v4579 = vmul.f32 %v4467, %v4577
        %v4580 = vmul.f32 %v4468, %v4577
        %4584 = vrot.lane.b32.xlu0 %v4578, 58
        %v4585 = vpop.permute.xlu0 %4584
        %4586 = vrot.lane.b32.xlu0 %v4579, 58
        %v4587 = vpop.permute.xlu0 %4586
        %4588 = vrot.lane.b32.xlu0 %v4580, 58
        %v4589 = vpop.permute.xlu0 %4588
        %vm4590 = vcmask 474112
        %v4591 = vsel %vm4590, %v4585, %v4587
        %v4592 = vsel %vm4590, %v4587, %v4589
        %v4595 = vadd.f32 %v4574, %v4591
        %v4596 = vadd.f32 %v4575, %v4592
        %s4597 = sld [smem:[#allocation3 + $0x7]]
        %v4598 = vstv %s4597
        %v4599 = vmul.f32 %v4468, %v4598
        %v4600 = vmul.f32 %v4469, %v4598
        %v4601 = vmul.f32 %v4470, %v4598
        %4605 = vrot.lane.b32.xlu0 %v4599, 89
        %v4606 = vpop.permute.xlu0 %4605
        %4607 = vrot.lane.b32.xlu0 %v4600, 89
        %v4608 = vpop.permute.xlu0 %4607
        %4609 = vrot.lane.b32.xlu0 %v4601, 89
        %v4610 = vpop.permute.xlu0 %4609
        %vm4611 = vcmask 728064
        %v4612 = vsel %vm4611, %v4606, %v4608
        %v4613 = vsel %vm4611, %v4608, %v4610
        %v4616 = vadd.f32 %v4595, %v4612
        %v4617 = vadd.f32 %v4596, %v4613
        %v4618 = vstv %s4471
        %v4619 = vadd.f32 %v4616, %v4618
        %v4620 = vadd.f32 %v4617, %v4618
        %v4621 = vtanh.pop %v4619
        %v4622 = vtanh.pop %v4620
        %s4623 = sld [smem:[#allocation3 + $0x80]]
        %v4624 = vstv %s4623
        %v4625 = vmul.f32 %v4456, %v4624
        %v4626 = vmul.f32 %v4457, %v4624
        %s4627 = sld [smem:[#allocation3 + $0x81]]
        %v4628 = vstv %s4627
        %v4629 = vmul.f32 %v4457, %v4628
        %v4630 = vmul.f32 %v4458, %v4628
        %v4631 = vmul.f32 %v4459, %v4628
        %4635 = vrot.lane.b32.xlu0 %v4629, 31
        %v4636 = vpop.permute.xlu0 %4635
        %4637 = vrot.lane.b32.xlu0 %v4630, 31
        %v4638 = vpop.permute.xlu0 %4637
        %4639 = vrot.lane.b32.xlu0 %v4631, 31
        %v4640 = vpop.permute.xlu0 %4639
        %v4641 = vsel %vm4490, %v4636, %v4638
        %v4642 = vsel %vm4490, %v4638, %v4640
        %v4645 = vadd.f32 %v4625, %v4641
        %v4646 = vadd.f32 %v4626, %v4642
        %s4647 = sld [smem:[#allocation3 + $0x82]]
        %v4648 = vstv %s4647
        %v4649 = vmul.f32 %v4459, %v4648
        %v4650 = vmul.f32 %v4460, %v4648
        %v4651 = vmul.f32 %v4461, %v4648
        %4655 = vrot.lane.b32.xlu0 %v4649, 62
        %v4656 = vpop.permute.xlu0 %4655
        %4657 = vrot.lane.b32.xlu0 %v4650, 62
        %v4658 = vpop.permute.xlu0 %4657
        %4659 = vrot.lane.b32.xlu0 %v4651, 62
        %v4660 = vpop.permute.xlu0 %4659
        %v4661 = vsel %vm4511, %v4656, %v4658
        %v4662 = vsel %vm4511, %v4658, %v4660
        %v4665 = vadd.f32 %v4645, %v4661
        %v4666 = vadd.f32 %v4646, %v4662
        %s4667 = sld [smem:[#allocation3 + $0x83]]
        %v4668 = vstv %s4667
        %v4669 = vmul.f32 %v4461, %v4668
        %v4670 = vmul.f32 %v4462, %v4668
        %v4671 = vmul.f32 %v4463, %v4668
        %4675 = vrot.lane.b32.xlu0 %v4669, 93
        %v4676 = vpop.permute.xlu0 %4675
        %4677 = vrot.lane.b32.xlu0 %v4670, 93
        %v4678 = vpop.permute.xlu0 %4677
        %4679 = vrot.lane.b32.xlu0 %v4671, 93
        %v4680 = vpop.permute.xlu0 %4679
        %v4681 = vsel %vm4532, %v4676, %v4678
        %v4682 = vsel %vm4532, %v4678, %v4680
        %v4685 = vadd.f32 %v4665, %v4681
        %v4686 = vadd.f32 %v4666, %v4682
        %s4687 = sld [smem:[#allocation3 + $0x84]]
        %v4688 = vstv %s4687
        %v4689 = vmul.f32 %v4463, %v4688
        %v4690 = vmul.f32 %v4464, %v4688
        %4693 = vrot.lane.b32.xlu0 %v4689, 124
        %v4694 = vpop.permute.xlu0 %4693
        %4695 = vrot.lane.b32.xlu0 %v4690, 124
        %v4696 = vpop.permute.xlu0 %4695
        %v4697 = vsel %vm4549, %v4694, %v4696
        %v4700 = vadd.f32 %v4685, %v4697
        %v4701 = vadd.f32 %v4686, %v4696
        %s4702 = sld [smem:[#allocation3 + $0x85]]
        %v4703 = vstv %s4702
        %v4704 = vmul.f32 %v4464, %v4703
        %v4705 = vmul.f32 %v4465, %v4703
        %v4706 = vmul.f32 %v4466, %v4703
        %4710 = vrot.lane.b32.xlu0 %v4704, 27
        %v4711 = vpop.permute.xlu0 %4710
        %4712 = vrot.lane.b32.xlu0 %v4705, 27
        %v4713 = vpop.permute.xlu0 %4712
        %4714 = vrot.lane.b32.xlu0 %v4706, 27
        %v4715 = vpop.permute.xlu0 %4714
        %v4716 = vsel %vm4569, %v4711, %v4713
        %v4717 = vsel %vm4569, %v4713, %v4715
        %v4720 = vadd.f32 %v4700, %v4716
        %v4721 = vadd.f32 %v4701, %v4717
        %s4722 = sld [smem:[#allocation3 + $0x86]]
        %v4723 = vstv %s4722
        %v4724 = vmul.f32 %v4466, %v4723
        %v4725 = vmul.f32 %v4467, %v4723
        %v4726 = vmul.f32 %v4468, %v4723
        %4730 = vrot.lane.b32.xlu0 %v4724, 58
        %v4731 = vpop.permute.xlu0 %4730
        %4732 = vrot.lane.b32.xlu0 %v4725, 58
        %v4733 = vpop.permute.xlu0 %4732
        %4734 = vrot.lane.b32.xlu0 %v4726, 58
        %v4735 = vpop.permute.xlu0 %4734
        %v4736 = vsel %vm4590, %v4731, %v4733
        %v4737 = vsel %vm4590, %v4733, %v4735
        %v4740 = vadd.f32 %v4720, %v4736
        %v4741 = vadd.f32 %v4721, %v4737
        %s4742 = sld [smem:[#allocation3 + $0x87]]
        %v4743 = vstv %s4742
        %v4744 = vmul.f32 %v4468, %v4743
        %v4745 = vmul.f32 %v4469, %v4743
        %v4746 = vmul.f32 %v4470, %v4743
        %4750 = vrot.lane.b32.xlu0 %v4744, 89
        %v4751 = vpop.permute.xlu0 %4750
        %4752 = vrot.lane.b32.xlu0 %v4745, 89
        %v4753 = vpop.permute.xlu0 %4752
        %4754 = vrot.lane.b32.xlu0 %v4746, 89
        %v4755 = vpop.permute.xlu0 %4754
        %v4756 = vsel %vm4611, %v4751, %v4753
        %v4757 = vsel %vm4611, %v4753, %v4755
        %v4760 = vadd.f32 %v4740, %v4756
        %v4761 = vadd.f32 %v4741, %v4757
        %v4762 = vadd.f32 %v4760, %v4618
        %v4763 = vadd.f32 %v4761, %v4618
        %v4764 = vtanh.pop %v4762
        %v4765 = vtanh.pop %v4763
        %s4766 = sld [smem:[#allocation3 + $0x100]]
        %v4767 = vstv %s4766
        %v4768 = vmul.f32 %v4456, %v4767
        %v4769 = vmul.f32 %v4457, %v4767
        %s4770 = sld [smem:[#allocation3 + $0x101]]
        %v4771 = vstv %s4770
        %v4772 = vmul.f32 %v4457, %v4771
        %v4773 = vmul.f32 %v4458, %v4771
        %v4774 = vmul.f32 %v4459, %v4771
        %4778 = vrot.lane.b32.xlu0 %v4772, 31
        %v4779 = vpop.permute.xlu0 %4778
        %4780 = vrot.lane.b32.xlu0 %v4773, 31
        %v4781 = vpop.permute.xlu0 %4780
        %4782 = vrot.lane.b32.xlu0 %v4774, 31
        %v4783 = vpop.permute.xlu0 %4782
        %v4784 = vsel %vm4490, %v4779, %v4781
        %v4785 = vsel %vm4490, %v4781, %v4783
        %v4788 = vadd.f32 %v4768, %v4784
        %v4789 = vadd.f32 %v4769, %v4785
        %s4790 = sld [smem:[#allocation3 + $0x102]]
        %v4791 = vstv %s4790
        %v4792 = vmul.f32 %v4459, %v4791
        %v4793 = vmul.f32 %v4460, %v4791
        %v4794 = vmul.f32 %v4461, %v4791
        %4798 = vrot.lane.b32.xlu0 %v4792, 62
        %v4799 = vpop.permute.xlu0 %4798
        %4800 = vrot.lane.b32.xlu0 %v4793, 62
        %v4801 = vpop.permute.xlu0 %4800
        %4802 = vrot.lane.b32.xlu0 %v4794, 62
        %v4803 = vpop.permute.xlu0 %4802
        %v4804 = vsel %vm4511, %v4799, %v4801
        %v4805 = vsel %vm4511, %v4801, %v4803
        %v4808 = vadd.f32 %v4788, %v4804
        %v4809 = vadd.f32 %v4789, %v4805
        %s4810 = sld [smem:[#allocation3 + $0x103]]
        %v4811 = vstv %s4810
        %v4812 = vmul.f32 %v4461, %v4811
        %v4813 = vmul.f32 %v4462, %v4811
        %v4814 = vmul.f32 %v4463, %v4811
        %4818 = vrot.lane.b32.xlu0 %v4812, 93
        %v4819 = vpop.permute.xlu0 %4818
        %4820 = vrot.lane.b32.xlu0 %v4813, 93
        %v4821 = vpop.permute.xlu0 %4820
        %4822 = vrot.lane.b32.xlu0 %v4814, 93
        %v4823 = vpop.permute.xlu0 %4822
        %v4824 = vsel %vm4532, %v4819, %v4821
        %v4825 = vsel %vm4532, %v4821, %v4823
        %v4828 = vadd.f32 %v4808, %v4824
        %v4829 = vadd.f32 %v4809, %v4825
        %s4830 = sld [smem:[#allocation3 + $0x104]]
        %v4831 = vstv %s4830
        %v4832 = vmul.f32 %v4463, %v4831
        %v4833 = vmul.f32 %v4464, %v4831
        %4836 = vrot.lane.b32.xlu0 %v4832, 124
        %v4837 = vpop.permute.xlu0 %4836
        %4838 = vrot.lane.b32.xlu0 %v4833, 124
        %v4839 = vpop.permute.xlu0 %4838
        %v4840 = vsel %vm4549, %v4837, %v4839
        %v4843 = vadd.f32 %v4828, %v4840
        %v4844 = vadd.f32 %v4829, %v4839
        %s4845 = sld [smem:[#allocation3 + $0x105]]
        %v4846 = vstv %s4845
        %v4847 = vmul.f32 %v4464, %v4846
        %v4848 = vmul.f32 %v4465, %v4846
        %v4849 = vmul.f32 %v4466, %v4846
        %4853 = vrot.lane.b32.xlu0 %v4847, 27
        %v4854 = vpop.permute.xlu0 %4853
        %4855 = vrot.lane.b32.xlu0 %v4848, 27
        %v4856 = vpop.permute.xlu0 %4855
        %4857 = vrot.lane.b32.xlu0 %v4849, 27
        %v4858 = vpop.permute.xlu0 %4857
        %v4859 = vsel %vm4569, %v4854, %v4856
        %v4860 = vsel %vm4569, %v4856, %v4858
        %v4863 = vadd.f32 %v4843, %v4859
        %v4864 = vadd.f32 %v4844, %v4860
        %s4865 = sld [smem:[#allocation3 + $0x106]]
        %v4866 = vstv %s4865
        %v4867 = vmul.f32 %v4466, %v4866
        %v4868 = vmul.f32 %v4467, %v4866
        %v4869 = vmul.f32 %v4468, %v4866
        %4873 = vrot.lane.b32.xlu0 %v4867, 58
        %v4874 = vpop.permute.xlu0 %4873
        %4875 = vrot.lane.b32.xlu0 %v4868, 58
        %v4876 = vpop.permute.xlu0 %4875
        %4877 = vrot.lane.b32.xlu0 %v4869, 58
        %v4878 = vpop.permute.xlu0 %4877
        %v4879 = vsel %vm4590, %v4874, %v4876
        %v4880 = vsel %vm4590, %v4876, %v4878
        %v4883 = vadd.f32 %v4863, %v4879
        %v4884 = vadd.f32 %v4864, %v4880
        %s4885 = sld [smem:[#allocation3 + $0x107]]
        %v4886 = vstv %s4885
        %v4887 = vmul.f32 %v4468, %v4886
        %v4888 = vmul.f32 %v4469, %v4886
        %v4889 = vmul.f32 %v4470, %v4886
        %4893 = vrot.lane.b32.xlu0 %v4887, 89
        %v4894 = vpop.permute.xlu0 %4893
        %4895 = vrot.lane.b32.xlu0 %v4888, 89
        %v4896 = vpop.permute.xlu0 %4895
        %4897 = vrot.lane.b32.xlu0 %v4889, 89
        %v4898 = vpop.permute.xlu0 %4897
        %v4899 = vsel %vm4611, %v4894, %v4896
        %v4900 = vsel %vm4611, %v4896, %v4898
        %v4903 = vadd.f32 %v4883, %v4899
        %v4904 = vadd.f32 %v4884, %v4900
        %v4905 = vadd.f32 %v4903, %v4618
        %v4906 = vadd.f32 %v4904, %v4618
        %v4907 = vtanh.pop %v4905
        %v4908 = vtanh.pop %v4906
        %s4909 = sld [smem:[#allocation3 + $0x180]]
        %v4910 = vstv %s4909
        %v4911 = vmul.f32 %v4456, %v4910
        %v4912 = vmul.f32 %v4457, %v4910
        %s4913 = sld [smem:[#allocation3 + $0x181]]
        %v4914 = vstv %s4913
        %v4915 = vmul.f32 %v4457, %v4914
        %v4916 = vmul.f32 %v4458, %v4914
        %v4917 = vmul.f32 %v4459, %v4914
        %4921 = vrot.lane.b32.xlu0 %v4915, 31
        %v4922 = vpop.permute.xlu0 %4921
        %4923 = vrot.lane.b32.xlu0 %v4916, 31
        %v4924 = vpop.permute.xlu0 %4923
        %4925 = vrot.lane.b32.xlu0 %v4917, 31
        %v4926 = vpop.permute.xlu0 %4925
        %v4927 = vsel %vm4490, %v4922, %v4924
        %v4928 = vsel %vm4490, %v4924, %v4926
        %v4931 = vadd.f32 %v4911, %v4927
        %v4932 = vadd.f32 %v4912, %v4928
        %s4933 = sld [smem:[#allocation3 + $0x182]]
        %v4934 = vstv %s4933
        %v4935 = vmul.f32 %v4459, %v4934
        %v4936 = vmul.f32 %v4460, %v4934
        %v4937 = vmul.f32 %v4461, %v4934
        %4941 = vrot.lane.b32.xlu0 %v4935, 62
        %v4942 = vpop.permute.xlu0 %4941
        %4943 = vrot.lane.b32.xlu0 %v4936, 62
        %v4944 = vpop.permute.xlu0 %4943
        %4945 = vrot.lane.b32.xlu0 %v4937, 62
        %v4946 = vpop.permute.xlu0 %4945
        %v4947 = vsel %vm4511, %v4942, %v4944
        %v4948 = vsel %vm4511, %v4944, %v4946
        %v4951 = vadd.f32 %v4931, %v4947
        %v4952 = vadd.f32 %v4932, %v4948
        %s4953 = sld [smem:[#allocation3 + $0x183]]
        %v4954 = vstv %s4953
        %v4955 = vmul.f32 %v4461, %v4954
        %v4956 = vmul.f32 %v4462, %v4954
        %v4957 = vmul.f32 %v4463, %v4954
        %4961 = vrot.lane.b32.xlu0 %v4955, 93
        %v4962 = vpop.permute.xlu0 %4961
        %4963 = vrot.lane.b32.xlu0 %v4956, 93
        %v4964 = vpop.permute.xlu0 %4963
        %4965 = vrot.lane.b32.xlu0 %v4957, 93
        %v4966 = vpop.permute.xlu0 %4965
        %v4967 = vsel %vm4532, %v4962, %v4964
        %v4968 = vsel %vm4532, %v4964, %v4966
        %v4971 = vadd.f32 %v4951, %v4967
        %v4972 = vadd.f32 %v4952, %v4968
        %s4973 = sld [smem:[#allocation3 + $0x184]]
        %v4974 = vstv %s4973
        %v4975 = vmul.f32 %v4463, %v4974
        %v4976 = vmul.f32 %v4464, %v4974
        %4979 = vrot.lane.b32.xlu0 %v4975, 124
        %v4980 = vpop.permute.xlu0 %4979
        %4981 = vrot.lane.b32.xlu0 %v4976, 124
        %v4982 = vpop.permute.xlu0 %4981
        %v4983 = vsel %vm4549, %v4980, %v4982
        %v4986 = vadd.f32 %v4971, %v4983
        %v4987 = vadd.f32 %v4972, %v4982
        %s4988 = sld [smem:[#allocation3 + $0x185]]
        %v4989 = vstv %s4988
        %v4990 = vmul.f32 %v4464, %v4989
        %v4991 = vmul.f32 %v4465, %v4989
        %v4992 = vmul.f32 %v4466, %v4989
        %4996 = vrot.lane.b32.xlu0 %v4990, 27
        %v4997 = vpop.permute.xlu0 %4996
        %4998 = vrot.lane.b32.xlu0 %v4991, 27
        %v4999 = vpop.permute.xlu0 %4998
        %5000 = vrot.lane.b32.xlu0 %v4992, 27
        %v5001 = vpop.permute.xlu0 %5000
        %v5002 = vsel %vm4569, %v4997, %v4999
        %v5003 = vsel %vm4569, %v4999, %v5001
        %v5006 = vadd.f32 %v4986, %v5002
        %v5007 = vadd.f32 %v4987, %v5003
        %s5008 = sld [smem:[#allocation3 + $0x186]]
        %v5009 = vstv %s5008
        %v5010 = vmul.f32 %v4466, %v5009
        %v5011 = vmul.f32 %v4467, %v5009
        %v5012 = vmul.f32 %v4468, %v5009
        %5016 = vrot.lane.b32.xlu0 %v5010, 58
        %v5017 = vpop.permute.xlu0 %5016
        %5018 = vrot.lane.b32.xlu0 %v5011, 58
        %v5019 = vpop.permute.xlu0 %5018
        %5020 = vrot.lane.b32.xlu0 %v5012, 58
        %v5021 = vpop.permute.xlu0 %5020
        %v5022 = vsel %vm4590, %v5017, %v5019
        %v5023 = vsel %vm4590, %v5019, %v5021
        %v5026 = vadd.f32 %v5006, %v5022
        %v5027 = vadd.f32 %v5007, %v5023
        %s5028 = sld [smem:[#allocation3 + $0x187]]
        %v5029 = vstv %s5028
        %v5030 = vmul.f32 %v4468, %v5029
        %v5031 = vmul.f32 %v4469, %v5029
        %v5032 = vmul.f32 %v4470, %v5029
        %5036 = vrot.lane.b32.xlu0 %v5030, 89
        %v5037 = vpop.permute.xlu0 %5036
        %5038 = vrot.lane.b32.xlu0 %v5031, 89
        %v5039 = vpop.permute.xlu0 %5038
        %5040 = vrot.lane.b32.xlu0 %v5032, 89
        %v5041 = vpop.permute.xlu0 %5040
        %v5042 = vsel %vm4611, %v5037, %v5039
        %v5043 = vsel %vm4611, %v5039, %v5041
        %v5046 = vadd.f32 %v5026, %v5042
        %v5047 = vadd.f32 %v5027, %v5043
        %v5048 = vadd.f32 %v5046, %v4618
        %v5049 = vadd.f32 %v5047, %v4618
        %v5050 = vtanh.pop %v5048
        %v5051 = vtanh.pop %v5049
        %5054 = vrot.lane.b32.xlu0 %v4764, 97
        %v5055 = vpop.permute.xlu0 %5054
        %5056 = vrot.lane.b32.xlu0 %v4765, 97
        %v5057 = vpop.permute.xlu0 %5056
        %v5058 = vsel %vm773, %v5055, %v5057
        %5064 = vrot.lane.b32.xlu0 %v4907, 66
        %v5065 = vpop.permute.xlu0 %5064
        %5066 = vrot.lane.b32.xlu0 %v4908, 66
        %v5067 = vpop.permute.xlu0 %5066
        %vm5068 = vcmask 539648
        %v5069 = vsel %vm5068, %v5065, %v5067
        %5075 = vrot.lane.b32.xlu0 %v5050, 35
        %v5076 = vpop.permute.xlu0 %5075
        %5077 = vrot.lane.b32.xlu0 %v5051, 35
        %v5078 = vpop.permute.xlu0 %5077
        %vm5079 = vcmask 285696
        %v5080 = vsel %vm5079, %v5076, %v5078
        %v5084 = vsel %vm773, %v4622, %v5055
        %v5085 = vsel %vm5068, %v5057, %v5065
        %v5086 = vsel %vm5079, %v5067, %v5076
        %5087 = vst [vmem:[%s401] sm:$0xff] %v4621
        %5088 = vst [vmem:[%s401 + $0x8] sm:$0xff] %v5084
        %5089 = vst [vmem:[%s401 + $0x10] sm:$0xff] %v5058
        %5090 = vst [vmem:[%s401 + $0x18] sm:$0xff] %v5085
        %5091 = vst [vmem:[%s401 + $0x20] sm:$0xff] %v5069
        %5092 = vst [vmem:[%s401 + $0x28] sm:$0xff] %v5086
        %5093 = vst [vmem:[%s401 + $0x30] sm:$0xff] %v5080
        %vm5094 = vcmask 31744
        %5095 = vst.msk [vmem:[%s401 + $0x38] sm:$0xff] %vm5094, %v5078
        %p5096 = scmp.lt.s32.totalorder %s24, 1
        %s5097 = scalar_select %p5096, %s24, 1
        %s5098 = smul.addr %s5097, 8
        %s5099 = smul.addr %s5098, 8
        %s5100 = scalar_lea.vmem %s11, %s5099
        // Predicated region
        $region69: #{dc_autoencoder_forward.1} parent=63 // pred_check
          %p5101 = pneg %p278
        $region70: #{dc_autoencoder_forward.1} parent=63 // pred_check_branch
          %5103 = sbr.rel (%p5101) target = $region72
        $region71: #{dc_autoencoder_forward.1} parent=63 // pred_region
          _
        $region72: #{dc_autoencoder_forward.1} parent=63 // pred_fallthru
          _
      $region64: #{dc_autoencoder_forward.1} parent=5 // pred_fallthru
        _
      %p5104 = scmp.le.s32.totalorder 2, %s19
      // Predicated region
      $region73: #{dc_autoencoder_forward.1} parent=5 // pred_check
        %p5105 = pneg %p5104
      $region74: #{dc_autoencoder_forward.1} parent=5 // pred_check_branch
        %5107 = sbr.rel (%p5105) target = $region76
      $region75: #{dc_autoencoder_forward.1} parent=5 // pred_region
        %s5108 = ssub.s32 %s19, 2
        // Predicated region
        $region77: #{dc_autoencoder_forward.1} parent=75 // pred_check
          %p5109 = pneg %p284
        $region78: #{dc_autoencoder_forward.1} parent=75 // pred_check_branch
          %5111 = sbr.rel (%p5109) target = $region80
        $region79: #{dc_autoencoder_forward.1} parent=75 // pred_region
          %p5112 = scmp.lt.s32.totalorder %s25, 1
          %s5113 = scalar_select %p5112, %s25, 1
          %s5114 = smul.addr %s5113, 8
          %s5115 = smul.addr %s5114, 8
          %s5116 = scalar_lea.vmem %s11, %s5115
        $region80: #{dc_autoencoder_forward.1} parent=75 // pred_fallthru
          _
      $region76: #{dc_autoencoder_forward.1} parent=5 // pred_fallthru
        _
    $region6: #{dc_autoencoder_forward.1} parent=1 // loop_footer
      %s23 = sadd.s32 1, %s19
    $region7: #{dc_autoencoder_forward.1} parent=1 // loop_footer_branch
      %18 = sbr.rel target = $region3
    $region8: #{dc_autoencoder_forward.1} parent=1 // loop_exit
      _
    %5117 = vsyncpa [#allocation4], 1
    %s5118 = scalar_lea.sflag [#allocation4], 1
    %5119 = vsyncpa %s5118, 1

</llo_original>
